<compile_context>
chip_gen: v7x
topology: tpu7x:2x2x1
jax: 0.10.0
libtpu: 0.0.40
codegen_flags: <defaults>
</compile_context>

<pallas_src>
import functools

import numpy as np
import jax
import jax.numpy as jnp
from jax.experimental import pallas as pl
from jax.experimental.pallas import tpu as pltpu


# ------------------------------ Pallas kernel -------------------------------

def _sound_decoder_kernel(z_ref, wbig_ref, w0_ref, s2_ref, t2_ref,
                          w1_ref, s3_ref, t3_ref, w2_ref, o_ref):
    f32 = jnp.float32
    rows = z_ref.shape[0]                       # BT * 8 activation rows (row = b*8 + h)

    def dot(a, b):
        return jnp.dot(a, b, preferred_element_type=f32)

    # Per-sample (8-row group) shift operators as 0/1 matrices, applied on the MXU.
    #   (sprev @ Y)[r] = Y[r-1] if r % 8 != 0 else 0
    #   (snext @ Y)[r] = Y[r+1] if r % 8 != 7 else 0
    r_i = jax.lax.broadcasted_iota(jnp.int32, (rows, rows), 0)
    c_i = jax.lax.broadcasted_iota(jnp.int32, (rows, rows), 1)
    sprev = ((c_i + 1 == r_i) & (r_i % 8 != 0)).astype(f32)
    snext = ((c_i == r_i + 1) & (r_i % 8 != 7)).astype(f32)

    # ---- upsampler: Linear(input_dim, 2048) + BN1d + ReLU --------------------
    # z_ref rows hold the block-diagonal [z, 1] operand; the BN1 scale/shift and
    # the Linear bias are folded into wbig, and the output comes out directly in
    # channels-last (row = b*8 + h, lane = channel) layout.
    x1 = jnp.maximum(dot(z_ref[...], wbig_ref[...]), 0.0)          # (rows, 256)

    # ---- hallucinate_0: ConvT(256->128, k=(4,1), s=(2,1), p=(1,0)) + BN + ReLU
    #   even rows  E[h] = x[h] @ W[1] + x[h-1] @ W[3]
    #   odd  rows  O[h] = x[h] @ W[2] + x[h+1] @ W[0]
    e1 = dot(x1, w0_ref[1]) + dot(sprev, dot(x1, w0_ref[3]))
    o1 = dot(x1, w0_ref[2]) + dot(snext, dot(x1, w0_ref[0]))
    e1 = jnp.maximum(e1 * s2_ref[...] + t2_ref[...], 0.0)
    o1 = jnp.maximum(o1 * s2_ref[...] + t2_ref[...], 0.0)

    # ---- hallucinate_1 on the virtually interleaved rows [E0,O0,E1,O1,...] ---
    # Output row 4h+r of the second deconv, expressed directly in E/O planes:
    #   G0[h] = E[h]@V1 + O[h-1]@V3     G1[h] = E[h]@V2 + O[h]@V0
    #   G2[h] = O[h]@V1 + E[h]@V3       G3[h] = O[h]@V2 + E[h+1]@V0
    g0 = dot(e1, w1_ref[1]) + dot(sprev, dot(o1, w1_ref[3]))
    g1 = dot(e1, w1_ref[2]) + dot(o1, w1_ref[0])
    g2 = dot(o1, w1_ref[1]) + dot(e1, w1_ref[3])
    g3 = dot(o1, w1_ref[2]) + dot(snext, dot(e1, w1_ref[0]))

    # ---- BN + ReLU, then hallucinate_2 (ConvT 128->1, k=(1,128)) == matmul over
    # channels, + sigmoid.  Plane r holds output rows 4h + r.
    for r, g in enumerate((g0, g1, g2, g3)):
        g = jnp.maximum(g * s3_ref[...] + t3_ref[...], 0.0)
        o_ref[r, :, :] = jax.nn.sigmoid(dot(g, w2_ref[...]))


# --------------------------- weight / input repacking ------------------------

def _bn_fold(gamma, beta, mean, var, eps=1e-5):
    s = gamma / jnp.sqrt(var + eps)
    return s, beta - mean * s


def _pack_params(p):
    """Fold BN + Linear bias, and repack the Linear weight so that a block-diagonal
    [z, 1] operand produces the activation directly in channels-last (h, c) layout."""
    f32 = jnp.float32
    din = p["Wl"].shape[0]
    s1, t1 = _bn_fold(p["bn1_g"], p["bn1_b"], p["bn1_m"], p["bn1_v"])
    t1 = p["bl"] * s1 + t1                                   # fold Linear bias
    wl_s = p["Wl"].astype(f32) * s1[None, :]                 # fold BN1 scale
    # per-h weight block: Wh[d, c] = Wl_s[d, c*8 + h];   bias row: t1h[c] = t1[c*8 + h]
    wl_r = jnp.transpose(wl_s.reshape(din, 256, 8), (2, 0, 1))        # (8, din, 256)
    t1_r = jnp.transpose(t1.reshape(256, 8), (1, 0))[:, None, :]      # (8, 1,   256)
    wbig = jnp.concatenate([wl_r, t1_r], axis=1).reshape(8 * (din + 1), 256)

    s2, t2 = _bn_fold(p["bn2_g"], p["bn2_b"], p["bn2_m"], p["bn2_v"])
    s3, t3 = _bn_fold(p["bn3_g"], p["bn3_b"], p["bn3_m"], p["bn3_v"])
    return (wbig,
            p["W0"].astype(f32),
            s2.reshape(1, 128), t2.reshape(1, 128),
            p["W1"].astype(f32),
            s3.reshape(1, 128), t3.reshape(1, 128),
            p["W2"].astype(f32))


def _prep_z(z, b_pad):
    """Build the block-diagonal [z, 1] operand: row b*8+h carries [z_b, 1] in lane
    group h and zeros elsewhere (pure layout plumbing, done once in the wrapper)."""
    B, din = z.shape
    z1 = jnp.concatenate([z, jnp.ones((B, 1), z.dtype)], axis=1)      # (B, din+1)
    eye = jnp.eye(8, dtype=z.dtype)
    zin = jnp.einsum("hg,bd->bhgd", eye, z1).reshape(B * 8, 8 * (din + 1))
    if b_pad > B:
        zin = jnp.pad(zin, ((0, (b_pad - B) * 8), (0, 0)))
    return zin


def _zero_map(nd, i):
    return (0,) * nd


# ------------------------------ model wrapper --------------------------------

def sound_decoder_forward(z, params):
    B, din = z.shape
    packed = _pack_params(params)

    bt = min(16, 8 * pl.cdiv(B, 8))           # samples per grid step (<= 128 rows)
    n_steps = pl.cdiv(B, bt)
    b_pad = n_steps * bt
    lanes_in = 8 * (din + 1)
    zin = _prep_z(z, b_pad)                    # (b_pad*8, 8*(din+1))

    weight_specs = [pl.BlockSpec(w.shape, functools.partial(_zero_map, w.ndim))
                    for w in packed]
    out = pl.pallas_call(
        _sound_decoder_kernel,
        grid=(n_steps,),
        in_specs=[pl.BlockSpec((bt * 8, lanes_in), lambda i: (i, 0))] + weight_specs,
        out_specs=pl.BlockSpec((4, bt * 8, 128), lambda i: (0, i, 0)),
        out_shape=jax.ShapeDtypeStruct((4, b_pad * 8, 128), jnp.float32),
        compiler_params=pltpu.CompilerParams(
            dimension_semantics=("parallel",)),
    )(zin, *packed)

    # (4, b_pad*8, 128) -> (B, 1, 32, 128): out[b, 0, 4h+r, :] = plane_r[b*8+h, :].
    out = out.reshape(4, b_pad, 8, 128)[:, :B]
    out = jnp.transpose(out, (1, 2, 0, 3)).reshape(B, 1, 32, 128)
    return out


# --------------------------- deterministic params ----------------------------

def init_params(key, input_dim):
    ks = jax.random.split(key, 20)
    n = iter(range(20))
    p = {}
    p["Wl"] = 0.05 * jax.random.normal(ks[next(n)], (input_dim, 2048), jnp.float32)
    p["bl"] = 0.05 * jax.random.normal(ks[next(n)], (2048,), jnp.float32)
    p["bn1_g"] = 1.0 + 0.1 * jax.random.normal(ks[next(n)], (2048,), jnp.float32)
    p["bn1_b"] = 0.1 * jax.random.normal(ks[next(n)], (2048,), jnp.float32)
    p["bn1_m"] = 0.1 * jax.random.normal(ks[next(n)], (2048,), jnp.float32)
    p["bn1_v"] = jax.random.uniform(ks[next(n)], (2048,), jnp.float32, 0.5, 1.5)
    # ConvTranspose2d(256, 128, (4,1)) weights stored as taps (K=4, Cin, Cout)
    p["W0"] = 0.05 * jax.random.normal(ks[next(n)], (4, 256, 128), jnp.float32)
    p["bn2_g"] = 1.0 + 0.1 * jax.random.normal(ks[next(n)], (128,), jnp.float32)
    p["bn2_b"] = 0.1 * jax.random.normal(ks[next(n)], (128,), jnp.float32)
    p["bn2_m"] = 0.1 * jax.random.normal(ks[next(n)], (128,), jnp.float32)
    p["bn2_v"] = jax.random.uniform(ks[next(n)], (128,), jnp.float32, 0.5, 1.5)
    # ConvTranspose2d(128, 128, (4,1))
    p["W1"] = 0.05 * jax.random.normal(ks[next(n)], (4, 128, 128), jnp.float32)
    p["bn3_g"] = 1.0 + 0.1 * jax.random.normal(ks[next(n)], (128,), jnp.float32)
    p["bn3_b"] = 0.1 * jax.random.normal(ks[next(n)], (128,), jnp.float32)
    p["bn3_m"] = 0.1 * jax.random.normal(ks[next(n)], (128,), jnp.float32)
    p["bn3_v"] = jax.random.uniform(ks[next(n)], (128,), jnp.float32, 0.5, 1.5)
    # ConvTranspose2d(128, 1, (1,128)) -> matrix (Cin=128, kW=128)
    p["W2"] = 0.05 * jax.random.normal(ks[next(n)], (128, 128), jnp.float32)
    return p


# ----------------------------- numpy reference -------------------------------

def reference_forward(z, p):
    z = np.asarray(z, np.float64)
    eps = 1e-5

    def bn(x, g, b, m, v, axis):
        g, b, m, v = (np.asarray(a, np.float64) for a in (g, b, m, v))
        shp = [1] * x.ndim
        shp[axis] = -1
        return (x - m.reshape(shp)) / np.sqrt(v.reshape(shp) + eps) * g.reshape(shp) + b.reshape(shp)

    y = z @ np.asarray(p["Wl"], np.float64) + np.asarray(p["bl"], np.float64)
    y = np.maximum(bn(y, p["bn1_g"], p["bn1_b"], p["bn1_m"], p["bn1_v"], 1), 0.0)
    x = y.reshape(-1, 256, 8)                                    # (B, C, H), W==1

    def convT(x, w_taps, stride=2, pad=1):
        Bn, Cin, H = x.shape
        K, _, Cout = w_taps.shape
        Hout = (H - 1) * stride - 2 * pad + K
        out = np.zeros((Bn, Cout, Hout))
        w = np.asarray(w_taps, np.float64)
        for hi in range(H):
            for kh in range(K):
                ho = hi * stride - pad + kh
                if 0 <= ho < Hout:
                    out[:, :, ho] += x[:, :, hi] @ w[kh]
        return out

    x = np.maximum(bn(convT(x, p["W0"]), p["bn2_g"], p["bn2_b"], p["bn2_m"], p["bn2_v"], 1), 0.0)
    x = np.maximum(bn(convT(x, p["W1"]), p["bn3_g"], p["bn3_b"], p["bn3_m"], p["bn3_v"], 1), 0.0)
    out = np.einsum("bch,cw->bhw", x, np.asarray(p["W2"], np.float64))
    out = 1.0 / (1.0 + np.exp(-out))
    return out.reshape(-1, 1, 32, 128)


# ----------------------------------- main -------------------------------------

if __name__ == "__main__":
    key = jax.random.PRNGKey(0)
    kp, kz = jax.random.split(key)
    input_dim = 32
    batch = 2

    params = init_params(kp, input_dim)
    z = jax.random.normal(kz, (batch, input_dim), jnp.float32)

    fwd = jax.jit(sound_decoder_forward)
    out = jax.block_until_ready(fwd(z, params))
    assert out.shape == (batch, 1, 32, 128), out.shape

    ref = reference_forward(np.asarray(z), {k: np.asarray(v) for k, v in params.items()})
    max_err = float(np.max(np.abs(np.asarray(out, np.float64) - ref)))
    if max_err > 3e-2:
        raise AssertionError(f"kernel/reference mismatch: max abs err = {max_err}")

    print("KERNEL_OK")
</pallas_src>

<mosaic_0001>
module attributes {stable_mosaic.version = 11 : i64} {
  func.func @_sound_decoder_kernel(%arg0: i32, %arg1: memref<64x264xf32, #tpu.memory_space<vmem>>, %arg2: memref<264x256xf32, #tpu.memory_space<vmem>>, %arg3: memref<4x256x128xf32, #tpu.memory_space<vmem>>, %arg4: memref<1x128xf32, #tpu.memory_space<vmem>>, %arg5: memref<1x128xf32, #tpu.memory_space<vmem>>, %arg6: memref<4x128x128xf32, #tpu.memory_space<vmem>>, %arg7: memref<1x128xf32, #tpu.memory_space<vmem>>, %arg8: memref<1x128xf32, #tpu.memory_space<vmem>>, %arg9: memref<128x128xf32, #tpu.memory_space<vmem>>, %arg10: memref<4x64x128xf32, #tpu.memory_space<vmem>>) attributes {dimension_semantics = [#tpu.dimension_semantics<parallel>], iteration_bounds = array<i64: 1>, scalar_prefetch = 0 : i64, scratch_operands = 0 : i64, tpu.core_type = #tpu.core_type<tc>, window_params = [{transform_indices = @transform_0, window_bounds = array<i64: 64, 264>}, {pipeline_mode = #tpu.pipeline_mode<synchronous>, transform_indices = @transform_1, window_bounds = array<i64: 264, 256>}, {pipeline_mode = #tpu.pipeline_mode<synchronous>, transform_indices = @transform_2, window_bounds = array<i64: 4, 256, 128>}, {pipeline_mode = #tpu.pipeline_mode<synchronous>, transform_indices = @transform_3, window_bounds = array<i64: 1, 128>}, {pipeline_mode = #tpu.pipeline_mode<synchronous>, transform_indices = @transform_4, window_bounds = array<i64: 1, 128>}, {pipeline_mode = #tpu.pipeline_mode<synchronous>, transform_indices = @transform_5, window_bounds = array<i64: 4, 128, 128>}, {pipeline_mode = #tpu.pipeline_mode<synchronous>, transform_indices = @transform_6, window_bounds = array<i64: 1, 128>}, {pipeline_mode = #tpu.pipeline_mode<synchronous>, transform_indices = @transform_7, window_bounds = array<i64: 1, 128>}, {pipeline_mode = #tpu.pipeline_mode<synchronous>, transform_indices = @transform_8, window_bounds = array<i64: 128, 128>}, {transform_indices = @transform_9, window_bounds = array<i64: 4, 64, 128>}]} {
    %0 = tpu.iota {dimensions = array<i32: 0>} : vector<64x64xi32>
    %1 = tpu.iota {dimensions = array<i32: 1>} : vector<64x64xi32>
    %c1_i32 = arith.constant 1 : i32
    %2 = vector.broadcast %c1_i32 : i32 to vector<64x64xi32>
    %3 = arith.addi %1, %2 : vector<64x64xi32>
    %4 = arith.cmpi eq, %3, %0 : vector<64x64xi32>
    %c8_i32 = arith.constant 8 : i32
    %c0_i32 = arith.constant 0 : i32
    %5 = arith.cmpi eq, %c8_i32, %c0_i32 : i32
    %c1_i32_0 = arith.constant 1 : i32
    %6 = arith.select %5, %c1_i32_0, %c8_i32 : i32
    %7 = vector.broadcast %6 : i32 to vector<64x64xi32>
    %8 = arith.remsi %0, %7 : vector<64x64xi32>
    %c0_i32_1 = arith.constant 0 : i32
    %9 = vector.broadcast %c0_i32_1 : i32 to vector<64x64xi32>
    %10 = arith.cmpi ne, %8, %9 : vector<64x64xi32>
    %c0_i32_2 = arith.constant 0 : i32
    %11 = vector.broadcast %c0_i32_2 : i32 to vector<64x64xi32>
    %12 = arith.cmpi slt, %8, %11 : vector<64x64xi32>
    %c0_i32_3 = arith.constant 0 : i32
    %13 = arith.cmpi slt, %6, %c0_i32_3 : i32
    %14 = vector.broadcast %13 : i1 to vector<64x64xi1>
    %15 = vector.broadcast %14 : vector<64x64xi1> to vector<64x64xi1>
    %16 = arith.xori %12, %15 : vector<64x64xi1>
    %17 = arith.andi %16, %10 : vector<64x64xi1>
    %18 = vector.broadcast %6 : i32 to vector<64x64xi32>
    %19 = arith.addi %8, %18 : vector<64x64xi32>
    %20 = arith.select %17, %19, %8 : vector<64x64xi1>, vector<64x64xi32>
    %c0_i32_4 = arith.constant 0 : i32
    %21 = vector.broadcast %c0_i32_4 : i32 to vector<64x64xi32>
    %22 = arith.cmpi ne, %20, %21 : vector<64x64xi32>
    %23 = arith.andi %4, %22 : vector<64x64xi1>
    %24 = arith.extui %23 : vector<64x64xi1> to vector<64x64xi32>
    %25 = arith.sitofp %24 : vector<64x64xi32> to vector<64x64xf32>
    %c1_i32_5 = arith.constant 1 : i32
    %26 = vector.broadcast %c1_i32_5 : i32 to vector<64x64xi32>
    %27 = arith.addi %0, %26 : vector<64x64xi32>
    %28 = arith.cmpi eq, %1, %27 : vector<64x64xi32>
    %c8_i32_6 = arith.constant 8 : i32
    %c0_i32_7 = arith.constant 0 : i32
    %29 = arith.cmpi eq, %c8_i32_6, %c0_i32_7 : i32
    %c1_i32_8 = arith.constant 1 : i32
    %30 = arith.select %29, %c1_i32_8, %c8_i32_6 : i32
    %31 = vector.broadcast %30 : i32 to vector<64x64xi32>
    %32 = arith.remsi %0, %31 : vector<64x64xi32>
    %c0_i32_9 = arith.constant 0 : i32
    %33 = vector.broadcast %c0_i32_9 : i32 to vector<64x64xi32>
    %34 = arith.cmpi ne, %32, %33 : vector<64x64xi32>
    %c0_i32_10 = arith.constant 0 : i32
    %35 = vector.broadcast %c0_i32_10 : i32 to vector<64x64xi32>
    %36 = arith.cmpi slt, %32, %35 : vector<64x64xi32>
    %c0_i32_11 = arith.constant 0 : i32
    %37 = arith.cmpi slt, %30, %c0_i32_11 : i32
    %38 = vector.broadcast %37 : i1 to vector<64x64xi1>
    %39 = vector.broadcast %38 : vector<64x64xi1> to vector<64x64xi1>
    %40 = arith.xori %36, %39 : vector<64x64xi1>
    %41 = arith.andi %40, %34 : vector<64x64xi1>
    %42 = vector.broadcast %30 : i32 to vector<64x64xi32>
    %43 = arith.addi %32, %42 : vector<64x64xi32>
    %44 = arith.select %41, %43, %32 : vector<64x64xi1>, vector<64x64xi32>
    %c7_i32 = arith.constant 7 : i32
    %45 = vector.broadcast %c7_i32 : i32 to vector<64x64xi32>
    %46 = arith.cmpi ne, %44, %45 : vector<64x64xi32>
    %47 = arith.andi %28, %46 : vector<64x64xi1>
    %48 = arith.extui %47 : vector<64x64xi1> to vector<64x64xi32>
    %49 = arith.sitofp %48 : vector<64x64xi32> to vector<64x64xf32>
    %c0 = arith.constant 0 : index
    %c0_12 = arith.constant 0 : index
    %50 = vector.load %arg1[%c0, %c0_12] : memref<64x264xf32, #tpu.memory_space<vmem>>, vector<64x264xf32>
    %c0_13 = arith.constant 0 : index
    %c0_14 = arith.constant 0 : index
    %51 = vector.load %arg2[%c0_13, %c0_14] : memref<264x256xf32, #tpu.memory_space<vmem>>, vector<264x256xf32>
    %cst = arith.constant dense<0.000000e+00> : vector<64x256xf32>
    %52 = tpu.matmul %50, %51, %cst {dimension_numbers = #tpu.dot_dimension_numbers<[1], [0], [0], [1], [0, 0, 1, 1], [], []>} : vector<64x264xf32>, vector<264x256xf32>, vector<64x256xf32> -> vector<64x256xf32>
    %cst_15 = arith.constant 0.000000e+00 : f32
    %53 = vector.broadcast %cst_15 : f32 to vector<64x256xf32>
    %54 = arith.maximumf %52, %53 : vector<64x256xf32>
    %c1 = arith.constant 1 : index
    %c0_16 = arith.constant 0 : index
    %c0_17 = arith.constant 0 : index
    %55 = vector.load %arg3[%c1, %c0_16, %c0_17] : memref<4x256x128xf32, #tpu.memory_space<vmem>>, vector<1x256x128xf32>
    %56 = vector.shape_cast %55 : vector<1x256x128xf32> to vector<256x128xf32>
    %cst_18 = arith.constant dense<0.000000e+00> : vector<64x128xf32>
    %57 = tpu.matmul %54, %56, %cst_18 {dimension_numbers = #tpu.dot_dimension_numbers<[1], [0], [0], [1], [0, 0, 1, 1], [], []>} : vector<64x256xf32>, vector<256x128xf32>, vector<64x128xf32> -> vector<64x128xf32>
    %c3 = arith.constant 3 : index
    %c0_19 = arith.constant 0 : index
    %c0_20 = arith.constant 0 : index
    %58 = vector.load %arg3[%c3, %c0_19, %c0_20] : memref<4x256x128xf32, #tpu.memory_space<vmem>>, vector<1x256x128xf32>
    %59 = vector.shape_cast %58 : vector<1x256x128xf32> to vector<256x128xf32>
    %cst_21 = arith.constant dense<0.000000e+00> : vector<64x128xf32>
    %60 = tpu.matmul %54, %59, %cst_21 {dimension_numbers = #tpu.dot_dimension_numbers<[1], [0], [0], [1], [0, 0, 1, 1], [], []>} : vector<64x256xf32>, vector<256x128xf32>, vector<64x128xf32> -> vector<64x128xf32>
    %cst_22 = arith.constant dense<0.000000e+00> : vector<64x128xf32>
    %61 = tpu.matmul %25, %60, %cst_22 {dimension_numbers = #tpu.dot_dimension_numbers<[1], [0], [0], [1], [0, 0, 1, 1], [], []>} : vector<64x64xf32>, vector<64x128xf32>, vector<64x128xf32> -> vector<64x128xf32>
    %62 = arith.addf %57, %61 : vector<64x128xf32>
    %c2 = arith.constant 2 : index
    %c0_23 = arith.constant 0 : index
    %c0_24 = arith.constant 0 : index
    %63 = vector.load %arg3[%c2, %c0_23, %c0_24] : memref<4x256x128xf32, #tpu.memory_space<vmem>>, vector<1x256x128xf32>
    %64 = vector.shape_cast %63 : vector<1x256x128xf32> to vector<256x128xf32>
    %cst_25 = arith.constant dense<0.000000e+00> : vector<64x128xf32>
    %65 = tpu.matmul %54, %64, %cst_25 {dimension_numbers = #tpu.dot_dimension_numbers<[1], [0], [0], [1], [0, 0, 1, 1], [], []>} : vector<64x256xf32>, vector<256x128xf32>, vector<64x128xf32> -> vector<64x128xf32>
    %c0_26 = arith.constant 0 : index
    %c0_27 = arith.constant 0 : index
    %c0_28 = arith.constant 0 : index
    %66 = vector.load %arg3[%c0_26, %c0_27, %c0_28] : memref<4x256x128xf32, #tpu.memory_space<vmem>>, vector<1x256x128xf32>
    %67 = vector.shape_cast %66 : vector<1x256x128xf32> to vector<256x128xf32>
    %cst_29 = arith.constant dense<0.000000e+00> : vector<64x128xf32>
    %68 = tpu.matmul %54, %67, %cst_29 {dimension_numbers = #tpu.dot_dimension_numbers<[1], [0], [0], [1], [0, 0, 1, 1], [], []>} : vector<64x256xf32>, vector<256x128xf32>, vector<64x128xf32> -> vector<64x128xf32>
    %cst_30 = arith.constant dense<0.000000e+00> : vector<64x128xf32>
    %69 = tpu.matmul %49, %68, %cst_30 {dimension_numbers = #tpu.dot_dimension_numbers<[1], [0], [0], [1], [0, 0, 1, 1], [], []>} : vector<64x64xf32>, vector<64x128xf32>, vector<64x128xf32> -> vector<64x128xf32>
    %70 = arith.addf %65, %69 : vector<64x128xf32>
    %c0_31 = arith.constant 0 : index
    %c0_32 = arith.constant 0 : index
    %71 = vector.load %arg4[%c0_31, %c0_32] : memref<1x128xf32, #tpu.memory_space<vmem>>, vector<1x128xf32>
    %72 = vector.broadcast %71 : vector<1x128xf32> to vector<64x128xf32>
    %73 = arith.mulf %62, %72 : vector<64x128xf32>
    %c0_33 = arith.constant 0 : index
    %c0_34 = arith.constant 0 : index
    %74 = vector.load %arg5[%c0_33, %c0_34] : memref<1x128xf32, #tpu.memory_space<vmem>>, vector<1x128xf32>
    %75 = vector.broadcast %74 : vector<1x128xf32> to vector<64x128xf32>
    %76 = arith.addf %73, %75 : vector<64x128xf32>
    %cst_35 = arith.constant 0.000000e+00 : f32
    %77 = vector.broadcast %cst_35 : f32 to vector<64x128xf32>
    %78 = arith.maximumf %76, %77 : vector<64x128xf32>
    %c0_36 = arith.constant 0 : index
    %c0_37 = arith.constant 0 : index
    %79 = vector.load %arg4[%c0_36, %c0_37] : memref<1x128xf32, #tpu.memory_space<vmem>>, vector<1x128xf32>
    %80 = vector.broadcast %79 : vector<1x128xf32> to vector<64x128xf32>
    %81 = arith.mulf %70, %80 : vector<64x128xf32>
    %c0_38 = arith.constant 0 : index
    %c0_39 = arith.constant 0 : index
    %82 = vector.load %arg5[%c0_38, %c0_39] : memref<1x128xf32, #tpu.memory_space<vmem>>, vector<1x128xf32>
    %83 = vector.broadcast %82 : vector<1x128xf32> to vector<64x128xf32>
    %84 = arith.addf %81, %83 : vector<64x128xf32>
    %cst_40 = arith.constant 0.000000e+00 : f32
    %85 = vector.broadcast %cst_40 : f32 to vector<64x128xf32>
    %86 = arith.maximumf %84, %85 : vector<64x128xf32>
    %c1_41 = arith.constant 1 : index
    %c0_42 = arith.constant 0 : index
    %c0_43 = arith.constant 0 : index
    %87 = vector.load %arg6[%c1_41, %c0_42, %c0_43] : memref<4x128x128xf32, #tpu.memory_space<vmem>>, vector<1x128x128xf32>
    %88 = vector.shape_cast %87 : vector<1x128x128xf32> to vector<128x128xf32>
    %cst_44 = arith.constant dense<0.000000e+00> : vector<64x128xf32>
    %89 = tpu.matmul %78, %88, %cst_44 {dimension_numbers = #tpu.dot_dimension_numbers<[1], [0], [0], [1], [0, 0, 1, 1], [], []>} : vector<64x128xf32>, vector<128x128xf32>, vector<64x128xf32> -> vector<64x128xf32>
    %c3_45 = arith.constant 3 : index
    %c0_46 = arith.constant 0 : index
    %c0_47 = arith.constant 0 : index
    %90 = vector.load %arg6[%c3_45, %c0_46, %c0_47] : memref<4x128x128xf32, #tpu.memory_space<vmem>>, vector<1x128x128xf32>
    %91 = vector.shape_cast %90 : vector<1x128x128xf32> to vector<128x128xf32>
    %cst_48 = arith.constant dense<0.000000e+00> : vector<64x128xf32>
    %92 = tpu.matmul %86, %91, %cst_48 {dimension_numbers = #tpu.dot_dimension_numbers<[1], [0], [0], [1], [0, 0, 1, 1], [], []>} : vector<64x128xf32>, vector<128x128xf32>, vector<64x128xf32> -> vector<64x128xf32>
    %cst_49 = arith.constant dense<0.000000e+00> : vector<64x128xf32>
    %93 = tpu.matmul %25, %92, %cst_49 {dimension_numbers = #tpu.dot_dimension_numbers<[1], [0], [0], [1], [0, 0, 1, 1], [], []>} : vector<64x64xf32>, vector<64x128xf32>, vector<64x128xf32> -> vector<64x128xf32>
    %94 = arith.addf %89, %93 : vector<64x128xf32>
    %c2_50 = arith.constant 2 : index
    %c0_51 = arith.constant 0 : index
    %c0_52 = arith.constant 0 : index
    %95 = vector.load %arg6[%c2_50, %c0_51, %c0_52] : memref<4x128x128xf32, #tpu.memory_space<vmem>>, vector<1x128x128xf32>
    %96 = vector.shape_cast %95 : vector<1x128x128xf32> to vector<128x128xf32>
    %cst_53 = arith.constant dense<0.000000e+00> : vector<64x128xf32>
    %97 = tpu.matmul %78, %96, %cst_53 {dimension_numbers = #tpu.dot_dimension_numbers<[1], [0], [0], [1], [0, 0, 1, 1], [], []>} : vector<64x128xf32>, vector<128x128xf32>, vector<64x128xf32> -> vector<64x128xf32>
    %c0_54 = arith.constant 0 : index
    %c0_55 = arith.constant 0 : index
    %c0_56 = arith.constant 0 : index
    %98 = vector.load %arg6[%c0_54, %c0_55, %c0_56] : memref<4x128x128xf32, #tpu.memory_space<vmem>>, vector<1x128x128xf32>
    %99 = vector.shape_cast %98 : vector<1x128x128xf32> to vector<128x128xf32>
    %cst_57 = arith.constant dense<0.000000e+00> : vector<64x128xf32>
    %100 = tpu.matmul %86, %99, %cst_57 {dimension_numbers = #tpu.dot_dimension_numbers<[1], [0], [0], [1], [0, 0, 1, 1], [], []>} : vector<64x128xf32>, vector<128x128xf32>, vector<64x128xf32> -> vector<64x128xf32>
    %101 = arith.addf %97, %100 : vector<64x128xf32>
    %c1_58 = arith.constant 1 : index
    %c0_59 = arith.constant 0 : index
    %c0_60 = arith.constant 0 : index
    %102 = vector.load %arg6[%c1_58, %c0_59, %c0_60] : memref<4x128x128xf32, #tpu.memory_space<vmem>>, vector<1x128x128xf32>
    %103 = vector.shape_cast %102 : vector<1x128x128xf32> to vector<128x128xf32>
    %cst_61 = arith.constant dense<0.000000e+00> : vector<64x128xf32>
    %104 = tpu.matmul %86, %103, %cst_61 {dimension_numbers = #tpu.dot_dimension_numbers<[1], [0], [0], [1], [0, 0, 1, 1], [], []>} : vector<64x128xf32>, vector<128x128xf32>, vector<64x128xf32> -> vector<64x128xf32>
    %c3_62 = arith.constant 3 : index
    %c0_63 = arith.constant 0 : index
    %c0_64 = arith.constant 0 : index
    %105 = vector.load %arg6[%c3_62, %c0_63, %c0_64] : memref<4x128x128xf32, #tpu.memory_space<vmem>>, vector<1x128x128xf32>
    %106 = vector.shape_cast %105 : vector<1x128x128xf32> to vector<128x128xf32>
    %cst_65 = arith.constant dense<0.000000e+00> : vector<64x128xf32>
    %107 = tpu.matmul %78, %106, %cst_65 {dimension_numbers = #tpu.dot_dimension_numbers<[1], [0], [0], [1], [0, 0, 1, 1], [], []>} : vector<64x128xf32>, vector<128x128xf32>, vector<64x128xf32> -> vector<64x128xf32>
    %108 = arith.addf %104, %107 : vector<64x128xf32>
    %c2_66 = arith.constant 2 : index
    %c0_67 = arith.constant 0 : index
    %c0_68 = arith.constant 0 : index
    %109 = vector.load %arg6[%c2_66, %c0_67, %c0_68] : memref<4x128x128xf32, #tpu.memory_space<vmem>>, vector<1x128x128xf32>
    %110 = vector.shape_cast %109 : vector<1x128x128xf32> to vector<128x128xf32>
    %cst_69 = arith.constant dense<0.000000e+00> : vector<64x128xf32>
    %111 = tpu.matmul %86, %110, %cst_69 {dimension_numbers = #tpu.dot_dimension_numbers<[1], [0], [0], [1], [0, 0, 1, 1], [], []>} : vector<64x128xf32>, vector<128x128xf32>, vector<64x128xf32> -> vector<64x128xf32>
    %c0_70 = arith.constant 0 : index
    %c0_71 = arith.constant 0 : index
    %c0_72 = arith.constant 0 : index
    %112 = vector.load %arg6[%c0_70, %c0_71, %c0_72] : memref<4x128x128xf32, #tpu.memory_space<vmem>>, vector<1x128x128xf32>
    %113 = vector.shape_cast %112 : vector<1x128x128xf32> to vector<128x128xf32>
    %cst_73 = arith.constant dense<0.000000e+00> : vector<64x128xf32>
    %114 = tpu.matmul %78, %113, %cst_73 {dimension_numbers = #tpu.dot_dimension_numbers<[1], [0], [0], [1], [0, 0, 1, 1], [], []>} : vector<64x128xf32>, vector<128x128xf32>, vector<64x128xf32> -> vector<64x128xf32>
    %cst_74 = arith.constant dense<0.000000e+00> : vector<64x128xf32>
    %115 = tpu.matmul %49, %114, %cst_74 {dimension_numbers = #tpu.dot_dimension_numbers<[1], [0], [0], [1], [0, 0, 1, 1], [], []>} : vector<64x64xf32>, vector<64x128xf32>, vector<64x128xf32> -> vector<64x128xf32>
    %116 = arith.addf %111, %115 : vector<64x128xf32>
    %c0_75 = arith.constant 0 : index
    %c0_76 = arith.constant 0 : index
    %117 = vector.load %arg7[%c0_75, %c0_76] : memref<1x128xf32, #tpu.memory_space<vmem>>, vector<1x128xf32>
    %118 = vector.broadcast %117 : vector<1x128xf32> to vector<64x128xf32>
    %119 = arith.mulf %94, %118 : vector<64x128xf32>
    %c0_77 = arith.constant 0 : index
    %c0_78 = arith.constant 0 : index
    %120 = vector.load %arg8[%c0_77, %c0_78] : memref<1x128xf32, #tpu.memory_space<vmem>>, vector<1x128xf32>
    %121 = vector.broadcast %120 : vector<1x128xf32> to vector<64x128xf32>
    %122 = arith.addf %119, %121 : vector<64x128xf32>
    %cst_79 = arith.constant 0.000000e+00 : f32
    %123 = vector.broadcast %cst_79 : f32 to vector<64x128xf32>
    %124 = arith.maximumf %122, %123 : vector<64x128xf32>
    %c0_80 = arith.constant 0 : index
    %c0_81 = arith.constant 0 : index
    %125 = vector.load %arg9[%c0_80, %c0_81] : memref<128x128xf32, #tpu.memory_space<vmem>>, vector<128x128xf32>
    %cst_82 = arith.constant dense<0.000000e+00> : vector<64x128xf32>
    %126 = tpu.matmul %124, %125, %cst_82 {dimension_numbers = #tpu.dot_dimension_numbers<[1], [0], [0], [1], [0, 0, 1, 1], [], []>} : vector<64x128xf32>, vector<128x128xf32>, vector<64x128xf32> -> vector<64x128xf32>
    %127 = arith.negf %126 : vector<64x128xf32>
    %128 = math.exp %127 : vector<64x128xf32>
    %cst_83 = arith.constant 1.000000e+00 : f32
    %129 = vector.broadcast %cst_83 : f32 to vector<64x128xf32>
    %130 = arith.addf %129, %128 : vector<64x128xf32>
    %131 = arith.divf %129, %130 : vector<64x128xf32>
    %c0_84 = arith.constant 0 : index
    %c0_85 = arith.constant 0 : index
    %c0_86 = arith.constant 0 : index
    %132 = vector.load %arg10[%c0_84, %c0_85, %c0_86] : memref<4x64x128xf32, #tpu.memory_space<vmem>>, vector<1x64x128xf32>
    %133 = vector.shape_cast %132 : vector<1x64x128xf32> to vector<64x128xf32>
    %134 = vector.shape_cast %131 : vector<64x128xf32> to vector<1x64x128xf32>
    tpu.vector_store %arg10[%c0_84, %c0_85, %c0_86], %134 {strides = array<i32>} : memref<4x64x128xf32, #tpu.memory_space<vmem>>, vector<1x64x128xf32>,
    %c0_87 = arith.constant 0 : index
    %c0_88 = arith.constant 0 : index
    %135 = vector.load %arg7[%c0_87, %c0_88] : memref<1x128xf32, #tpu.memory_space<vmem>>, vector<1x128xf32>
    %136 = vector.broadcast %135 : vector<1x128xf32> to vector<64x128xf32>
    %137 = arith.mulf %101, %136 : vector<64x128xf32>
    %c0_89 = arith.constant 0 : index
    %c0_90 = arith.constant 0 : index
    %138 = vector.load %arg8[%c0_89, %c0_90] : memref<1x128xf32, #tpu.memory_space<vmem>>, vector<1x128xf32>
    %139 = vector.broadcast %138 : vector<1x128xf32> to vector<64x128xf32>
    %140 = arith.addf %137, %139 : vector<64x128xf32>
    %cst_91 = arith.constant 0.000000e+00 : f32
    %141 = vector.broadcast %cst_91 : f32 to vector<64x128xf32>
    %142 = arith.maximumf %140, %141 : vector<64x128xf32>
    %c0_92 = arith.constant 0 : index
    %c0_93 = arith.constant 0 : index
    %143 = vector.load %arg9[%c0_92, %c0_93] : memref<128x128xf32, #tpu.memory_space<vmem>>, vector<128x128xf32>
    %cst_94 = arith.constant dense<0.000000e+00> : vector<64x128xf32>
    %144 = tpu.matmul %142, %143, %cst_94 {dimension_numbers = #tpu.dot_dimension_numbers<[1], [0], [0], [1], [0, 0, 1, 1], [], []>} : vector<64x128xf32>, vector<128x128xf32>, vector<64x128xf32> -> vector<64x128xf32>
    %145 = arith.negf %144 : vector<64x128xf32>
    %146 = math.exp %145 : vector<64x128xf32>
    %cst_95 = arith.constant 1.000000e+00 : f32
    %147 = vector.broadcast %cst_95 : f32 to vector<64x128xf32>
    %148 = arith.addf %147, %146 : vector<64x128xf32>
    %149 = arith.divf %147, %148 : vector<64x128xf32>
    %c1_96 = arith.constant 1 : index
    %c0_97 = arith.constant 0 : index
    %c0_98 = arith.constant 0 : index
    %150 = vector.load %arg10[%c1_96, %c0_97, %c0_98] : memref<4x64x128xf32, #tpu.memory_space<vmem>>, vector<1x64x128xf32>
    %151 = vector.shape_cast %150 : vector<1x64x128xf32> to vector<64x128xf32>
    %152 = vector.shape_cast %149 : vector<64x128xf32> to vector<1x64x128xf32>
    tpu.vector_store %arg10[%c1_96, %c0_97, %c0_98], %152 {strides = array<i32>} : memref<4x64x128xf32, #tpu.memory_space<vmem>>, vector<1x64x128xf32>,
    %c0_99 = arith.constant 0 : index
    %c0_100 = arith.constant 0 : index
    %153 = vector.load %arg7[%c0_99, %c0_100] : memref<1x128xf32, #tpu.memory_space<vmem>>, vector<1x128xf32>
    %154 = vector.broadcast %153 : vector<1x128xf32> to vector<64x128xf32>
    %155 = arith.mulf %108, %154 : vector<64x128xf32>
    %c0_101 = arith.constant 0 : index
    %c0_102 = arith.constant 0 : index
    %156 = vector.load %arg8[%c0_101, %c0_102] : memref<1x128xf32, #tpu.memory_space<vmem>>, vector<1x128xf32>
    %157 = vector.broadcast %156 : vector<1x128xf32> to vector<64x128xf32>
    %158 = arith.addf %155, %157 : vector<64x128xf32>
    %cst_103 = arith.constant 0.000000e+00 : f32
    %159 = vector.broadcast %cst_103 : f32 to vector<64x128xf32>
    %160 = arith.maximumf %158, %159 : vector<64x128xf32>
    %c0_104 = arith.constant 0 : index
    %c0_105 = arith.constant 0 : index
    %161 = vector.load %arg9[%c0_104, %c0_105] : memref<128x128xf32, #tpu.memory_space<vmem>>, vector<128x128xf32>
    %cst_106 = arith.constant dense<0.000000e+00> : vector<64x128xf32>
    %162 = tpu.matmul %160, %161, %cst_106 {dimension_numbers = #tpu.dot_dimension_numbers<[1], [0], [0], [1], [0, 0, 1, 1], [], []>} : vector<64x128xf32>, vector<128x128xf32>, vector<64x128xf32> -> vector<64x128xf32>
    %163 = arith.negf %162 : vector<64x128xf32>
    %164 = math.exp %163 : vector<64x128xf32>
    %cst_107 = arith.constant 1.000000e+00 : f32
    %165 = vector.broadcast %cst_107 : f32 to vector<64x128xf32>
    %166 = arith.addf %165, %164 : vector<64x128xf32>
    %167 = arith.divf %165, %166 : vector<64x128xf32>
    %c2_108 = arith.constant 2 : index
    %c0_109 = arith.constant 0 : index
    %c0_110 = arith.constant 0 : index
    %168 = vector.load %arg10[%c2_108, %c0_109, %c0_110] : memref<4x64x128xf32, #tpu.memory_space<vmem>>, vector<1x64x128xf32>
    %169 = vector.shape_cast %168 : vector<1x64x128xf32> to vector<64x128xf32>
    %170 = vector.shape_cast %167 : vector<64x128xf32> to vector<1x64x128xf32>
    tpu.vector_store %arg10[%c2_108, %c0_109, %c0_110], %170 {strides = array<i32>} : memref<4x64x128xf32, #tpu.memory_space<vmem>>, vector<1x64x128xf32>,
    %c0_111 = arith.constant 0 : index
    %c0_112 = arith.constant 0 : index
    %171 = vector.load %arg7[%c0_111, %c0_112] : memref<1x128xf32, #tpu.memory_space<vmem>>, vector<1x128xf32>
    %172 = vector.broadcast %171 : vector<1x128xf32> to vector<64x128xf32>
    %173 = arith.mulf %116, %172 : vector<64x128xf32>
    %c0_113 = arith.constant 0 : index
    %c0_114 = arith.constant 0 : index
    %174 = vector.load %arg8[%c0_113, %c0_114] : memref<1x128xf32, #tpu.memory_space<vmem>>, vector<1x128xf32>
    %175 = vector.broadcast %174 : vector<1x128xf32> to vector<64x128xf32>
    %176 = arith.addf %173, %175 : vector<64x128xf32>
    %cst_115 = arith.constant 0.000000e+00 : f32
    %177 = vector.broadcast %cst_115 : f32 to vector<64x128xf32>
    %178 = arith.maximumf %176, %177 : vector<64x128xf32>
    %c0_116 = arith.constant 0 : index
    %c0_117 = arith.constant 0 : index
    %179 = vector.load %arg9[%c0_116, %c0_117] : memref<128x128xf32, #tpu.memory_space<vmem>>, vector<128x128xf32>
    %cst_118 = arith.constant dense<0.000000e+00> : vector<64x128xf32>
    %180 = tpu.matmul %178, %179, %cst_118 {dimension_numbers = #tpu.dot_dimension_numbers<[1], [0], [0], [1], [0, 0, 1, 1], [], []>} : vector<64x128xf32>, vector<128x128xf32>, vector<64x128xf32> -> vector<64x128xf32>
    %181 = arith.negf %180 : vector<64x128xf32>
    %182 = math.exp %181 : vector<64x128xf32>
    %cst_119 = arith.constant 1.000000e+00 : f32
    %183 = vector.broadcast %cst_119 : f32 to vector<64x128xf32>
    %184 = arith.addf %183, %182 : vector<64x128xf32>
    %185 = arith.divf %183, %184 : vector<64x128xf32>
    %c3_120 = arith.constant 3 : index
    %c0_121 = arith.constant 0 : index
    %c0_122 = arith.constant 0 : index
    %186 = vector.load %arg10[%c3_120, %c0_121, %c0_122] : memref<4x64x128xf32, #tpu.memory_space<vmem>>, vector<1x64x128xf32>
    %187 = vector.shape_cast %186 : vector<1x64x128xf32> to vector<64x128xf32>
    %188 = vector.shape_cast %185 : vector<64x128xf32> to vector<1x64x128xf32>
    tpu.vector_store %arg10[%c3_120, %c0_121, %c0_122], %188 {strides = array<i32>} : memref<4x64x128xf32, #tpu.memory_space<vmem>>, vector<1x64x128xf32>,
    return
  }
  func.func @transform_0(%arg0: i32) -> (i32, i32) {
    %c0_i32 = arith.constant 0 : i32
    %c0_i32_0 = arith.constant 0 : i32
    return %arg0, %c0_i32 : i32, i32
  }
  func.func @transform_1(%arg0: i32) -> (i32, i32) {
    %c0_i32 = arith.constant 0 : i32
    %c0_i32_0 = arith.constant 0 : i32
    %c0_i32_1 = arith.constant 0 : i32
    return %c0_i32, %c0_i32_0 : i32, i32
  }
  func.func @transform_2(%arg0: i32) -> (i32, i32, i32) {
    %c0_i32 = arith.constant 0 : i32
    %c0_i32_0 = arith.constant 0 : i32
    %c0_i32_1 = arith.constant 0 : i32
    %c0_i32_2 = arith.constant 0 : i32
    return %c0_i32, %c0_i32_0, %c0_i32_1 : i32, i32, i32
  }
  func.func @transform_3(%arg0: i32) -> (i32, i32) {
    %c0_i32 = arith.constant 0 : i32
    %c0_i32_0 = arith.constant 0 : i32
    %c0_i32_1 = arith.constant 0 : i32
    return %c0_i32, %c0_i32_0 : i32, i32
  }
  func.func @transform_4(%arg0: i32) -> (i32, i32) {
    %c0_i32 = arith.constant 0 : i32
    %c0_i32_0 = arith.constant 0 : i32
    %c0_i32_1 = arith.constant 0 : i32
    return %c0_i32, %c0_i32_0 : i32, i32
  }
  func.func @transform_5(%arg0: i32) -> (i32, i32, i32) {
    %c0_i32 = arith.constant 0 : i32
    %c0_i32_0 = arith.constant 0 : i32
    %c0_i32_1 = arith.constant 0 : i32
    %c0_i32_2 = arith.constant 0 : i32
    return %c0_i32, %c0_i32_0, %c0_i32_1 : i32, i32, i32
  }
  func.func @transform_6(%arg0: i32) -> (i32, i32) {
    %c0_i32 = arith.constant 0 : i32
    %c0_i32_0 = arith.constant 0 : i32
    %c0_i32_1 = arith.constant 0 : i32
    return %c0_i32, %c0_i32_0 : i32, i32
  }
  func.func @transform_7(%arg0: i32) -> (i32, i32) {
    %c0_i32 = arith.constant 0 : i32
    %c0_i32_0 = arith.constant 0 : i32
    %c0_i32_1 = arith.constant 0 : i32
    return %c0_i32, %c0_i32_0 : i32, i32
  }
  func.func @transform_8(%arg0: i32) -> (i32, i32) {
    %c0_i32 = arith.constant 0 : i32
    %c0_i32_0 = arith.constant 0 : i32
    %c0_i32_1 = arith.constant 0 : i32
    return %c0_i32, %c0_i32_0 : i32, i32
  }
  func.func @transform_9(%arg0: i32) -> (i32, i32, i32) {
    %c0_i32 = arith.constant 0 : i32
    %c0_i32_0 = arith.constant 0 : i32
    %c0_i32_1 = arith.constant 0 : i32
    return %c0_i32, %arg0, %c0_i32_0 : i32, i32, i32
  }
}

</mosaic_0001>

<llo_original>
// kernel: sound_decoder_forward.1
$region0: #{sound_decoder_forward.1}
  #allocation0 [shape = 'u32[]', space=smem, size = 0x4, offset = 0x4, fixed_abs, tag = 'smem constant byte address 0x4 - core index']
  #allocation1 [shape = 'u32[144,128]{1,0:T(1,128)}', space=vmem, size = 0x12000, scoped, tag = 'internal scratch']
  %s0 = inlined_call_operand.vmem [shape: f32[64,264], index: 0, kind: input, shape index: {}]
  %s1 = inlined_call_operand.vmem [shape: f32[264,256], index: 1, kind: input, shape index: {}]
  %s2 = inlined_call_operand.vmem [shape: f32[4,256,128], index: 2, kind: input, shape index: {}]
  %s3 = inlined_call_operand.vmem [shape: f32[1,128], index: 3, kind: input, shape index: {}]
  %s4 = inlined_call_operand.vmem [shape: f32[1,128], index: 4, kind: input, shape index: {}]
  %s5 = inlined_call_operand.vmem [shape: f32[4,128,128], index: 5, kind: input, shape index: {}]
  %s6 = inlined_call_operand.vmem [shape: f32[1,128], index: 6, kind: input, shape index: {}]
  %s7 = inlined_call_operand.vmem [shape: f32[1,128], index: 7, kind: input, shape index: {}]
  %s8 = inlined_call_operand.vmem [shape: f32[128,128], index: 8, kind: input, shape index: {}]
  %s9 = inlined_call_operand.vmem [shape: f32[4,64,128], index: 9, kind: output, shape index: {}]
  %s10 = sld [smem:[#allocation0]]
  $region46: #{sound_decoder_forward.1} parent=0
    _
  %s12 = ssub.s32 1, %s10
  %s13 = scalar_select 0, %s12, %s10
  // Predicated region
  $region2: #{sound_decoder_forward.1} parent=0 // pred_check
    _
  $region3: #{sound_decoder_forward.1} parent=0 // pred_check_branch
    %15 = sbr.rel (0) target = $region5
  $region4: #{sound_decoder_forward.1} parent=0 // pred_region
    _
  $region5: #{sound_decoder_forward.1} parent=0 // pred_fallthru
    _
  // Predicated region
  $region6: #{sound_decoder_forward.1} parent=0 // pred_check
    _
  $region7: #{sound_decoder_forward.1} parent=0 // pred_check_branch
    %17 = sbr.rel (0) target = $region9
  $region8: #{sound_decoder_forward.1} parent=0 // pred_region
    _
  $region9: #{sound_decoder_forward.1} parent=0 // pred_fallthru
    _
  // Predicated region
  $region10: #{sound_decoder_forward.1} parent=0 // pred_check
    _
  $region11: #{sound_decoder_forward.1} parent=0 // pred_check_branch
    %19 = sbr.rel (0) target = $region13
  $region12: #{sound_decoder_forward.1} parent=0 // pred_region
    _
  $region13: #{sound_decoder_forward.1} parent=0 // pred_fallthru
    _
  // Predicated region
  $region14: #{sound_decoder_forward.1} parent=0 // pred_check
    _
  $region15: #{sound_decoder_forward.1} parent=0 // pred_check_branch
    %21 = sbr.rel (0) target = $region17
  $region16: #{sound_decoder_forward.1} parent=0 // pred_region
    _
  $region17: #{sound_decoder_forward.1} parent=0 // pred_fallthru
    _
  // Predicated region
  $region18: #{sound_decoder_forward.1} parent=0 // pred_check
    _
  $region19: #{sound_decoder_forward.1} parent=0 // pred_check_branch
    %23 = sbr.rel (0) target = $region21
  $region20: #{sound_decoder_forward.1} parent=0 // pred_region
    _
  $region21: #{sound_decoder_forward.1} parent=0 // pred_fallthru
    _
  // Predicated region
  $region22: #{sound_decoder_forward.1} parent=0 // pred_check
    _
  $region23: #{sound_decoder_forward.1} parent=0 // pred_check_branch
    %25 = sbr.rel (0) target = $region25
  $region24: #{sound_decoder_forward.1} parent=0 // pred_region
    _
  $region25: #{sound_decoder_forward.1} parent=0 // pred_fallthru
    _
  // Predicated region
  $region26: #{sound_decoder_forward.1} parent=0 // pred_check
    _
  $region27: #{sound_decoder_forward.1} parent=0 // pred_check_branch
    %27 = sbr.rel (0) target = $region29
  $region28: #{sound_decoder_forward.1} parent=0 // pred_region
    _
  $region29: #{sound_decoder_forward.1} parent=0 // pred_fallthru
    _
  // Predicated region
  $region30: #{sound_decoder_forward.1} parent=0 // pred_check
    _
  $region31: #{sound_decoder_forward.1} parent=0 // pred_check_branch
    %29 = sbr.rel (0) target = $region33
  $region32: #{sound_decoder_forward.1} parent=0 // pred_region
    _
  $region33: #{sound_decoder_forward.1} parent=0 // pred_fallthru
    _
  // Predicated region
  $region34: #{sound_decoder_forward.1} parent=0 // pred_check
    _
  $region35: #{sound_decoder_forward.1} parent=0 // pred_check_branch
    %31 = sbr.rel (0) target = $region37
  $region36: #{sound_decoder_forward.1} parent=0 // pred_region
    _
  $region37: #{sound_decoder_forward.1} parent=0 // pred_fallthru
    _
  %v32 = vlaneseq
  %v33 = vshrl.u32 %v32, 7
  %v34 = vadd.s32 %v33, 8
  %v35 = vadd.s32 %v33, 16
  %v36 = vadd.s32 %v33, 24
  %v37 = vadd.s32 %v33, 32
  %v38 = vadd.s32 %v33, 40
  %v39 = vadd.s32 %v33, 48
  %v40 = vadd.s32 %v33, 56
  %v41 = vlaneseq
  %v42 = vand.u32 %v41, 127
  %v43 = vadd.s32 %v42, 1
  %vm44 = vcmp.eq.s32.totalorder %v43, %v33
  %vm45 = vcmp.eq.s32.totalorder %v43, %v34
  %vm46 = vcmp.eq.s32.totalorder %v43, %v35
  %vm47 = vcmp.eq.s32.totalorder %v43, %v36
  %vm48 = vcmp.eq.s32.totalorder %v43, %v37
  %vm49 = vcmp.eq.s32.totalorder %v43, %v38
  %vm50 = vcmp.eq.s32.totalorder %v43, %v39
  %vm51 = vcmp.eq.s32.totalorder %v43, %v40
  %vm52 = vcmp.lt.s32.totalorder %v33, 0
  %v53 = vsub.s32 0, %v33
  %v54 = vsel %vm52, %v53, %v33
  %v55 = vshrl.u32 %v54, 3
  %v56 = vand.u32 %v54, 7
  %v57 = vsub.s32 0, %v56
  %v58 = vsel %vm52, %v57, %v56
  %vm59 = vcmp.lt.s32.totalorder %v34, 0
  %v60 = vsub.s32 0, %v34
  %v61 = vsel %vm59, %v60, %v34
  %v62 = vshrl.u32 %v61, 3
  %v63 = vand.u32 %v61, 7
  %v64 = vsub.s32 0, %v63
  %v65 = vsel %vm59, %v64, %v63
  %vm66 = vcmp.lt.s32.totalorder %v35, 0
  %v67 = vsub.s32 0, %v35
  %v68 = vsel %vm66, %v67, %v35
  %v69 = vshrl.u32 %v68, 3
  %v70 = vand.u32 %v68, 7
  %v71 = vsub.s32 0, %v70
  %v72 = vsel %vm66, %v71, %v70
  %vm73 = vcmp.lt.s32.totalorder %v36, 0
  %v74 = vsub.s32 0, %v36
  %v75 = vsel %vm73, %v74, %v36
  %v76 = vshrl.u32 %v75, 3
  %v77 = vand.u32 %v75, 7
  %v78 = vsub.s32 0, %v77
  %v79 = vsel %vm73, %v78, %v77
  %vm80 = vcmp.lt.s32.totalorder %v37, 0
  %v81 = vsub.s32 0, %v37
  %v82 = vsel %vm80, %v81, %v37
  %v83 = vshrl.u32 %v82, 3
  %v84 = vand.u32 %v82, 7
  %v85 = vsub.s32 0, %v84
  %v86 = vsel %vm80, %v85, %v84
  %vm87 = vcmp.lt.s32.totalorder %v38, 0
  %v88 = vsub.s32 0, %v38
  %v89 = vsel %vm87, %v88, %v38
  %v90 = vshrl.u32 %v89, 3
  %v91 = vand.u32 %v89, 7
  %v92 = vsub.s32 0, %v91
  %v93 = vsel %vm87, %v92, %v91
  %vm94 = vcmp.lt.s32.totalorder %v39, 0
  %v95 = vsub.s32 0, %v39
  %v96 = vsel %vm94, %v95, %v39
  %v97 = vshrl.u32 %v96, 3
  %v98 = vand.u32 %v96, 7
  %v99 = vsub.s32 0, %v98
  %v100 = vsel %vm94, %v99, %v98
  %vm101 = vcmp.lt.s32.totalorder %v40, 0
  %v102 = vsub.s32 0, %v40
  %v103 = vsel %vm101, %v102, %v40
  %v104 = vshrl.u32 %v103, 3
  %v105 = vand.u32 %v103, 7
  %v106 = vsub.s32 0, %v105
  %v107 = vsel %vm101, %v106, %v105
  %vm108 = vcmp.ne.s32.totalorder %v58, 0
  %vm109 = vcmp.ne.s32.totalorder %v65, 0
  %vm110 = vcmp.ne.s32.totalorder %v72, 0
  %vm111 = vcmp.ne.s32.totalorder %v79, 0
  %vm112 = vcmp.ne.s32.totalorder %v86, 0
  %vm113 = vcmp.ne.s32.totalorder %v93, 0
  %vm114 = vcmp.ne.s32.totalorder %v100, 0
  %vm115 = vcmp.ne.s32.totalorder %v107, 0
  %vm116 = vcmp.lt.s32.totalorder %v58, 0
  %vm117 = vcmp.lt.s32.totalorder %v65, 0
  %vm118 = vcmp.lt.s32.totalorder %v72, 0
  %vm119 = vcmp.lt.s32.totalorder %v79, 0
  %vm120 = vcmp.lt.s32.totalorder %v86, 0
  %vm121 = vcmp.lt.s32.totalorder %v93, 0
  %vm122 = vcmp.lt.s32.totalorder %v100, 0
  %vm123 = vcmp.lt.s32.totalorder %v107, 0
  %vm124 = vmand %vm116, %vm108
  %vm125 = vmand %vm117, %vm109
  %vm126 = vmand %vm118, %vm110
  %vm127 = vmand %vm119, %vm111
  %vm128 = vmand %vm120, %vm112
  %vm129 = vmand %vm121, %vm113
  %vm130 = vmand %vm122, %vm114
  %vm131 = vmand %vm123, %vm115
  %v132 = vadd.s32 %v58, 8
  %v133 = vadd.s32 %v65, 8
  %v134 = vadd.s32 %v72, 8
  %v135 = vadd.s32 %v79, 8
  %v136 = vadd.s32 %v86, 8
  %v137 = vadd.s32 %v93, 8
  %v138 = vadd.s32 %v100, 8
  %v139 = vadd.s32 %v107, 8
  %v140 = vsel %vm124, %v132, %v58
  %v141 = vsel %vm125, %v133, %v65
  %v142 = vsel %vm126, %v134, %v72
  %v143 = vsel %vm127, %v135, %v79
  %v144 = vsel %vm128, %v136, %v86
  %v145 = vsel %vm129, %v137, %v93
  %v146 = vsel %vm130, %v138, %v100
  %v147 = vsel %vm131, %v139, %v107
  %vm148 = vcmp.ne.s32.totalorder %v140, 0
  %vm149 = vcmp.ne.s32.totalorder %v141, 0
  %vm150 = vcmp.ne.s32.totalorder %v142, 0
  %vm151 = vcmp.ne.s32.totalorder %v143, 0
  %vm152 = vcmp.ne.s32.totalorder %v144, 0
  %vm153 = vcmp.ne.s32.totalorder %v145, 0
  %vm154 = vcmp.ne.s32.totalorder %v146, 0
  %vm155 = vcmp.ne.s32.totalorder %v147, 0
  %vm156 = vmand %vm44, %vm148
  %vm157 = vmand %vm45, %vm149
  %vm158 = vmand %vm46, %vm150
  %vm159 = vmand %vm47, %vm151
  %vm160 = vmand %vm48, %vm152
  %vm161 = vmand %vm49, %vm153
  %vm162 = vmand %vm50, %vm154
  %vm163 = vmand %vm51, %vm155
  %v164 = vsel %vm156, 1, 0
  %v165 = vsel %vm157, 1, 0
  %v166 = vsel %vm158, 1, 0
  %v167 = vsel %vm159, 1, 0
  %v168 = vsel %vm160, 1, 0
  %v169 = vsel %vm161, 1, 0
  %v170 = vsel %vm162, 1, 0
  %v171 = vsel %vm163, 1, 0
  %v172 = vcvt.s32.f32 %v164
  %v173 = vcvt.s32.f32 %v165
  %v174 = vcvt.s32.f32 %v166
  %v175 = vcvt.s32.f32 %v167
  %v176 = vcvt.s32.f32 %v168
  %v177 = vcvt.s32.f32 %v169
  %v178 = vcvt.s32.f32 %v170
  %v179 = vcvt.s32.f32 %v171
  %v180 = vadd.s32 %v33, 1
  %v181 = vadd.s32 %v34, 1
  %v182 = vadd.s32 %v35, 1
  %v183 = vadd.s32 %v36, 1
  %v184 = vadd.s32 %v37, 1
  %v185 = vadd.s32 %v38, 1
  %v186 = vadd.s32 %v39, 1
  %v187 = vadd.s32 %v40, 1
  %vm188 = vcmp.eq.s32.totalorder %v42, %v180
  %vm189 = vcmp.eq.s32.totalorder %v42, %v181
  %vm190 = vcmp.eq.s32.totalorder %v42, %v182
  %vm191 = vcmp.eq.s32.totalorder %v42, %v183
  %vm192 = vcmp.eq.s32.totalorder %v42, %v184
  %vm193 = vcmp.eq.s32.totalorder %v42, %v185
  %vm194 = vcmp.eq.s32.totalorder %v42, %v186
  %vm195 = vcmp.eq.s32.totalorder %v42, %v187
  %vm196 = vcmp.ne.s32.totalorder %v140, 7
  %vm197 = vcmp.ne.s32.totalorder %v141, 7
  %vm198 = vcmp.ne.s32.totalorder %v142, 7
  %vm199 = vcmp.ne.s32.totalorder %v143, 7
  %vm200 = vcmp.ne.s32.totalorder %v144, 7
  %vm201 = vcmp.ne.s32.totalorder %v145, 7
  %vm202 = vcmp.ne.s32.totalorder %v146, 7
  %vm203 = vcmp.ne.s32.totalorder %v147, 7
  %vm204 = vmand %vm188, %vm196
  %vm205 = vmand %vm189, %vm197
  %vm206 = vmand %vm190, %vm198
  %vm207 = vmand %vm191, %vm199
  %vm208 = vmand %vm192, %vm200
  %vm209 = vmand %vm193, %vm201
  %vm210 = vmand %vm194, %vm202
  %vm211 = vmand %vm195, %vm203
  %v212 = vsel %vm204, 1, 0
  %v213 = vsel %vm205, 1, 0
  %v214 = vsel %vm206, 1, 0
  %v215 = vsel %vm207, 1, 0
  %v216 = vsel %vm208, 1, 0
  %v217 = vsel %vm209, 1, 0
  %v218 = vsel %vm210, 1, 0
  %v219 = vsel %vm211, 1, 0
  %v220 = vcvt.s32.f32 %v212
  %v221 = vcvt.s32.f32 %v213
  %v222 = vcvt.s32.f32 %v214
  %v223 = vcvt.s32.f32 %v215
  %v224 = vcvt.s32.f32 %v216
  %v225 = vcvt.s32.f32 %v217
  %v226 = vcvt.s32.f32 %v218
  %v227 = vcvt.s32.f32 %v219
  %v228 = vld [vmem:[%s0] sm:$0xff]
  %v229 = vld [vmem:[%s0 + $0x8] sm:$0xff]
  %v230 = vld [vmem:[%s0 + $0x10] sm:$0xff]
  %v231 = vld [vmem:[%s0 + $0x18] sm:$0xff]
  %v232 = vld [vmem:[%s0 + $0x20] sm:$0xff]
  %v233 = vld [vmem:[%s0 + $0x28] sm:$0xff]
  %v234 = vld [vmem:[%s0 + $0x30] sm:$0xff]
  %v235 = vld [vmem:[%s0 + $0x38] sm:$0xff]
  %v236 = vld [vmem:[%s0 + $0x40] sm:$0xff]
  %v237 = vld [vmem:[%s0 + $0x48] sm:$0xff]
  %v238 = vld [vmem:[%s0 + $0x50] sm:$0xff]
  %v239 = vld [vmem:[%s0 + $0x58] sm:$0xff]
  %v240 = vld [vmem:[%s0 + $0x60] sm:$0xff]
  %v241 = vld [vmem:[%s0 + $0x68] sm:$0xff]
  %v242 = vld [vmem:[%s0 + $0x70] sm:$0xff]
  %v243 = vld [vmem:[%s0 + $0x78] sm:$0xff]
  %v244 = vld [vmem:[%s0 + $0x80] sm:$0xff]
  %v245 = vld [vmem:[%s0 + $0x88] sm:$0xff]
  %v246 = vld [vmem:[%s0 + $0x90] sm:$0xff]
  %v247 = vld [vmem:[%s0 + $0x98] sm:$0xff]
  %v248 = vld [vmem:[%s0 + $0xa0] sm:$0xff]
  %v249 = vld [vmem:[%s0 + $0xa8] sm:$0xff]
  %v250 = vld [vmem:[%s0 + $0xb0] sm:$0xff]
  %v251 = vld [vmem:[%s0 + $0xb8] sm:$0xff]
  %v252 = vld [vmem:[%s1] sm:$0xff]
  %v253 = vld [vmem:[%s1 + $0x8] sm:$0xff]
  %v254 = vld [vmem:[%s1 + $0x10] sm:$0xff]
  %v255 = vld [vmem:[%s1 + $0x18] sm:$0xff]
  %v256 = vld [vmem:[%s1 + $0x20] sm:$0xff]
  %v257 = vld [vmem:[%s1 + $0x28] sm:$0xff]
  %v258 = vld [vmem:[%s1 + $0x30] sm:$0xff]
  %v259 = vld [vmem:[%s1 + $0x38] sm:$0xff]
  %v260 = vld [vmem:[%s1 + $0x40] sm:$0xff]
  %v261 = vld [vmem:[%s1 + $0x48] sm:$0xff]
  %v262 = vld [vmem:[%s1 + $0x50] sm:$0xff]
  %v263 = vld [vmem:[%s1 + $0x58] sm:$0xff]
  %v264 = vld [vmem:[%s1 + $0x60] sm:$0xff]
  %v265 = vld [vmem:[%s1 + $0x68] sm:$0xff]
  %v266 = vld [vmem:[%s1 + $0x70] sm:$0xff]
  %v267 = vld [vmem:[%s1 + $0x78] sm:$0xff]
  %v268 = vld [vmem:[%s1 + $0x80] sm:$0xff]
  %v269 = vld [vmem:[%s1 + $0x88] sm:$0xff]
  %v270 = vld [vmem:[%s1 + $0x90] sm:$0xff]
  %v271 = vld [vmem:[%s1 + $0x98] sm:$0xff]
  %v272 = vld [vmem:[%s1 + $0xa0] sm:$0xff]
  %v273 = vld [vmem:[%s1 + $0xa8] sm:$0xff]
  %v274 = vld [vmem:[%s1 + $0xb0] sm:$0xff]
  %v275 = vld [vmem:[%s1 + $0xb8] sm:$0xff]
  %v276 = vld [vmem:[%s1 + $0xc0] sm:$0xff]
  %v277 = vld [vmem:[%s1 + $0xc8] sm:$0xff]
  %v278 = vld [vmem:[%s1 + $0xd0] sm:$0xff]
  %v279 = vld [vmem:[%s1 + $0xd8] sm:$0xff]
  %v280 = vld [vmem:[%s1 + $0xe0] sm:$0xff]
  %v281 = vld [vmem:[%s1 + $0xe8] sm:$0xff]
  %v282 = vld [vmem:[%s1 + $0xf0] sm:$0xff]
  %v283 = vld [vmem:[%s1 + $0xf8] sm:$0xff]
  %v284 = vld [vmem:[%s1 + $0x100] sm:$0xff]
  %v285 = vld [vmem:[%s1 + $0x108] sm:$0xff]
  %v286 = vld [vmem:[%s1 + $0x110] sm:$0xff]
  %v287 = vld [vmem:[%s1 + $0x118] sm:$0xff]
  %v288 = vld [vmem:[%s1 + $0x120] sm:$0xff]
  %v289 = vld [vmem:[%s1 + $0x128] sm:$0xff]
  %v290 = vld [vmem:[%s1 + $0x130] sm:$0xff]
  %v291 = vld [vmem:[%s1 + $0x138] sm:$0xff]
  %v292 = vld [vmem:[%s1 + $0x140] sm:$0xff]
  %v293 = vld [vmem:[%s1 + $0x148] sm:$0xff]
  %v294 = vld [vmem:[%s1 + $0x150] sm:$0xff]
  %v295 = vld [vmem:[%s1 + $0x158] sm:$0xff]
  %v296 = vld [vmem:[%s1 + $0x160] sm:$0xff]
  %v297 = vld [vmem:[%s1 + $0x168] sm:$0xff]
  %v298 = vld [vmem:[%s1 + $0x170] sm:$0xff]
  %v299 = vld [vmem:[%s1 + $0x178] sm:$0xff]
  %v300 = vld [vmem:[%s1 + $0x180] sm:$0xff]
  %v301 = vld [vmem:[%s1 + $0x188] sm:$0xff]
  %v302 = vld [vmem:[%s1 + $0x190] sm:$0xff]
  %v303 = vld [vmem:[%s1 + $0x198] sm:$0xff]
  %v304 = vld [vmem:[%s1 + $0x1a0] sm:$0xff]
  %v305 = vld [vmem:[%s1 + $0x1a8] sm:$0xff]
  %v306 = vld [vmem:[%s1 + $0x1b0] sm:$0xff]
  %v307 = vld [vmem:[%s1 + $0x1b8] sm:$0xff]
  %v308 = vld [vmem:[%s1 + $0x1c0] sm:$0xff]
  %v309 = vld [vmem:[%s1 + $0x1c8] sm:$0xff]
  %v310 = vld [vmem:[%s1 + $0x1d0] sm:$0xff]
  %v311 = vld [vmem:[%s1 + $0x1d8] sm:$0xff]
  %v312 = vld [vmem:[%s1 + $0x1e0] sm:$0xff]
  %v313 = vld [vmem:[%s1 + $0x1e8] sm:$0xff]
  %v314 = vld [vmem:[%s1 + $0x1f0] sm:$0xff]
  %v315 = vld [vmem:[%s1 + $0x1f8] sm:$0xff]
  %v316 = vld [vmem:[%s1 + $0x200] sm:$0xff]
  %v317 = vld [vmem:[%s1 + $0x208] sm:$0xff]
  %vm318 = vcmask 64512
  %v320 = vsel %vm318, %v230, 0
  %v323 = vsel %vm318, %v233, 0
  %v326 = vsel %vm318, %v236, 0
  %v329 = vsel %vm318, %v239, 0
  %v332 = vsel %vm318, %v242, 0
  %v335 = vsel %vm318, %v245, 0
  %v338 = vsel %vm318, %v248, 0
  %v341 = vsel %vm318, %v251, 0
  %343 = vmatprep.subr.mxu0 %v253
  %344 = vmatpush1.msra.mxu0 %v252
  %345 = vmatprep.subr.mxu0 %v255
  %346 = vmatpush1.msra.mxu0 %v254
  %347 = vmatprep.subr.mxu0 %v257
  %348 = vmatpush1.msra.mxu0 %v256
  %349 = vmatprep.subr.mxu0 %v259
  %350 = vmatpush1.msra.mxu0 %v258
  %351 = vmatprep.subr.mxu0 %v261
  %352 = vmatpush1.msra.mxu0 %v260
  %353 = vmatprep.subr.mxu0 %v263
  %354 = vmatpush1.msra.mxu0 %v262
  %355 = vmatprep.subr.mxu0 %v265
  %356 = vmatpush1.msra.mxu0 %v264
  %357 = vmatprep.subr.mxu0 %v267
  %358 = vmatpush1.msra.mxu0 %v266
  %359 = vmatprep.subr.mxu0 %v269
  %360 = vmatpush1.msra.mxu0 %v268
  %361 = vmatprep.subr.mxu0 %v271
  %362 = vmatpush1.msra.mxu0 %v270
  %363 = vmatprep.subr.mxu0 %v273
  %364 = vmatpush1.msra.mxu0 %v272
  %365 = vmatprep.subr.mxu0 %v275
  %366 = vmatpush1.msra.mxu0 %v274
  %367 = vmatprep.subr.mxu0 %v277
  %368 = vmatpush1.msra.mxu0 %v276
  %369 = vmatprep.subr.mxu0 %v279
  %370 = vmatpush1.msra.mxu0 %v278
  %371 = vmatprep.subr.mxu0 %v281
  %372 = vmatpush1.msra.mxu0 %v280
  %373 = vmatprep.subr.mxu0 %v283
  %374 = vmatpush1.msra.mxu0 %v282
  %375 = vmatprep.subr.mxu0 %v285
  %376 = vmatpush1.msra.mxu0 %v284
  %377 = vmatprep.subr.mxu0 %v287
  %378 = vmatpush1.msra.mxu0 %v286
  %379 = vmatprep.subr.mxu0 %v289
  %380 = vmatpush1.msra.mxu0 %v288
  %381 = vmatprep.subr.mxu0 %v291
  %382 = vmatpush1.msra.mxu0 %v290
  %383 = vmatprep.subr.mxu0 %v293
  %384 = vmatpush1.msra.mxu0 %v292
  %385 = vmatprep.subr.mxu0 %v295
  %386 = vmatpush1.msra.mxu0 %v294
  %387 = vmatprep.subr.mxu0 %v297
  %388 = vmatpush1.msra.mxu0 %v296
  %389 = vmatprep.subr.mxu0 %v299
  %390 = vmatpush1.msra.mxu0 %v298
  %391 = vmatprep.subr.mxu0 %v301
  %392 = vmatpush1.msra.mxu0 %v300
  %393 = vmatprep.subr.mxu0 %v303
  %394 = vmatpush1.msra.mxu0 %v302
  %395 = vmatprep.subr.mxu0 %v305
  %396 = vmatpush1.msra.mxu0 %v304
  %397 = vmatprep.subr.mxu0 %v307
  %398 = vmatpush1.msra.mxu0 %v306
  %399 = vmatprep.subr.mxu0 %v309
  %400 = vmatpush1.msra.mxu0 %v308
  %401 = vmatprep.subr.mxu0 %v311
  %402 = vmatpush1.msra.mxu0 %v310
  %403 = vmatprep.subr.mxu0 %v313
  %404 = vmatpush1.msra.mxu0 %v312
  %405 = vmatprep.subr.mxu0 %v315
  %406 = vmatpush1.msra.mxu0 %v314
  %407 = vmatprep.mubr.f32.mxu0 %v229
  %408 = vmatmul.mubr.f32.gmra.mrb[0].mxu0 %v228
  %v409 = vpop.f32.mrb[0].mxu0
  %v410 = vadd.f32 0.0, %v409
  %v411 = vpop.f32.mrb[0].mxu0
  %v412 = vadd.f32 0.0, %v411
  %413 = vmatprep.mubr.f32.mxu0 %v232
  %414 = vmatmul.mubr.f32.gmra.mrb[0].mxu0 %v231
  %v415 = vpop.f32.mrb[0].mxu0
  %v416 = vadd.f32 0.0, %v415
  %v417 = vpop.f32.mrb[0].mxu0
  %v418 = vadd.f32 0.0, %v417
  %419 = vmatprep.mubr.f32.mxu0 %v235
  %420 = vmatmul.mubr.f32.gmra.mrb[0].mxu0 %v234
  %v421 = vpop.f32.mrb[0].mxu0
  %v422 = vadd.f32 0.0, %v421
  %v423 = vpop.f32.mrb[0].mxu0
  %v424 = vadd.f32 0.0, %v423
  %425 = vmatprep.mubr.f32.mxu0 %v238
  %426 = vmatmul.mubr.f32.gmra.mrb[0].mxu0 %v237
  %v427 = vpop.f32.mrb[0].mxu0
  %v428 = vadd.f32 0.0, %v427
  %v429 = vpop.f32.mrb[0].mxu0
  %v430 = vadd.f32 0.0, %v429
  %431 = vmatprep.mubr.f32.mxu0 %v241
  %432 = vmatmul.mubr.f32.gmra.mrb[0].mxu0 %v240
  %v433 = vpop.f32.mrb[0].mxu0
  %v434 = vadd.f32 0.0, %v433
  %v435 = vpop.f32.mrb[0].mxu0
  %v436 = vadd.f32 0.0, %v435
  %437 = vmatprep.mubr.f32.mxu0 %v244
  %438 = vmatmul.mubr.f32.gmra.mrb[0].mxu0 %v243
  %v439 = vpop.f32.mrb[0].mxu0
  %v440 = vadd.f32 0.0, %v439
  %v441 = vpop.f32.mrb[0].mxu0
  %v442 = vadd.f32 0.0, %v441
  %443 = vmatprep.mubr.f32.mxu0 %v247
  %444 = vmatmul.mubr.f32.gmra.mrb[0].mxu0 %v246
  %v445 = vpop.f32.mrb[0].mxu0
  %v446 = vadd.f32 0.0, %v445
  %v447 = vpop.f32.mrb[0].mxu0
  %v448 = vadd.f32 0.0, %v447
  %449 = vmatprep.mubr.f32.mxu0 %v250
  %450 = vmatmul.mubr.f32.gmra.mrb[0].mxu0 %v249
  %v451 = vpop.f32.mrb[0].mxu0
  %v452 = vadd.f32 0.0, %v451
  %v453 = vpop.f32.mrb[0].mxu0
  %v454 = vadd.f32 0.0, %v453
  %455 = vdwg.mxu0
  %456 = vmatprep.subr.mxu0 %v317
  %457 = vmatpush1.msra.mxu0 %v316
  %458 = vmatprep.subr.mxu0 0.0
  %459 = vmatpush1.msra.mxu0 0.0
  %460 = vmatprep.subr.mxu0 0.0
  %461 = vmatpush1.msra.mxu0 0.0
  %462 = vmatprep.subr.mxu0 0.0
  %463 = vmatpush1.msra.mxu0 0.0
  %464 = vmatprep.subr.mxu0 0.0
  %465 = vmatpush1.msra.mxu0 0.0
  %466 = vmatprep.subr.mxu0 0.0
  %467 = vmatpush1.msra.mxu0 0.0
  %468 = vmatprep.subr.mxu0 0.0
  %469 = vmatpush1.msra.mxu0 0.0
  %470 = vmatprep.subr.mxu0 0.0
  %471 = vmatpush1.msra.mxu0 0.0
  %472 = vmatprep.subr.mxu0 0.0
  %473 = vmatpush1.msra.mxu0 0.0
  %474 = vmatprep.subr.mxu0 0.0
  %475 = vmatpush1.msra.mxu0 0.0
  %476 = vmatprep.subr.mxu0 0.0
  %477 = vmatpush1.msra.mxu0 0.0
  %478 = vmatprep.subr.mxu0 0.0
  %479 = vmatpush1.msra.mxu0 0.0
  %480 = vmatprep.subr.mxu0 0.0
  %481 = vmatpush1.msra.mxu0 0.0
  %482 = vmatprep.subr.mxu0 0.0
  %483 = vmatpush1.msra.mxu0 0.0
  %484 = vmatprep.subr.mxu0 0.0
  %485 = vmatpush1.msra.mxu0 0.0
  %486 = vmatprep.subr.mxu0 0.0
  %487 = vmatpush1.msra.mxu0 0.0
  %488 = vmatprep.subr.mxu0 0.0
  %489 = vmatpush1.msra.mxu0 0.0
  %490 = vmatprep.subr.mxu0 0.0
  %491 = vmatpush1.msra.mxu0 0.0
  %492 = vmatprep.subr.mxu0 0.0
  %493 = vmatpush1.msra.mxu0 0.0
  %494 = vmatprep.subr.mxu0 0.0
  %495 = vmatpush1.msra.mxu0 0.0
  %496 = vmatprep.subr.mxu0 0.0
  %497 = vmatpush1.msra.mxu0 0.0
  %498 = vmatprep.subr.mxu0 0.0
  %499 = vmatpush1.msra.mxu0 0.0
  %500 = vmatprep.subr.mxu0 0.0
  %501 = vmatpush1.msra.mxu0 0.0
  %502 = vmatprep.subr.mxu0 0.0
  %503 = vmatpush1.msra.mxu0 0.0
  %504 = vmatprep.subr.mxu0 0.0
  %505 = vmatpush1.msra.mxu0 0.0
  %506 = vmatprep.subr.mxu0 0.0
  %507 = vmatpush1.msra.mxu0 0.0
  %508 = vmatprep.subr.mxu0 0.0
  %509 = vmatpush1.msra.mxu0 0.0
  %510 = vmatprep.subr.mxu0 0.0
  %511 = vmatpush1.msra.mxu0 0.0
  %512 = vmatprep.subr.mxu0 0.0
  %513 = vmatpush1.msra.mxu0 0.0
  %514 = vmatprep.subr.mxu0 0.0
  %515 = vmatpush1.msra.mxu0 0.0
  %516 = vmatprep.subr.mxu0 0.0
  %517 = vmatpush1.msra.mxu0 0.0
  %518 = vmatprep.subr.mxu0 0.0
  %519 = vmatpush1.msra.mxu0 0.0
  %520 = vmatprep.mubr.f32.mxu0 0.0
  %521 = vmatmul.mubr.f32.gmra.mrb[0].mxu0 %v320
  %v522 = vpop.f32.mrb[0].mxu0
  %v523 = vadd.f32 %v410, %v522
  %v524 = vpop.f32.mrb[0].mxu0
  %v525 = vadd.f32 %v412, %v524
  %526 = vmatprep.mubr.f32.mxu0 0.0
  %527 = vmatmul.mubr.f32.gmra.mrb[0].mxu0 %v323
  %v528 = vpop.f32.mrb[0].mxu0
  %v529 = vadd.f32 %v416, %v528
  %v530 = vpop.f32.mrb[0].mxu0
  %v531 = vadd.f32 %v418, %v530
  %532 = vmatprep.mubr.f32.mxu0 0.0
  %533 = vmatmul.mubr.f32.gmra.mrb[0].mxu0 %v326
  %v534 = vpop.f32.mrb[0].mxu0
  %v535 = vadd.f32 %v422, %v534
  %v536 = vpop.f32.mrb[0].mxu0
  %v537 = vadd.f32 %v424, %v536
  %538 = vmatprep.mubr.f32.mxu0 0.0
  %539 = vmatmul.mubr.f32.gmra.mrb[0].mxu0 %v329
  %v540 = vpop.f32.mrb[0].mxu0
  %v541 = vadd.f32 %v428, %v540
  %v542 = vpop.f32.mrb[0].mxu0
  %v543 = vadd.f32 %v430, %v542
  %544 = vmatprep.mubr.f32.mxu0 0.0
  %545 = vmatmul.mubr.f32.gmra.mrb[0].mxu0 %v332
  %v546 = vpop.f32.mrb[0].mxu0
  %v547 = vadd.f32 %v434, %v546
  %v548 = vpop.f32.mrb[0].mxu0
  %v549 = vadd.f32 %v436, %v548
  %550 = vmatprep.mubr.f32.mxu0 0.0
  %551 = vmatmul.mubr.f32.gmra.mrb[0].mxu0 %v335
  %v552 = vpop.f32.mrb[0].mxu0
  %v553 = vadd.f32 %v440, %v552
  %v554 = vpop.f32.mrb[0].mxu0
  %v555 = vadd.f32 %v442, %v554
  %556 = vmatprep.mubr.f32.mxu0 0.0
  %557 = vmatmul.mubr.f32.gmra.mrb[0].mxu0 %v338
  %v558 = vpop.f32.mrb[0].mxu0
  %v559 = vadd.f32 %v446, %v558
  %v560 = vpop.f32.mrb[0].mxu0
  %v561 = vadd.f32 %v448, %v560
  %562 = vmatprep.mubr.f32.mxu0 0.0
  %563 = vmatmul.mubr.f32.gmra.mrb[0].mxu0 %v341
  %v564 = vpop.f32.mrb[0].mxu0
  %v565 = vadd.f32 %v452, %v564
  %v566 = vpop.f32.mrb[0].mxu0
  %v567 = vadd.f32 %v454, %v566
  %568 = vdwg.mxu0
  %v569 = vmax.f32 %v523, 0.0
  %v570 = vmax.f32 %v525, 0.0
  %v571 = vmax.f32 %v529, 0.0
  %v572 = vmax.f32 %v531, 0.0
  %v573 = vmax.f32 %v535, 0.0
  %v574 = vmax.f32 %v537, 0.0
  %v575 = vmax.f32 %v541, 0.0
  %v576 = vmax.f32 %v543, 0.0
  %v577 = vmax.f32 %v547, 0.0
  %v578 = vmax.f32 %v549, 0.0
  %v579 = vmax.f32 %v553, 0.0
  %v580 = vmax.f32 %v555, 0.0
  %v581 = vmax.f32 %v559, 0.0
  %v582 = vmax.f32 %v561, 0.0
  %v583 = vmax.f32 %v565, 0.0
  %v584 = vmax.f32 %v567, 0.0
  %s585 = scalar_lea.vmem %s2, 256
  %v586 = vld [vmem:[%s585] sm:$0xff]
  %v587 = vld [vmem:[%s585 + $0x8] sm:$0xff]
  %v588 = vld [vmem:[%s585 + $0x10] sm:$0xff]
  %v589 = vld [vmem:[%s585 + $0x18] sm:$0xff]
  %v590 = vld [vmem:[%s585 + $0x20] sm:$0xff]
  %v591 = vld [vmem:[%s585 + $0x28] sm:$0xff]
  %v592 = vld [vmem:[%s585 + $0x30] sm:$0xff]
  %v593 = vld [vmem:[%s585 + $0x38] sm:$0xff]
  %v594 = vld [vmem:[%s585 + $0x40] sm:$0xff]
  %v595 = vld [vmem:[%s585 + $0x48] sm:$0xff]
  %v596 = vld [vmem:[%s585 + $0x50] sm:$0xff]
  %v597 = vld [vmem:[%s585 + $0x58] sm:$0xff]
  %v598 = vld [vmem:[%s585 + $0x60] sm:$0xff]
  %v599 = vld [vmem:[%s585 + $0x68] sm:$0xff]
  %v600 = vld [vmem:[%s585 + $0x70] sm:$0xff]
  %v601 = vld [vmem:[%s585 + $0x78] sm:$0xff]
  %v602 = vld [vmem:[%s585 + $0x80] sm:$0xff]
  %v603 = vld [vmem:[%s585 + $0x88] sm:$0xff]
  %v604 = vld [vmem:[%s585 + $0x90] sm:$0xff]
  %v605 = vld [vmem:[%s585 + $0x98] sm:$0xff]
  %v606 = vld [vmem:[%s585 + $0xa0] sm:$0xff]
  %v607 = vld [vmem:[%s585 + $0xa8] sm:$0xff]
  %v608 = vld [vmem:[%s585 + $0xb0] sm:$0xff]
  %v609 = vld [vmem:[%s585 + $0xb8] sm:$0xff]
  %v610 = vld [vmem:[%s585 + $0xc0] sm:$0xff]
  %v611 = vld [vmem:[%s585 + $0xc8] sm:$0xff]
  %v612 = vld [vmem:[%s585 + $0xd0] sm:$0xff]
  %v613 = vld [vmem:[%s585 + $0xd8] sm:$0xff]
  %v614 = vld [vmem:[%s585 + $0xe0] sm:$0xff]
  %v615 = vld [vmem:[%s585 + $0xe8] sm:$0xff]
  %v616 = vld [vmem:[%s585 + $0xf0] sm:$0xff]
  %v617 = vld [vmem:[%s585 + $0xf8] sm:$0xff]
  %s618 = scalar_lea.vmem %s2, 768
  %v619 = vld [vmem:[%s618] sm:$0xff]
  %v620 = vld [vmem:[%s618 + $0x8] sm:$0xff]
  %v621 = vld [vmem:[%s618 + $0x10] sm:$0xff]
  %v622 = vld [vmem:[%s618 + $0x18] sm:$0xff]
  %v623 = vld [vmem:[%s618 + $0x20] sm:$0xff]
  %v624 = vld [vmem:[%s618 + $0x28] sm:$0xff]
  %v625 = vld [vmem:[%s618 + $0x30] sm:$0xff]
  %v626 = vld [vmem:[%s618 + $0x38] sm:$0xff]
  %v627 = vld [vmem:[%s618 + $0x40] sm:$0xff]
  %v628 = vld [vmem:[%s618 + $0x48] sm:$0xff]
  %v629 = vld [vmem:[%s618 + $0x50] sm:$0xff]
  %v630 = vld [vmem:[%s618 + $0x58] sm:$0xff]
  %v631 = vld [vmem:[%s618 + $0x60] sm:$0xff]
  %v632 = vld [vmem:[%s618 + $0x68] sm:$0xff]
  %v633 = vld [vmem:[%s618 + $0x70] sm:$0xff]
  %v634 = vld [vmem:[%s618 + $0x78] sm:$0xff]
  %v635 = vld [vmem:[%s618 + $0x80] sm:$0xff]
  %v636 = vld [vmem:[%s618 + $0x88] sm:$0xff]
  %v637 = vld [vmem:[%s618 + $0x90] sm:$0xff]
  %v638 = vld [vmem:[%s618 + $0x98] sm:$0xff]
  %v639 = vld [vmem:[%s618 + $0xa0] sm:$0xff]
  %v640 = vld [vmem:[%s618 + $0xa8] sm:$0xff]
  %v641 = vld [vmem:[%s618 + $0xb0] sm:$0xff]
  %v642 = vld [vmem:[%s618 + $0xb8] sm:$0xff]
  %v643 = vld [vmem:[%s618 + $0xc0] sm:$0xff]
  %v644 = vld [vmem:[%s618 + $0xc8] sm:$0xff]
  %v645 = vld [vmem:[%s618 + $0xd0] sm:$0xff]
  %v646 = vld [vmem:[%s618 + $0xd8] sm:$0xff]
  %v647 = vld [vmem:[%s618 + $0xe0] sm:$0xff]
  %v648 = vld [vmem:[%s618 + $0xe8] sm:$0xff]
  %v649 = vld [vmem:[%s618 + $0xf0] sm:$0xff]
  %v650 = vld [vmem:[%s618 + $0xf8] sm:$0xff]
  %651 = vmatprep.subr.mxu0 0.0
  %652 = vmatpush1.msra.mxu0 %v619
  %653 = vmatprep.subr.mxu0 0.0
  %654 = vmatpush1.msra.mxu0 %v620
  %655 = vmatprep.subr.mxu0 0.0
  %656 = vmatpush1.msra.mxu0 %v621
  %657 = vmatprep.subr.mxu0 0.0
  %658 = vmatpush1.msra.mxu0 %v622
  %659 = vmatprep.subr.mxu0 0.0
  %660 = vmatpush1.msra.mxu0 %v623
  %661 = vmatprep.subr.mxu0 0.0
  %662 = vmatpush1.msra.mxu0 %v624
  %663 = vmatprep.subr.mxu0 0.0
  %664 = vmatpush1.msra.mxu0 %v625
  %665 = vmatprep.subr.mxu0 0.0
  %666 = vmatpush1.msra.mxu0 %v626
  %667 = vmatprep.subr.mxu0 0.0
  %668 = vmatpush1.msra.mxu0 %v627
  %669 = vmatprep.subr.mxu0 0.0
  %670 = vmatpush1.msra.mxu0 %v628
  %671 = vmatprep.subr.mxu0 0.0
  %672 = vmatpush1.msra.mxu0 %v629
  %673 = vmatprep.subr.mxu0 0.0
  %674 = vmatpush1.msra.mxu0 %v630
  %675 = vmatprep.subr.mxu0 0.0
  %676 = vmatpush1.msra.mxu0 %v631
  %677 = vmatprep.subr.mxu0 0.0
  %678 = vmatpush1.msra.mxu0 %v632
  %679 = vmatprep.subr.mxu0 0.0
  %680 = vmatpush1.msra.mxu0 %v633
  %681 = vmatprep.subr.mxu0 0.0
  %682 = vmatpush1.msra.mxu0 %v634
  %683 = vmatprep.subr.mxu0 0.0
  %684 = vmatpush1.msra.mxu0 %v635
  %685 = vmatprep.subr.mxu0 0.0
  %686 = vmatpush1.msra.mxu0 %v636
  %687 = vmatprep.subr.mxu0 0.0
  %688 = vmatpush1.msra.mxu0 %v637
  %689 = vmatprep.subr.mxu0 0.0
  %690 = vmatpush1.msra.mxu0 %v638
  %691 = vmatprep.subr.mxu0 0.0
  %692 = vmatpush1.msra.mxu0 %v639
  %693 = vmatprep.subr.mxu0 0.0
  %694 = vmatpush1.msra.mxu0 %v640
  %695 = vmatprep.subr.mxu0 0.0
  %696 = vmatpush1.msra.mxu0 %v641
  %697 = vmatprep.subr.mxu0 0.0
  %698 = vmatpush1.msra.mxu0 %v642
  %699 = vmatprep.subr.mxu0 0.0
  %700 = vmatpush1.msra.mxu0 %v643
  %701 = vmatprep.subr.mxu0 0.0
  %702 = vmatpush1.msra.mxu0 %v644
  %703 = vmatprep.subr.mxu0 0.0
  %704 = vmatpush1.msra.mxu0 %v645
  %705 = vmatprep.subr.mxu0 0.0
  %706 = vmatpush1.msra.mxu0 %v646
  %707 = vmatprep.subr.mxu0 0.0
  %708 = vmatpush1.msra.mxu0 %v647
  %709 = vmatprep.subr.mxu0 0.0
  %710 = vmatpush1.msra.mxu0 %v648
  %711 = vmatprep.subr.mxu0 0.0
  %712 = vmatpush1.msra.mxu0 %v649
  %713 = vmatprep.subr.mxu0 0.0
  %714 = vmatpush1.msra.mxu0 %v650
  %715 = vmatprep.mubr.f32.mxu0 %v570
  %716 = vmatmul.mubr.f32.gmra.mrb[0].mxu0 %v569
  %v717 = vpop.f32.mrb[0].mxu0
  %v718 = vadd.f32 0.0, %v717
  %v719 = vpop.f32.mrb[0].mxu0
  %720 = vmatprep.mubr.f32.mxu0 %v572
  %721 = vmatmul.mubr.f32.gmra.mrb[0].mxu0 %v571
  %v722 = vpop.f32.mrb[0].mxu0
  %v723 = vadd.f32 0.0, %v722
  %v724 = vpop.f32.mrb[0].mxu0
  %725 = vmatprep.mubr.f32.mxu0 %v574
  %726 = vmatmul.mubr.f32.gmra.mrb[0].mxu0 %v573
  %v727 = vpop.f32.mrb[0].mxu0
  %v728 = vadd.f32 0.0, %v727
  %v729 = vpop.f32.mrb[0].mxu0
  %730 = vmatprep.mubr.f32.mxu0 %v576
  %731 = vmatmul.mubr.f32.gmra.mrb[0].mxu0 %v575
  %v732 = vpop.f32.mrb[0].mxu0
  %v733 = vadd.f32 0.0, %v732
  %v734 = vpop.f32.mrb[0].mxu0
  %735 = vmatprep.mubr.f32.mxu0 %v578
  %736 = vmatmul.mubr.f32.gmra.mrb[0].mxu0 %v577
  %v737 = vpop.f32.mrb[0].mxu0
  %v738 = vadd.f32 0.0, %v737
  %v739 = vpop.f32.mrb[0].mxu0
  %740 = vmatprep.mubr.f32.mxu0 %v580
  %741 = vmatmul.mubr.f32.gmra.mrb[0].mxu0 %v579
  %v742 = vpop.f32.mrb[0].mxu0
  %v743 = vadd.f32 0.0, %v742
  %v744 = vpop.f32.mrb[0].mxu0
  %745 = vmatprep.mubr.f32.mxu0 %v582
  %746 = vmatmul.mubr.f32.gmra.mrb[0].mxu0 %v581
  %v747 = vpop.f32.mrb[0].mxu0
  %v748 = vadd.f32 0.0, %v747
  %v749 = vpop.f32.mrb[0].mxu0
  %750 = vmatprep.mubr.f32.mxu0 %v584
  %751 = vmatmul.mubr.f32.gmra.mrb[0].mxu0 %v583
  %v752 = vpop.f32.mrb[0].mxu0
  %v753 = vadd.f32 0.0, %v752
  %v754 = vpop.f32.mrb[0].mxu0
  %755 = vdwg.mxu0
  %vm756 = vcmask 523264
  %v758 = vsel %vm756, %v172, 0
  %v761 = vsel %vm756, %v173, 0
  %v764 = vsel %vm756, %v174, 0
  %v767 = vsel %vm756, %v175, 0
  %v770 = vsel %vm756, %v176, 0
  %v773 = vsel %vm756, %v177, 0
  %v776 = vsel %vm756, %v178, 0
  %v779 = vsel %vm756, %v179, 0
  %781 = vmatprep.subr.mxu0 0.0
  %782 = vmatpush1.msra.mxu0 %v718
  %783 = vmatprep.subr.mxu0 0.0
  %784 = vmatpush1.msra.mxu0 %v723
  %785 = vmatprep.subr.mxu0 0.0
  %786 = vmatpush1.msra.mxu0 %v728
  %787 = vmatprep.subr.mxu0 0.0
  %788 = vmatpush1.msra.mxu0 %v733
  %789 = vmatprep.subr.mxu0 0.0
  %790 = vmatpush1.msra.mxu0 %v738
  %791 = vmatprep.subr.mxu0 0.0
  %792 = vmatpush1.msra.mxu0 %v743
  %793 = vmatprep.subr.mxu0 0.0
  %794 = vmatpush1.msra.mxu0 %v748
  %795 = vmatprep.subr.mxu0 0.0
  %796 = vmatpush1.msra.mxu0 %v753
  %797 = vmatprep.subr.mxu0 0.0
  %798 = vmatpush1.msra.mxu0 0.0
  %799 = vmatprep.subr.mxu0 0.0
  %800 = vmatpush1.msra.mxu0 0.0
  %801 = vmatprep.subr.mxu0 0.0
  %802 = vmatpush1.msra.mxu0 0.0
  %803 = vmatprep.subr.mxu0 0.0
  %804 = vmatpush1.msra.mxu0 0.0
  %805 = vmatprep.subr.mxu0 0.0
  %806 = vmatpush1.msra.mxu0 0.0
  %807 = vmatprep.subr.mxu0 0.0
  %808 = vmatpush1.msra.mxu0 0.0
  %809 = vmatprep.subr.mxu0 0.0
  %810 = vmatpush1.msra.mxu0 0.0
  %811 = vmatprep.subr.mxu0 0.0
  %812 = vmatpush1.msra.mxu0 0.0
  %813 = vmatprep.subr.mxu0 0.0
  %814 = vmatpush1.msra.mxu0 0.0
  %815 = vmatprep.subr.mxu0 0.0
  %816 = vmatpush1.msra.mxu0 0.0
  %817 = vmatprep.subr.mxu0 0.0
  %818 = vmatpush1.msra.mxu0 0.0
  %819 = vmatprep.subr.mxu0 0.0
  %820 = vmatpush1.msra.mxu0 0.0
  %821 = vmatprep.subr.mxu0 0.0
  %822 = vmatpush1.msra.mxu0 0.0
  %823 = vmatprep.subr.mxu0 0.0
  %824 = vmatpush1.msra.mxu0 0.0
  %825 = vmatprep.subr.mxu0 0.0
  %826 = vmatpush1.msra.mxu0 0.0
  %827 = vmatprep.subr.mxu0 0.0
  %828 = vmatpush1.msra.mxu0 0.0
  %829 = vmatprep.subr.mxu0 0.0
  %830 = vmatpush1.msra.mxu0 0.0
  %831 = vmatprep.subr.mxu0 0.0
  %832 = vmatpush1.msra.mxu0 0.0
  %833 = vmatprep.subr.mxu0 0.0
  %834 = vmatpush1.msra.mxu0 0.0
  %835 = vmatprep.subr.mxu0 0.0
  %836 = vmatpush1.msra.mxu0 0.0
  %837 = vmatprep.subr.mxu0 0.0
  %838 = vmatpush1.msra.mxu0 0.0
  %839 = vmatprep.subr.mxu0 0.0
  %840 = vmatpush1.msra.mxu0 0.0
  %841 = vmatprep.subr.mxu0 0.0
  %842 = vmatpush1.msra.mxu0 0.0
  %843 = vmatprep.subr.mxu0 0.0
  %844 = vmatpush1.msra.mxu0 0.0
  %845 = vmatprep.mubr.f32.mxu0 0.0
  %846 = vmatmul.mubr.f32.gmra.mrb[0].mxu0 %v758
  %v847 = vpop.f32.mrb[0].mxu0
  %v848 = vadd.f32 0.0, %v847
  %v849 = vpop.f32.mrb[0].mxu0
  %850 = vmatprep.mubr.f32.mxu0 0.0
  %851 = vmatmul.mubr.f32.gmra.mrb[0].mxu0 %v761
  %v852 = vpop.f32.mrb[0].mxu0
  %v853 = vadd.f32 0.0, %v852
  %v854 = vpop.f32.mrb[0].mxu0
  %855 = vmatprep.mubr.f32.mxu0 0.0
  %856 = vmatmul.mubr.f32.gmra.mrb[0].mxu0 %v764
  %v857 = vpop.f32.mrb[0].mxu0
  %v858 = vadd.f32 0.0, %v857
  %v859 = vpop.f32.mrb[0].mxu0
  %860 = vmatprep.mubr.f32.mxu0 0.0
  %861 = vmatmul.mubr.f32.gmra.mrb[0].mxu0 %v767
  %v862 = vpop.f32.mrb[0].mxu0
  %v863 = vadd.f32 0.0, %v862
  %v864 = vpop.f32.mrb[0].mxu0
  %865 = vmatprep.mubr.f32.mxu0 0.0
  %866 = vmatmul.mubr.f32.gmra.mrb[0].mxu0 %v770
  %v867 = vpop.f32.mrb[0].mxu0
  %v868 = vadd.f32 0.0, %v867
  %v869 = vpop.f32.mrb[0].mxu0
  %870 = vmatprep.mubr.f32.mxu0 0.0
  %871 = vmatmul.mubr.f32.gmra.mrb[0].mxu0 %v773
  %v872 = vpop.f32.mrb[0].mxu0
  %v873 = vadd.f32 0.0, %v872
  %v874 = vpop.f32.mrb[0].mxu0
  %875 = vmatprep.mubr.f32.mxu0 0.0
  %876 = vmatmul.mubr.f32.gmra.mrb[0].mxu0 %v776
  %v877 = vpop.f32.mrb[0].mxu0
  %v878 = vadd.f32 0.0, %v877
  %v879 = vpop.f32.mrb[0].mxu0
  %880 = vmatprep.mubr.f32.mxu0 0.0
  %881 = vmatmul.mubr.f32.gmra.mrb[0].mxu0 %v779
  %v882 = vpop.f32.mrb[0].mxu0
  %v883 = vadd.f32 0.0, %v882
  %v884 = vpop.f32.mrb[0].mxu0
  %885 = vdwg.mxu0
  %886 = vmatprep.subr.mxu0 0.0
  %887 = vmatpush1.msra.mxu0 %v586
  %888 = vmatprep.subr.mxu0 0.0
  %889 = vmatpush1.msra.mxu0 %v587
  %890 = vmatprep.subr.mxu0 0.0
  %891 = vmatpush1.msra.mxu0 %v588
  %892 = vmatprep.subr.mxu0 0.0
  %893 = vmatpush1.msra.mxu0 %v589
  %894 = vmatprep.subr.mxu0 0.0
  %895 = vmatpush1.msra.mxu0 %v590
  %896 = vmatprep.subr.mxu0 0.0
  %897 = vmatpush1.msra.mxu0 %v591
  %898 = vmatprep.subr.mxu0 0.0
  %899 = vmatpush1.msra.mxu0 %v592
  %900 = vmatprep.subr.mxu0 0.0
  %901 = vmatpush1.msra.mxu0 %v593
  %902 = vmatprep.subr.mxu0 0.0
  %903 = vmatpush1.msra.mxu0 %v594
  %904 = vmatprep.subr.mxu0 0.0
  %905 = vmatpush1.msra.mxu0 %v595
  %906 = vmatprep.subr.mxu0 0.0
  %907 = vmatpush1.msra.mxu0 %v596
  %908 = vmatprep.subr.mxu0 0.0
  %909 = vmatpush1.msra.mxu0 %v597
  %910 = vmatprep.subr.mxu0 0.0
  %911 = vmatpush1.msra.mxu0 %v598
  %912 = vmatprep.subr.mxu0 0.0
  %913 = vmatpush1.msra.mxu0 %v599
  %914 = vmatprep.subr.mxu0 0.0
  %915 = vmatpush1.msra.mxu0 %v600
  %916 = vmatprep.subr.mxu0 0.0
  %917 = vmatpush1.msra.mxu0 %v601
  %918 = vmatprep.subr.mxu0 0.0
  %919 = vmatpush1.msra.mxu0 %v602
  %920 = vmatprep.subr.mxu0 0.0
  %921 = vmatpush1.msra.mxu0 %v603
  %922 = vmatprep.subr.mxu0 0.0
  %923 = vmatpush1.msra.mxu0 %v604
  %924 = vmatprep.subr.mxu0 0.0
  %925 = vmatpush1.msra.mxu0 %v605
  %926 = vmatprep.subr.mxu0 0.0
  %927 = vmatpush1.msra.mxu0 %v606
  %928 = vmatprep.subr.mxu0 0.0
  %929 = vmatpush1.msra.mxu0 %v607
  %930 = vmatprep.subr.mxu0 0.0
  %931 = vmatpush1.msra.mxu0 %v608
  %932 = vmatprep.subr.mxu0 0.0
  %933 = vmatpush1.msra.mxu0 %v609
  %934 = vmatprep.subr.mxu0 0.0
  %935 = vmatpush1.msra.mxu0 %v610
  %936 = vmatprep.subr.mxu0 0.0
  %937 = vmatpush1.msra.mxu0 %v611
  %938 = vmatprep.subr.mxu0 0.0
  %939 = vmatpush1.msra.mxu0 %v612
  %940 = vmatprep.subr.mxu0 0.0
  %941 = vmatpush1.msra.mxu0 %v613
  %942 = vmatprep.subr.mxu0 0.0
  %943 = vmatpush1.msra.mxu0 %v614
  %944 = vmatprep.subr.mxu0 0.0
  %945 = vmatpush1.msra.mxu0 %v615
  %946 = vmatprep.subr.mxu0 0.0
  %947 = vmatpush1.msra.mxu0 %v616
  %948 = vmatprep.subr.mxu0 0.0
  %949 = vmatpush1.msra.mxu0 %v617
  %950 = vmatprep.mubr.f32.mxu0 %v570
  %951 = vmatmul.mubr.f32.gmra.mrb[0].mxu0 %v569
  %v952 = vpop.f32.mrb[0].mxu0
  %v953 = vadd.f32 %v848, %v952
  %v954 = vpop.f32.mrb[0].mxu0
  %955 = vmatprep.mubr.f32.mxu0 %v572
  %956 = vmatmul.mubr.f32.gmra.mrb[0].mxu0 %v571
  %v957 = vpop.f32.mrb[0].mxu0
  %v958 = vadd.f32 %v853, %v957
  %v959 = vpop.f32.mrb[0].mxu0
  %960 = vmatprep.mubr.f32.mxu0 %v574
  %961 = vmatmul.mubr.f32.gmra.mrb[0].mxu0 %v573
  %v962 = vpop.f32.mrb[0].mxu0
  %v963 = vadd.f32 %v858, %v962
  %v964 = vpop.f32.mrb[0].mxu0
  %965 = vmatprep.mubr.f32.mxu0 %v576
  %966 = vmatmul.mubr.f32.gmra.mrb[0].mxu0 %v575
  %v967 = vpop.f32.mrb[0].mxu0
  %v968 = vadd.f32 %v863, %v967
  %v969 = vpop.f32.mrb[0].mxu0
  %970 = vmatprep.mubr.f32.mxu0 %v578
  %971 = vmatmul.mubr.f32.gmra.mrb[0].mxu0 %v577
  %v972 = vpop.f32.mrb[0].mxu0
  %v973 = vadd.f32 %v868, %v972
  %v974 = vpop.f32.mrb[0].mxu0
  %975 = vmatprep.mubr.f32.mxu0 %v580
  %976 = vmatmul.mubr.f32.gmra.mrb[0].mxu0 %v579
  %v977 = vpop.f32.mrb[0].mxu0
  %v978 = vadd.f32 %v873, %v977
  %v979 = vpop.f32.mrb[0].mxu0
  %980 = vmatprep.mubr.f32.mxu0 %v582
  %981 = vmatmul.mubr.f32.gmra.mrb[0].mxu0 %v581
  %v982 = vpop.f32.mrb[0].mxu0
  %v983 = vadd.f32 %v878, %v982
  %v984 = vpop.f32.mrb[0].mxu0
  %985 = vmatprep.mubr.f32.mxu0 %v584
  %986 = vmatmul.mubr.f32.gmra.mrb[0].mxu0 %v583
  %v987 = vpop.f32.mrb[0].mxu0
  %v988 = vadd.f32 %v883, %v987
  %v989 = vpop.f32.mrb[0].mxu0
  %990 = vdwg.mxu0
  %s991 = scalar_lea.vmem %s2, 512
  %v992 = vld [vmem:[%s991] sm:$0xff]
  %v993 = vld [vmem:[%s991 + $0x8] sm:$0xff]
  %v994 = vld [vmem:[%s991 + $0x10] sm:$0xff]
  %v995 = vld [vmem:[%s991 + $0x18] sm:$0xff]
  %v996 = vld [vmem:[%s991 + $0x20] sm:$0xff]
  %v997 = vld [vmem:[%s991 + $0x28] sm:$0xff]
  %v998 = vld [vmem:[%s991 + $0x30] sm:$0xff]
  %v999 = vld [vmem:[%s991 + $0x38] sm:$0xff]
  %v1000 = vld [vmem:[%s991 + $0x40] sm:$0xff]
  %v1001 = vld [vmem:[%s991 + $0x48] sm:$0xff]
  %v1002 = vld [vmem:[%s991 + $0x50] sm:$0xff]
  %v1003 = vld [vmem:[%s991 + $0x58] sm:$0xff]
  %v1004 = vld [vmem:[%s991 + $0x60] sm:$0xff]
  %v1005 = vld [vmem:[%s991 + $0x68] sm:$0xff]
  %v1006 = vld [vmem:[%s991 + $0x70] sm:$0xff]
  %v1007 = vld [vmem:[%s991 + $0x78] sm:$0xff]
  %v1008 = vld [vmem:[%s991 + $0x80] sm:$0xff]
  %v1009 = vld [vmem:[%s991 + $0x88] sm:$0xff]
  %v1010 = vld [vmem:[%s991 + $0x90] sm:$0xff]
  %v1011 = vld [vmem:[%s991 + $0x98] sm:$0xff]
  %v1012 = vld [vmem:[%s991 + $0xa0] sm:$0xff]
  %v1013 = vld [vmem:[%s991 + $0xa8] sm:$0xff]
  %v1014 = vld [vmem:[%s991 + $0xb0] sm:$0xff]
  %v1015 = vld [vmem:[%s991 + $0xb8] sm:$0xff]
  %v1016 = vld [vmem:[%s991 + $0xc0] sm:$0xff]
  %v1017 = vld [vmem:[%s991 + $0xc8] sm:$0xff]
  %v1018 = vld [vmem:[%s991 + $0xd0] sm:$0xff]
  %v1019 = vld [vmem:[%s991 + $0xd8] sm:$0xff]
  %v1020 = vld [vmem:[%s991 + $0xe0] sm:$0xff]
  %v1021 = vld [vmem:[%s991 + $0xe8] sm:$0xff]
  %v1022 = vld [vmem:[%s991 + $0xf0] sm:$0xff]
  %v1023 = vld [vmem:[%s991 + $0xf8] sm:$0xff]
  %v1024 = vld [vmem:[%s2] sm:$0xff]
  %v1025 = vld [vmem:[%s2 + $0x8] sm:$0xff]
  %v1026 = vld [vmem:[%s2 + $0x10] sm:$0xff]
  %v1027 = vld [vmem:[%s2 + $0x18] sm:$0xff]
  %v1028 = vld [vmem:[%s2 + $0x20] sm:$0xff]
  %v1029 = vld [vmem:[%s2 + $0x28] sm:$0xff]
  %v1030 = vld [vmem:[%s2 + $0x30] sm:$0xff]
  %v1031 = vld [vmem:[%s2 + $0x38] sm:$0xff]
  %v1032 = vld [vmem:[%s2 + $0x40] sm:$0xff]
  %v1033 = vld [vmem:[%s2 + $0x48] sm:$0xff]
  %v1034 = vld [vmem:[%s2 + $0x50] sm:$0xff]
  %v1035 = vld [vmem:[%s2 + $0x58] sm:$0xff]
  %v1036 = vld [vmem:[%s2 + $0x60] sm:$0xff]
  %v1037 = vld [vmem:[%s2 + $0x68] sm:$0xff]
  %v1038 = vld [vmem:[%s2 + $0x70] sm:$0xff]
  %v1039 = vld [vmem:[%s2 + $0x78] sm:$0xff]
  %v1040 = vld [vmem:[%s2 + $0x80] sm:$0xff]
  %v1041 = vld [vmem:[%s2 + $0x88] sm:$0xff]
  %v1042 = vld [vmem:[%s2 + $0x90] sm:$0xff]
  %v1043 = vld [vmem:[%s2 + $0x98] sm:$0xff]
  %v1044 = vld [vmem:[%s2 + $0xa0] sm:$0xff]
  %v1045 = vld [vmem:[%s2 + $0xa8] sm:$0xff]
  %v1046 = vld [vmem:[%s2 + $0xb0] sm:$0xff]
  %v1047 = vld [vmem:[%s2 + $0xb8] sm:$0xff]
  %v1048 = vld [vmem:[%s2 + $0xc0] sm:$0xff]
  %v1049 = vld [vmem:[%s2 + $0xc8] sm:$0xff]
  %v1050 = vld [vmem:[%s2 + $0xd0] sm:$0xff]
  %v1051 = vld [vmem:[%s2 + $0xd8] sm:$0xff]
  %v1052 = vld [vmem:[%s2 + $0xe0] sm:$0xff]
  %v1053 = vld [vmem:[%s2 + $0xe8] sm:$0xff]
  %v1054 = vld [vmem:[%s2 + $0xf0] sm:$0xff]
  %v1055 = vld [vmem:[%s2 + $0xf8] sm:$0xff]
  %1056 = vmatprep.subr.mxu0 0.0
  %1057 = vmatpush1.msra.mxu0 %v1024
  %1058 = vmatprep.subr.mxu0 0.0
  %1059 = vmatpush1.msra.mxu0 %v1025
  %1060 = vmatprep.subr.mxu0 0.0
  %1061 = vmatpush1.msra.mxu0 %v1026
  %1062 = vmatprep.subr.mxu0 0.0
  %1063 = vmatpush1.msra.mxu0 %v1027
  %1064 = vmatprep.subr.mxu0 0.0
  %1065 = vmatpush1.msra.mxu0 %v1028
  %1066 = vmatprep.subr.mxu0 0.0
  %1067 = vmatpush1.msra.mxu0 %v1029
  %1068 = vmatprep.subr.mxu0 0.0
  %1069 = vmatpush1.msra.mxu0 %v1030
  %1070 = vmatprep.subr.mxu0 0.0
  %1071 = vmatpush1.msra.mxu0 %v1031
  %1072 = vmatprep.subr.mxu0 0.0
  %1073 = vmatpush1.msra.mxu0 %v1032
  %1074 = vmatprep.subr.mxu0 0.0
  %1075 = vmatpush1.msra.mxu0 %v1033
  %1076 = vmatprep.subr.mxu0 0.0
  %1077 = vmatpush1.msra.mxu0 %v1034
  %1078 = vmatprep.subr.mxu0 0.0
  %1079 = vmatpush1.msra.mxu0 %v1035
  %1080 = vmatprep.subr.mxu0 0.0
  %1081 = vmatpush1.msra.mxu0 %v1036
  %1082 = vmatprep.subr.mxu0 0.0
  %1083 = vmatpush1.msra.mxu0 %v1037
  %1084 = vmatprep.subr.mxu0 0.0
  %1085 = vmatpush1.msra.mxu0 %v1038
  %1086 = vmatprep.subr.mxu0 0.0
  %1087 = vmatpush1.msra.mxu0 %v1039
  %1088 = vmatprep.subr.mxu0 0.0
  %1089 = vmatpush1.msra.mxu0 %v1040
  %1090 = vmatprep.subr.mxu0 0.0
  %1091 = vmatpush1.msra.mxu0 %v1041
  %1092 = vmatprep.subr.mxu0 0.0
  %1093 = vmatpush1.msra.mxu0 %v1042
  %1094 = vmatprep.subr.mxu0 0.0
  %1095 = vmatpush1.msra.mxu0 %v1043
  %1096 = vmatprep.subr.mxu0 0.0
  %1097 = vmatpush1.msra.mxu0 %v1044
  %1098 = vmatprep.subr.mxu0 0.0
  %1099 = vmatpush1.msra.mxu0 %v1045
  %1100 = vmatprep.subr.mxu0 0.0
  %1101 = vmatpush1.msra.mxu0 %v1046
  %1102 = vmatprep.subr.mxu0 0.0
  %1103 = vmatpush1.msra.mxu0 %v1047
  %1104 = vmatprep.subr.mxu0 0.0
  %1105 = vmatpush1.msra.mxu0 %v1048
  %1106 = vmatprep.subr.mxu0 0.0
  %1107 = vmatpush1.msra.mxu0 %v1049
  %1108 = vmatprep.subr.mxu0 0.0
  %1109 = vmatpush1.msra.mxu0 %v1050
  %1110 = vmatprep.subr.mxu0 0.0
  %1111 = vmatpush1.msra.mxu0 %v1051
  %1112 = vmatprep.subr.mxu0 0.0
  %1113 = vmatpush1.msra.mxu0 %v1052
  %1114 = vmatprep.subr.mxu0 0.0
  %1115 = vmatpush1.msra.mxu0 %v1053
  %1116 = vmatprep.subr.mxu0 0.0
  %1117 = vmatpush1.msra.mxu0 %v1054
  %1118 = vmatprep.subr.mxu0 0.0
  %1119 = vmatpush1.msra.mxu0 %v1055
  %1120 = vmatprep.mubr.f32.mxu0 %v570
  %1121 = vmatmul.mubr.f32.gmra.mrb[0].mxu0 %v569
  %v1122 = vpop.f32.mrb[0].mxu0
  %v1123 = vadd.f32 0.0, %v1122
  %v1124 = vpop.f32.mrb[0].mxu0
  %1125 = vmatprep.mubr.f32.mxu0 %v572
  %1126 = vmatmul.mubr.f32.gmra.mrb[0].mxu0 %v571
  %v1127 = vpop.f32.mrb[0].mxu0
  %v1128 = vadd.f32 0.0, %v1127
  %v1129 = vpop.f32.mrb[0].mxu0
  %1130 = vmatprep.mubr.f32.mxu0 %v574
  %1131 = vmatmul.mubr.f32.gmra.mrb[0].mxu0 %v573
  %v1132 = vpop.f32.mrb[0].mxu0
  %v1133 = vadd.f32 0.0, %v1132
  %v1134 = vpop.f32.mrb[0].mxu0
  %1135 = vmatprep.mubr.f32.mxu0 %v576
  %1136 = vmatmul.mubr.f32.gmra.mrb[0].mxu0 %v575
  %v1137 = vpop.f32.mrb[0].mxu0
  %v1138 = vadd.f32 0.0, %v1137
  %v1139 = vpop.f32.mrb[0].mxu0
  %1140 = vmatprep.mubr.f32.mxu0 %v578
  %1141 = vmatmul.mubr.f32.gmra.mrb[0].mxu0 %v577
  %v1142 = vpop.f32.mrb[0].mxu0
  %v1143 = vadd.f32 0.0, %v1142
  %v1144 = vpop.f32.mrb[0].mxu0
  %1145 = vmatprep.mubr.f32.mxu0 %v580
  %1146 = vmatmul.mubr.f32.gmra.mrb[0].mxu0 %v579
  %v1147 = vpop.f32.mrb[0].mxu0
  %v1148 = vadd.f32 0.0, %v1147
  %v1149 = vpop.f32.mrb[0].mxu0
  %1150 = vmatprep.mubr.f32.mxu0 %v582
  %1151 = vmatmul.mubr.f32.gmra.mrb[0].mxu0 %v581
  %v1152 = vpop.f32.mrb[0].mxu0
  %v1153 = vadd.f32 0.0, %v1152
  %v1154 = vpop.f32.mrb[0].mxu0
  %1155 = vmatprep.mubr.f32.mxu0 %v584
  %1156 = vmatmul.mubr.f32.gmra.mrb[0].mxu0 %v583
  %v1157 = vpop.f32.mrb[0].mxu0
  %v1158 = vadd.f32 0.0, %v1157
  %v1159 = vpop.f32.mrb[0].mxu0
  %1160 = vdwg.mxu0
  %v1162 = vsel %vm756, %v220, 0
  %v1165 = vsel %vm756, %v221, 0
  %v1168 = vsel %vm756, %v222, 0
  %v1171 = vsel %vm756, %v223, 0
  %v1174 = vsel %vm756, %v224, 0
  %v1177 = vsel %vm756, %v225, 0
  %v1180 = vsel %vm756, %v226, 0
  %v1183 = vsel %vm756, %v227, 0
  %1185 = vmatprep.subr.mxu0 0.0
  %1186 = vmatpush1.msra.mxu0 %v1123
  %1187 = vmatprep.subr.mxu0 0.0
  %1188 = vmatpush1.msra.mxu0 %v1128
  %1189 = vmatprep.subr.mxu0 0.0
  %1190 = vmatpush1.msra.mxu0 %v1133
  %1191 = vmatprep.subr.mxu0 0.0
  %1192 = vmatpush1.msra.mxu0 %v1138
  %1193 = vmatprep.subr.mxu0 0.0
  %1194 = vmatpush1.msra.mxu0 %v1143
  %1195 = vmatprep.subr.mxu0 0.0
  %1196 = vmatpush1.msra.mxu0 %v1148
  %1197 = vmatprep.subr.mxu0 0.0
  %1198 = vmatpush1.msra.mxu0 %v1153
  %1199 = vmatprep.subr.mxu0 0.0
  %1200 = vmatpush1.msra.mxu0 %v1158
  %1201 = vmatprep.subr.mxu0 0.0
  %1202 = vmatpush1.msra.mxu0 0.0
  %1203 = vmatprep.subr.mxu0 0.0
  %1204 = vmatpush1.msra.mxu0 0.0
  %1205 = vmatprep.subr.mxu0 0.0
  %1206 = vmatpush1.msra.mxu0 0.0
  %1207 = vmatprep.subr.mxu0 0.0
  %1208 = vmatpush1.msra.mxu0 0.0
  %1209 = vmatprep.subr.mxu0 0.0
  %1210 = vmatpush1.msra.mxu0 0.0
  %1211 = vmatprep.subr.mxu0 0.0
  %1212 = vmatpush1.msra.mxu0 0.0
  %1213 = vmatprep.subr.mxu0 0.0
  %1214 = vmatpush1.msra.mxu0 0.0
  %1215 = vmatprep.subr.mxu0 0.0
  %1216 = vmatpush1.msra.mxu0 0.0
  %1217 = vmatprep.subr.mxu0 0.0
  %1218 = vmatpush1.msra.mxu0 0.0
  %1219 = vmatprep.subr.mxu0 0.0
  %1220 = vmatpush1.msra.mxu0 0.0
  %1221 = vmatprep.subr.mxu0 0.0
  %1222 = vmatpush1.msra.mxu0 0.0
  %1223 = vmatprep.subr.mxu0 0.0
  %1224 = vmatpush1.msra.mxu0 0.0
  %1225 = vmatprep.subr.mxu0 0.0
  %1226 = vmatpush1.msra.mxu0 0.0
  %1227 = vmatprep.subr.mxu0 0.0
  %1228 = vmatpush1.msra.mxu0 0.0
  %1229 = vmatprep.subr.mxu0 0.0
  %1230 = vmatpush1.msra.mxu0 0.0
  %1231 = vmatprep.subr.mxu0 0.0
  %1232 = vmatpush1.msra.mxu0 0.0
  %1233 = vmatprep.subr.mxu0 0.0
  %1234 = vmatpush1.msra.mxu0 0.0
  %1235 = vmatprep.subr.mxu0 0.0
  %1236 = vmatpush1.msra.mxu0 0.0
  %1237 = vmatprep.subr.mxu0 0.0
  %1238 = vmatpush1.msra.mxu0 0.0
  %1239 = vmatprep.subr.mxu0 0.0
  %1240 = vmatpush1.msra.mxu0 0.0
  %1241 = vmatprep.subr.mxu0 0.0
  %1242 = vmatpush1.msra.mxu0 0.0
  %1243 = vmatprep.subr.mxu0 0.0
  %1244 = vmatpush1.msra.mxu0 0.0
  %1245 = vmatprep.subr.mxu0 0.0
  %1246 = vmatpush1.msra.mxu0 0.0
  %1247 = vmatprep.subr.mxu0 0.0
  %1248 = vmatpush1.msra.mxu0 0.0
  %1249 = vmatprep.mubr.f32.mxu0 0.0
  %1250 = vmatmul.mubr.f32.gmra.mrb[0].mxu0 %v1162
  %v1251 = vpop.f32.mrb[0].mxu0
  %v1252 = vadd.f32 0.0, %v1251
  %v1253 = vpop.f32.mrb[0].mxu0
  %1254 = vmatprep.mubr.f32.mxu0 0.0
  %1255 = vmatmul.mubr.f32.gmra.mrb[0].mxu0 %v1165
  %v1256 = vpop.f32.mrb[0].mxu0
  %v1257 = vadd.f32 0.0, %v1256
  %v1258 = vpop.f32.mrb[0].mxu0
  %1259 = vmatprep.mubr.f32.mxu0 0.0
  %1260 = vmatmul.mubr.f32.gmra.mrb[0].mxu0 %v1168
  %v1261 = vpop.f32.mrb[0].mxu0
  %v1262 = vadd.f32 0.0, %v1261
  %v1263 = vpop.f32.mrb[0].mxu0
  %1264 = vmatprep.mubr.f32.mxu0 0.0
  %1265 = vmatmul.mubr.f32.gmra.mrb[0].mxu0 %v1171
  %v1266 = vpop.f32.mrb[0].mxu0
  %v1267 = vadd.f32 0.0, %v1266
  %v1268 = vpop.f32.mrb[0].mxu0
  %1269 = vmatprep.mubr.f32.mxu0 0.0
  %1270 = vmatmul.mubr.f32.gmra.mrb[0].mxu0 %v1174
  %v1271 = vpop.f32.mrb[0].mxu0
  %v1272 = vadd.f32 0.0, %v1271
  %v1273 = vpop.f32.mrb[0].mxu0
  %1274 = vmatprep.mubr.f32.mxu0 0.0
  %1275 = vmatmul.mubr.f32.gmra.mrb[0].mxu0 %v1177
  %v1276 = vpop.f32.mrb[0].mxu0
  %v1277 = vadd.f32 0.0, %v1276
  %v1278 = vpop.f32.mrb[0].mxu0
  %1279 = vmatprep.mubr.f32.mxu0 0.0
  %1280 = vmatmul.mubr.f32.gmra.mrb[0].mxu0 %v1180
  %v1281 = vpop.f32.mrb[0].mxu0
  %v1282 = vadd.f32 0.0, %v1281
  %v1283 = vpop.f32.mrb[0].mxu0
  %1284 = vmatprep.mubr.f32.mxu0 0.0
  %1285 = vmatmul.mubr.f32.gmra.mrb[0].mxu0 %v1183
  %v1286 = vpop.f32.mrb[0].mxu0
  %v1287 = vadd.f32 0.0, %v1286
  %v1288 = vpop.f32.mrb[0].mxu0
  %1289 = vdwg.mxu0
  %1290 = vmatprep.subr.mxu0 0.0
  %1291 = vmatpush1.msra.mxu0 %v992
  %1292 = vmatprep.subr.mxu0 0.0
  %1293 = vmatpush1.msra.mxu0 %v993
  %1294 = vmatprep.subr.mxu0 0.0
  %1295 = vmatpush1.msra.mxu0 %v994
  %1296 = vmatprep.subr.mxu0 0.0
  %1297 = vmatpush1.msra.mxu0 %v995
  %1298 = vmatprep.subr.mxu0 0.0
  %1299 = vmatpush1.msra.mxu0 %v996
  %1300 = vmatprep.subr.mxu0 0.0
  %1301 = vmatpush1.msra.mxu0 %v997
  %1302 = vmatprep.subr.mxu0 0.0
  %1303 = vmatpush1.msra.mxu0 %v998
  %1304 = vmatprep.subr.mxu0 0.0
  %1305 = vmatpush1.msra.mxu0 %v999
  %1306 = vmatprep.subr.mxu0 0.0
  %1307 = vmatpush1.msra.mxu0 %v1000
  %1308 = vmatprep.subr.mxu0 0.0
  %1309 = vmatpush1.msra.mxu0 %v1001
  %1310 = vmatprep.subr.mxu0 0.0
  %1311 = vmatpush1.msra.mxu0 %v1002
  %1312 = vmatprep.subr.mxu0 0.0
  %1313 = vmatpush1.msra.mxu0 %v1003
  %1314 = vmatprep.subr.mxu0 0.0
  %1315 = vmatpush1.msra.mxu0 %v1004
  %1316 = vmatprep.subr.mxu0 0.0
  %1317 = vmatpush1.msra.mxu0 %v1005
  %1318 = vmatprep.subr.mxu0 0.0
  %1319 = vmatpush1.msra.mxu0 %v1006
  %1320 = vmatprep.subr.mxu0 0.0
  %1321 = vmatpush1.msra.mxu0 %v1007
  %1322 = vmatprep.subr.mxu0 0.0
  %1323 = vmatpush1.msra.mxu0 %v1008
  %1324 = vmatprep.subr.mxu0 0.0
  %1325 = vmatpush1.msra.mxu0 %v1009
  %1326 = vmatprep.subr.mxu0 0.0
  %1327 = vmatpush1.msra.mxu0 %v1010
  %1328 = vmatprep.subr.mxu0 0.0
  %1329 = vmatpush1.msra.mxu0 %v1011
  %1330 = vmatprep.subr.mxu0 0.0
  %1331 = vmatpush1.msra.mxu0 %v1012
  %1332 = vmatprep.subr.mxu0 0.0
  %1333 = vmatpush1.msra.mxu0 %v1013
  %1334 = vmatprep.subr.mxu0 0.0
  %1335 = vmatpush1.msra.mxu0 %v1014
  %1336 = vmatprep.subr.mxu0 0.0
  %1337 = vmatpush1.msra.mxu0 %v1015
  %1338 = vmatprep.subr.mxu0 0.0
  %1339 = vmatpush1.msra.mxu0 %v1016
  %1340 = vmatprep.subr.mxu0 0.0
  %1341 = vmatpush1.msra.mxu0 %v1017
  %1342 = vmatprep.subr.mxu0 0.0
  %1343 = vmatpush1.msra.mxu0 %v1018
  %1344 = vmatprep.subr.mxu0 0.0
  %1345 = vmatpush1.msra.mxu0 %v1019
  %1346 = vmatprep.subr.mxu0 0.0
  %1347 = vmatpush1.msra.mxu0 %v1020
  %1348 = vmatprep.subr.mxu0 0.0
  %1349 = vmatpush1.msra.mxu0 %v1021
  %1350 = vmatprep.subr.mxu0 0.0
  %1351 = vmatpush1.msra.mxu0 %v1022
  %1352 = vmatprep.subr.mxu0 0.0
  %1353 = vmatpush1.msra.mxu0 %v1023
  %1354 = vmatprep.mubr.f32.mxu0 %v570
  %1355 = vmatmul.mubr.f32.gmra.mrb[0].mxu0 %v569
  %v1356 = vpop.f32.mrb[0].mxu0
  %v1357 = vadd.f32 %v1252, %v1356
  %v1358 = vpop.f32.mrb[0].mxu0
  %1359 = vmatprep.mubr.f32.mxu0 %v572
  %1360 = vmatmul.mubr.f32.gmra.mrb[0].mxu0 %v571
  %v1361 = vpop.f32.mrb[0].mxu0
  %v1362 = vadd.f32 %v1257, %v1361
  %v1363 = vpop.f32.mrb[0].mxu0
  %1364 = vmatprep.mubr.f32.mxu0 %v574
  %1365 = vmatmul.mubr.f32.gmra.mrb[0].mxu0 %v573
  %v1366 = vpop.f32.mrb[0].mxu0
  %v1367 = vadd.f32 %v1262, %v1366
  %v1368 = vpop.f32.mrb[0].mxu0
  %1369 = vmatprep.mubr.f32.mxu0 %v576
  %1370 = vmatmul.mubr.f32.gmra.mrb[0].mxu0 %v575
  %v1371 = vpop.f32.mrb[0].mxu0
  %v1372 = vadd.f32 %v1267, %v1371
  %v1373 = vpop.f32.mrb[0].mxu0
  %1374 = vmatprep.mubr.f32.mxu0 %v578
  %1375 = vmatmul.mubr.f32.gmra.mrb[0].mxu0 %v577
  %v1376 = vpop.f32.mrb[0].mxu0
  %v1377 = vadd.f32 %v1272, %v1376
  %v1378 = vpop.f32.mrb[0].mxu0
  %1379 = vmatprep.mubr.f32.mxu0 %v580
  %1380 = vmatmul.mubr.f32.gmra.mrb[0].mxu0 %v579
  %v1381 = vpop.f32.mrb[0].mxu0
  %v1382 = vadd.f32 %v1277, %v1381
  %v1383 = vpop.f32.mrb[0].mxu0
  %1384 = vmatprep.mubr.f32.mxu0 %v582
  %1385 = vmatmul.mubr.f32.gmra.mrb[0].mxu0 %v581
  %v1386 = vpop.f32.mrb[0].mxu0
  %v1387 = vadd.f32 %v1282, %v1386
  %v1388 = vpop.f32.mrb[0].mxu0
  %1389 = vmatprep.mubr.f32.mxu0 %v584
  %1390 = vmatmul.mubr.f32.gmra.mrb[0].mxu0 %v583
  %v1391 = vpop.f32.mrb[0].mxu0
  %v1392 = vadd.f32 %v1287, %v1391
  %v1393 = vpop.f32.mrb[0].mxu0
  %1394 = vdwg.mxu0
  %v1395 = vld [vmem:[%s3] sm:$0x1]
  %v1397 = vlaneseq
  %v1398 = vshrl.u32 %v1397, 7
  %v1399 = vsub.s32 0, %v1398
  %v1400 = vrot.slane %v1395, %v1399
  %v1402 = vmul.f32 %v953, %v1400
  %v1403 = vmul.f32 %v958, %v1400
  %v1404 = vmul.f32 %v963, %v1400
  %v1405 = vmul.f32 %v968, %v1400
  %v1406 = vmul.f32 %v973, %v1400
  %v1407 = vmul.f32 %v978, %v1400
  %v1408 = vmul.f32 %v983, %v1400
  %v1409 = vmul.f32 %v988, %v1400
  %v1410 = vld [vmem:[%s4] sm:$0x1]
  %v1412 = vlaneseq
  %v1413 = vshrl.u32 %v1412, 7
  %v1414 = vsub.s32 0, %v1413
  %v1415 = vrot.slane %v1410, %v1414
  %v1417 = vadd.f32 %v1402, %v1415
  %v1418 = vadd.f32 %v1403, %v1415
  %v1419 = vadd.f32 %v1404, %v1415
  %v1420 = vadd.f32 %v1405, %v1415
  %v1421 = vadd.f32 %v1406, %v1415
  %v1422 = vadd.f32 %v1407, %v1415
  %v1423 = vadd.f32 %v1408, %v1415
  %v1424 = vadd.f32 %v1409, %v1415
  %v1425 = vmax.f32 %v1417, 0.0
  %v1426 = vmax.f32 %v1418, 0.0
  %v1427 = vmax.f32 %v1419, 0.0
  %v1428 = vmax.f32 %v1420, 0.0
  %v1429 = vmax.f32 %v1421, 0.0
  %v1430 = vmax.f32 %v1422, 0.0
  %v1431 = vmax.f32 %v1423, 0.0
  %v1432 = vmax.f32 %v1424, 0.0
  %v1433 = vmul.f32 %v1357, %v1400
  %v1434 = vmul.f32 %v1362, %v1400
  %v1435 = vmul.f32 %v1367, %v1400
  %v1436 = vmul.f32 %v1372, %v1400
  %v1437 = vmul.f32 %v1377, %v1400
  %v1438 = vmul.f32 %v1382, %v1400
  %v1439 = vmul.f32 %v1387, %v1400
  %v1440 = vmul.f32 %v1392, %v1400
  %v1441 = vadd.f32 %v1433, %v1415
  %v1442 = vadd.f32 %v1434, %v1415
  %v1443 = vadd.f32 %v1435, %v1415
  %v1444 = vadd.f32 %v1436, %v1415
  %v1445 = vadd.f32 %v1437, %v1415
  %v1446 = vadd.f32 %v1438, %v1415
  %v1447 = vadd.f32 %v1439, %v1415
  %v1448 = vadd.f32 %v1440, %v1415
  %v1449 = vmax.f32 %v1441, 0.0
  %v1450 = vmax.f32 %v1442, 0.0
  %v1451 = vmax.f32 %v1443, 0.0
  %v1452 = vmax.f32 %v1444, 0.0
  %v1453 = vmax.f32 %v1445, 0.0
  %v1454 = vmax.f32 %v1446, 0.0
  %v1455 = vmax.f32 %v1447, 0.0
  %v1456 = vmax.f32 %v1448, 0.0
  %s1457 = scalar_lea.vmem %s5, 128
  %v1458 = vld [vmem:[%s1457] sm:$0xff]
  %v1459 = vld [vmem:[%s1457 + $0x8] sm:$0xff]
  %v1460 = vld [vmem:[%s1457 + $0x10] sm:$0xff]
  %v1461 = vld [vmem:[%s1457 + $0x18] sm:$0xff]
  %v1462 = vld [vmem:[%s1457 + $0x20] sm:$0xff]
  %v1463 = vld [vmem:[%s1457 + $0x28] sm:$0xff]
  %v1464 = vld [vmem:[%s1457 + $0x30] sm:$0xff]
  %v1465 = vld [vmem:[%s1457 + $0x38] sm:$0xff]
  %v1466 = vld [vmem:[%s1457 + $0x40] sm:$0xff]
  %v1467 = vld [vmem:[%s1457 + $0x48] sm:$0xff]
  %v1468 = vld [vmem:[%s1457 + $0x50] sm:$0xff]
  %v1469 = vld [vmem:[%s1457 + $0x58] sm:$0xff]
  %v1470 = vld [vmem:[%s1457 + $0x60] sm:$0xff]
  %v1471 = vld [vmem:[%s1457 + $0x68] sm:$0xff]
  %v1472 = vld [vmem:[%s1457 + $0x70] sm:$0xff]
  %v1473 = vld [vmem:[%s1457 + $0x78] sm:$0xff]
  %s1474 = scalar_lea.vmem %s5, 384
  %v1475 = vld [vmem:[%s1474] sm:$0xff]
  %v1476 = vld [vmem:[%s1474 + $0x8] sm:$0xff]
  %v1477 = vld [vmem:[%s1474 + $0x10] sm:$0xff]
  %v1478 = vld [vmem:[%s1474 + $0x18] sm:$0xff]
  %v1479 = vld [vmem:[%s1474 + $0x20] sm:$0xff]
  %v1480 = vld [vmem:[%s1474 + $0x28] sm:$0xff]
  %v1481 = vld [vmem:[%s1474 + $0x30] sm:$0xff]
  %v1482 = vld [vmem:[%s1474 + $0x38] sm:$0xff]
  %v1483 = vld [vmem:[%s1474 + $0x40] sm:$0xff]
  %v1484 = vld [vmem:[%s1474 + $0x48] sm:$0xff]
  %v1485 = vld [vmem:[%s1474 + $0x50] sm:$0xff]
  %v1486 = vld [vmem:[%s1474 + $0x58] sm:$0xff]
  %v1487 = vld [vmem:[%s1474 + $0x60] sm:$0xff]
  %v1488 = vld [vmem:[%s1474 + $0x68] sm:$0xff]
  %v1489 = vld [vmem:[%s1474 + $0x70] sm:$0xff]
  %v1490 = vld [vmem:[%s1474 + $0x78] sm:$0xff]
  %1491 = vmatprep.subr.mxu0 0.0
  %1492 = vmatpush1.msra.mxu0 %v1475
  %1493 = vmatprep.subr.mxu0 0.0
  %1494 = vmatpush1.msra.mxu0 %v1476
  %1495 = vmatprep.subr.mxu0 0.0
  %1496 = vmatpush1.msra.mxu0 %v1477
  %1497 = vmatprep.subr.mxu0 0.0
  %1498 = vmatpush1.msra.mxu0 %v1478
  %1499 = vmatprep.subr.mxu0 0.0
  %1500 = vmatpush1.msra.mxu0 %v1479
  %1501 = vmatprep.subr.mxu0 0.0
  %1502 = vmatpush1.msra.mxu0 %v1480
  %1503 = vmatprep.subr.mxu0 0.0
  %1504 = vmatpush1.msra.mxu0 %v1481
  %1505 = vmatprep.subr.mxu0 0.0
  %1506 = vmatpush1.msra.mxu0 %v1482
  %1507 = vmatprep.subr.mxu0 0.0
  %1508 = vmatpush1.msra.mxu0 %v1483
  %1509 = vmatprep.subr.mxu0 0.0
  %1510 = vmatpush1.msra.mxu0 %v1484
  %1511 = vmatprep.subr.mxu0 0.0
  %1512 = vmatpush1.msra.mxu0 %v1485
  %1513 = vmatprep.subr.mxu0 0.0
  %1514 = vmatpush1.msra.mxu0 %v1486
  %1515 = vmatprep.subr.mxu0 0.0
  %1516 = vmatpush1.msra.mxu0 %v1487
  %1517 = vmatprep.subr.mxu0 0.0
  %1518 = vmatpush1.msra.mxu0 %v1488
  %1519 = vmatprep.subr.mxu0 0.0
  %1520 = vmatpush1.msra.mxu0 %v1489
  %1521 = vmatprep.subr.mxu0 0.0
  %1522 = vmatpush1.msra.mxu0 %v1490
  %1523 = vmatprep.subr.mxu0 0.0
  %1524 = vmatpush1.msra.mxu0 0.0
  %1525 = vmatprep.subr.mxu0 0.0
  %1526 = vmatpush1.msra.mxu0 0.0
  %1527 = vmatprep.subr.mxu0 0.0
  %1528 = vmatpush1.msra.mxu0 0.0
  %1529 = vmatprep.subr.mxu0 0.0
  %1530 = vmatpush1.msra.mxu0 0.0
  %1531 = vmatprep.subr.mxu0 0.0
  %1532 = vmatpush1.msra.mxu0 0.0
  %1533 = vmatprep.subr.mxu0 0.0
  %1534 = vmatpush1.msra.mxu0 0.0
  %1535 = vmatprep.subr.mxu0 0.0
  %1536 = vmatpush1.msra.mxu0 0.0
  %1537 = vmatprep.subr.mxu0 0.0
  %1538 = vmatpush1.msra.mxu0 0.0
  %1539 = vmatprep.subr.mxu0 0.0
  %1540 = vmatpush1.msra.mxu0 0.0
  %1541 = vmatprep.subr.mxu0 0.0
  %1542 = vmatpush1.msra.mxu0 0.0
  %1543 = vmatprep.subr.mxu0 0.0
  %1544 = vmatpush1.msra.mxu0 0.0
  %1545 = vmatprep.subr.mxu0 0.0
  %1546 = vmatpush1.msra.mxu0 0.0
  %1547 = vmatprep.subr.mxu0 0.0
  %1548 = vmatpush1.msra.mxu0 0.0
  %1549 = vmatprep.subr.mxu0 0.0
  %1550 = vmatpush1.msra.mxu0 0.0
  %1551 = vmatprep.subr.mxu0 0.0
  %1552 = vmatpush1.msra.mxu0 0.0
  %1553 = vmatprep.subr.mxu0 0.0
  %1554 = vmatpush1.msra.mxu0 0.0
  %1555 = vmatprep.mubr.f32.mxu0 0.0
  %1556 = vmatmul.mubr.f32.gmra.mrb[0].mxu0 %v1449
  %v1557 = vpop.f32.mrb[0].mxu0
  %v1558 = vadd.f32 0.0, %v1557
  %v1559 = vpop.f32.mrb[0].mxu0
  %1560 = vmatprep.mubr.f32.mxu0 0.0
  %1561 = vmatmul.mubr.f32.gmra.mrb[0].mxu0 %v1450
  %v1562 = vpop.f32.mrb[0].mxu0
  %v1563 = vadd.f32 0.0, %v1562
  %v1564 = vpop.f32.mrb[0].mxu0
  %1565 = vmatprep.mubr.f32.mxu0 0.0
  %1566 = vmatmul.mubr.f32.gmra.mrb[0].mxu0 %v1451
  %v1567 = vpop.f32.mrb[0].mxu0
  %v1568 = vadd.f32 0.0, %v1567
  %v1569 = vpop.f32.mrb[0].mxu0
  %1570 = vmatprep.mubr.f32.mxu0 0.0
  %1571 = vmatmul.mubr.f32.gmra.mrb[0].mxu0 %v1452
  %v1572 = vpop.f32.mrb[0].mxu0
  %v1573 = vadd.f32 0.0, %v1572
  %v1574 = vpop.f32.mrb[0].mxu0
  %1575 = vmatprep.mubr.f32.mxu0 0.0
  %1576 = vmatmul.mubr.f32.gmra.mrb[0].mxu0 %v1453
  %v1577 = vpop.f32.mrb[0].mxu0
  %v1578 = vadd.f32 0.0, %v1577
  %v1579 = vpop.f32.mrb[0].mxu0
  %1580 = vmatprep.mubr.f32.mxu0 0.0
  %1581 = vmatmul.mubr.f32.gmra.mrb[0].mxu0 %v1454
  %v1582 = vpop.f32.mrb[0].mxu0
  %v1583 = vadd.f32 0.0, %v1582
  %v1584 = vpop.f32.mrb[0].mxu0
  %1585 = vmatprep.mubr.f32.mxu0 0.0
  %1586 = vmatmul.mubr.f32.gmra.mrb[0].mxu0 %v1455
  %v1587 = vpop.f32.mrb[0].mxu0
  %v1588 = vadd.f32 0.0, %v1587
  %v1589 = vpop.f32.mrb[0].mxu0
  %1590 = vmatprep.mubr.f32.mxu0 0.0
  %1591 = vmatmul.mubr.f32.gmra.mrb[0].mxu0 %v1456
  %v1592 = vpop.f32.mrb[0].mxu0
  %v1593 = vadd.f32 0.0, %v1592
  %v1594 = vpop.f32.mrb[0].mxu0
  %1595 = vdwg.mxu0
  %1596 = vmatprep.subr.mxu0 0.0
  %1597 = vmatpush1.msra.mxu0 %v1558
  %1598 = vmatprep.subr.mxu0 0.0
  %1599 = vmatpush1.msra.mxu0 %v1563
  %1600 = vmatprep.subr.mxu0 0.0
  %1601 = vmatpush1.msra.mxu0 %v1568
  %1602 = vmatprep.subr.mxu0 0.0
  %1603 = vmatpush1.msra.mxu0 %v1573
  %1604 = vmatprep.subr.mxu0 0.0
  %1605 = vmatpush1.msra.mxu0 %v1578
  %1606 = vmatprep.subr.mxu0 0.0
  %1607 = vmatpush1.msra.mxu0 %v1583
  %1608 = vmatprep.subr.mxu0 0.0
  %1609 = vmatpush1.msra.mxu0 %v1588
  %1610 = vmatprep.subr.mxu0 0.0
  %1611 = vmatpush1.msra.mxu0 %v1593
  %1612 = vmatprep.subr.mxu0 0.0
  %1613 = vmatpush1.msra.mxu0 0.0
  %1614 = vmatprep.subr.mxu0 0.0
  %1615 = vmatpush1.msra.mxu0 0.0
  %1616 = vmatprep.subr.mxu0 0.0
  %1617 = vmatpush1.msra.mxu0 0.0
  %1618 = vmatprep.subr.mxu0 0.0
  %1619 = vmatpush1.msra.mxu0 0.0
  %1620 = vmatprep.subr.mxu0 0.0
  %1621 = vmatpush1.msra.mxu0 0.0
  %1622 = vmatprep.subr.mxu0 0.0
  %1623 = vmatpush1.msra.mxu0 0.0
  %1624 = vmatprep.subr.mxu0 0.0
  %1625 = vmatpush1.msra.mxu0 0.0
  %1626 = vmatprep.subr.mxu0 0.0
  %1627 = vmatpush1.msra.mxu0 0.0
  %1628 = vmatprep.subr.mxu0 0.0
  %1629 = vmatpush1.msra.mxu0 0.0
  %1630 = vmatprep.subr.mxu0 0.0
  %1631 = vmatpush1.msra.mxu0 0.0
  %1632 = vmatprep.subr.mxu0 0.0
  %1633 = vmatpush1.msra.mxu0 0.0
  %1634 = vmatprep.subr.mxu0 0.0
  %1635 = vmatpush1.msra.mxu0 0.0
  %1636 = vmatprep.subr.mxu0 0.0
  %1637 = vmatpush1.msra.mxu0 0.0
  %1638 = vmatprep.subr.mxu0 0.0
  %1639 = vmatpush1.msra.mxu0 0.0
  %1640 = vmatprep.subr.mxu0 0.0
  %1641 = vmatpush1.msra.mxu0 0.0
  %1642 = vmatprep.subr.mxu0 0.0
  %1643 = vmatpush1.msra.mxu0 0.0
  %1644 = vmatprep.subr.mxu0 0.0
  %1645 = vmatpush1.msra.mxu0 0.0
  %1646 = vmatprep.subr.mxu0 0.0
  %1647 = vmatpush1.msra.mxu0 0.0
  %1648 = vmatprep.subr.mxu0 0.0
  %1649 = vmatpush1.msra.mxu0 0.0
  %1650 = vmatprep.subr.mxu0 0.0
  %1651 = vmatpush1.msra.mxu0 0.0
  %1652 = vmatprep.subr.mxu0 0.0
  %1653 = vmatpush1.msra.mxu0 0.0
  %1654 = vmatprep.subr.mxu0 0.0
  %1655 = vmatpush1.msra.mxu0 0.0
  %1656 = vmatprep.subr.mxu0 0.0
  %1657 = vmatpush1.msra.mxu0 0.0
  %1658 = vmatprep.subr.mxu0 0.0
  %1659 = vmatpush1.msra.mxu0 0.0
  %1660 = vmatprep.mubr.f32.mxu0 0.0
  %1661 = vmatmul.mubr.f32.gmra.mrb[0].mxu0 %v758
  %v1662 = vpop.f32.mrb[0].mxu0
  %v1663 = vadd.f32 0.0, %v1662
  %v1664 = vpop.f32.mrb[0].mxu0
  %1665 = vmatprep.mubr.f32.mxu0 0.0
  %1666 = vmatmul.mubr.f32.gmra.mrb[0].mxu0 %v761
  %v1667 = vpop.f32.mrb[0].mxu0
  %v1668 = vadd.f32 0.0, %v1667
  %v1669 = vpop.f32.mrb[0].mxu0
  %1670 = vmatprep.mubr.f32.mxu0 0.0
  %1671 = vmatmul.mubr.f32.gmra.mrb[0].mxu0 %v764
  %v1672 = vpop.f32.mrb[0].mxu0
  %v1673 = vadd.f32 0.0, %v1672
  %v1674 = vpop.f32.mrb[0].mxu0
  %1675 = vmatprep.mubr.f32.mxu0 0.0
  %1676 = vmatmul.mubr.f32.gmra.mrb[0].mxu0 %v767
  %v1677 = vpop.f32.mrb[0].mxu0
  %v1678 = vadd.f32 0.0, %v1677
  %v1679 = vpop.f32.mrb[0].mxu0
  %1680 = vmatprep.mubr.f32.mxu0 0.0
  %1681 = vmatmul.mubr.f32.gmra.mrb[0].mxu0 %v770
  %v1682 = vpop.f32.mrb[0].mxu0
  %v1683 = vadd.f32 0.0, %v1682
  %v1684 = vpop.f32.mrb[0].mxu0
  %1685 = vmatprep.mubr.f32.mxu0 0.0
  %1686 = vmatmul.mubr.f32.gmra.mrb[0].mxu0 %v773
  %v1687 = vpop.f32.mrb[0].mxu0
  %v1688 = vadd.f32 0.0, %v1687
  %v1689 = vpop.f32.mrb[0].mxu0
  %1690 = vmatprep.mubr.f32.mxu0 0.0
  %1691 = vmatmul.mubr.f32.gmra.mrb[0].mxu0 %v776
  %v1692 = vpop.f32.mrb[0].mxu0
  %v1693 = vadd.f32 0.0, %v1692
  %v1694 = vpop.f32.mrb[0].mxu0
  %1695 = vmatprep.mubr.f32.mxu0 0.0
  %1696 = vmatmul.mubr.f32.gmra.mrb[0].mxu0 %v779
  %v1697 = vpop.f32.mrb[0].mxu0
  %v1698 = vadd.f32 0.0, %v1697
  %v1699 = vpop.f32.mrb[0].mxu0
  %1700 = vdwg.mxu0
  %1701 = vmatprep.subr.mxu0 0.0
  %1702 = vmatpush1.msra.mxu0 %v1458
  %1703 = vmatprep.subr.mxu0 0.0
  %1704 = vmatpush1.msra.mxu0 %v1459
  %1705 = vmatprep.subr.mxu0 0.0
  %1706 = vmatpush1.msra.mxu0 %v1460
  %1707 = vmatprep.subr.mxu0 0.0
  %1708 = vmatpush1.msra.mxu0 %v1461
  %1709 = vmatprep.subr.mxu0 0.0
  %1710 = vmatpush1.msra.mxu0 %v1462
  %1711 = vmatprep.subr.mxu0 0.0
  %1712 = vmatpush1.msra.mxu0 %v1463
  %1713 = vmatprep.subr.mxu0 0.0
  %1714 = vmatpush1.msra.mxu0 %v1464
  %1715 = vmatprep.subr.mxu0 0.0
  %1716 = vmatpush1.msra.mxu0 %v1465
  %1717 = vmatprep.subr.mxu0 0.0
  %1718 = vmatpush1.msra.mxu0 %v1466
  %1719 = vmatprep.subr.mxu0 0.0
  %1720 = vmatpush1.msra.mxu0 %v1467
  %1721 = vmatprep.subr.mxu0 0.0
  %1722 = vmatpush1.msra.mxu0 %v1468
  %1723 = vmatprep.subr.mxu0 0.0
  %1724 = vmatpush1.msra.mxu0 %v1469
  %1725 = vmatprep.subr.mxu0 0.0
  %1726 = vmatpush1.msra.mxu0 %v1470
  %1727 = vmatprep.subr.mxu0 0.0
  %1728 = vmatpush1.msra.mxu0 %v1471
  %1729 = vmatprep.subr.mxu0 0.0
  %1730 = vmatpush1.msra.mxu0 %v1472
  %1731 = vmatprep.subr.mxu0 0.0
  %1732 = vmatpush1.msra.mxu0 %v1473
  %1733 = vmatprep.subr.mxu0 0.0
  %1734 = vmatpush1.msra.mxu0 0.0
  %1735 = vmatprep.subr.mxu0 0.0
  %1736 = vmatpush1.msra.mxu0 0.0
  %1737 = vmatprep.subr.mxu0 0.0
  %1738 = vmatpush1.msra.mxu0 0.0
  %1739 = vmatprep.subr.mxu0 0.0
  %1740 = vmatpush1.msra.mxu0 0.0
  %1741 = vmatprep.subr.mxu0 0.0
  %1742 = vmatpush1.msra.mxu0 0.0
  %1743 = vmatprep.subr.mxu0 0.0
  %1744 = vmatpush1.msra.mxu0 0.0
  %1745 = vmatprep.subr.mxu0 0.0
  %1746 = vmatpush1.msra.mxu0 0.0
  %1747 = vmatprep.subr.mxu0 0.0
  %1748 = vmatpush1.msra.mxu0 0.0
  %1749 = vmatprep.subr.mxu0 0.0
  %1750 = vmatpush1.msra.mxu0 0.0
  %1751 = vmatprep.subr.mxu0 0.0
  %1752 = vmatpush1.msra.mxu0 0.0
  %1753 = vmatprep.subr.mxu0 0.0
  %1754 = vmatpush1.msra.mxu0 0.0
  %1755 = vmatprep.subr.mxu0 0.0
  %1756 = vmatpush1.msra.mxu0 0.0
  %1757 = vmatprep.subr.mxu0 0.0
  %1758 = vmatpush1.msra.mxu0 0.0
  %1759 = vmatprep.subr.mxu0 0.0
  %1760 = vmatpush1.msra.mxu0 0.0
  %1761 = vmatprep.subr.mxu0 0.0
  %1762 = vmatpush1.msra.mxu0 0.0
  %1763 = vmatprep.subr.mxu0 0.0
  %1764 = vmatpush1.msra.mxu0 0.0
  %1765 = vmatprep.mubr.f32.mxu0 0.0
  %1766 = vmatmul.mubr.f32.gmra.mrb[0].mxu0 %v1425
  %v1767 = vpop.f32.mrb[0].mxu0
  %v1768 = vadd.f32 %v1663, %v1767
  %v1769 = vpop.f32.mrb[0].mxu0
  %1770 = vmatprep.mubr.f32.mxu0 0.0
  %1771 = vmatmul.mubr.f32.gmra.mrb[0].mxu0 %v1426
  %v1772 = vpop.f32.mrb[0].mxu0
  %v1773 = vadd.f32 %v1668, %v1772
  %v1774 = vpop.f32.mrb[0].mxu0
  %1775 = vmatprep.mubr.f32.mxu0 0.0
  %1776 = vmatmul.mubr.f32.gmra.mrb[0].mxu0 %v1427
  %v1777 = vpop.f32.mrb[0].mxu0
  %v1778 = vadd.f32 %v1673, %v1777
  %v1779 = vpop.f32.mrb[0].mxu0
  %1780 = vmatprep.mubr.f32.mxu0 0.0
  %1781 = vmatmul.mubr.f32.gmra.mrb[0].mxu0 %v1428
  %v1782 = vpop.f32.mrb[0].mxu0
  %v1783 = vadd.f32 %v1678, %v1782
  %v1784 = vpop.f32.mrb[0].mxu0
  %1785 = vmatprep.mubr.f32.mxu0 0.0
  %1786 = vmatmul.mubr.f32.gmra.mrb[0].mxu0 %v1429
  %v1787 = vpop.f32.mrb[0].mxu0
  %v1788 = vadd.f32 %v1683, %v1787
  %v1789 = vpop.f32.mrb[0].mxu0
  %1790 = vmatprep.mubr.f32.mxu0 0.0
  %1791 = vmatmul.mubr.f32.gmra.mrb[0].mxu0 %v1430
  %v1792 = vpop.f32.mrb[0].mxu0
  %v1793 = vadd.f32 %v1688, %v1792
  %v1794 = vpop.f32.mrb[0].mxu0
  %1795 = vmatprep.mubr.f32.mxu0 0.0
  %1796 = vmatmul.mubr.f32.gmra.mrb[0].mxu0 %v1431
  %v1797 = vpop.f32.mrb[0].mxu0
  %v1798 = vadd.f32 %v1693, %v1797
  %v1799 = vpop.f32.mrb[0].mxu0
  %1800 = vmatprep.mubr.f32.mxu0 0.0
  %1801 = vmatmul.mubr.f32.gmra.mrb[0].mxu0 %v1432
  %v1802 = vpop.f32.mrb[0].mxu0
  %v1803 = vadd.f32 %v1698, %v1802
  %v1804 = vpop.f32.mrb[0].mxu0
  %1805 = vdwg.mxu0
  %s1806 = scalar_lea.vmem %s5, 256
  %v1807 = vld [vmem:[%s1806] sm:$0xff]
  %v1808 = vld [vmem:[%s1806 + $0x8] sm:$0xff]
  %v1809 = vld [vmem:[%s1806 + $0x10] sm:$0xff]
  %v1810 = vld [vmem:[%s1806 + $0x18] sm:$0xff]
  %v1811 = vld [vmem:[%s1806 + $0x20] sm:$0xff]
  %v1812 = vld [vmem:[%s1806 + $0x28] sm:$0xff]
  %v1813 = vld [vmem:[%s1806 + $0x30] sm:$0xff]
  %v1814 = vld [vmem:[%s1806 + $0x38] sm:$0xff]
  %v1815 = vld [vmem:[%s1806 + $0x40] sm:$0xff]
  %v1816 = vld [vmem:[%s1806 + $0x48] sm:$0xff]
  %v1817 = vld [vmem:[%s1806 + $0x50] sm:$0xff]
  %v1818 = vld [vmem:[%s1806 + $0x58] sm:$0xff]
  %v1819 = vld [vmem:[%s1806 + $0x60] sm:$0xff]
  %v1820 = vld [vmem:[%s1806 + $0x68] sm:$0xff]
  %v1821 = vld [vmem:[%s1806 + $0x70] sm:$0xff]
  %v1822 = vld [vmem:[%s1806 + $0x78] sm:$0xff]
  %v1823 = vld [vmem:[%s5] sm:$0xff]
  %v1824 = vld [vmem:[%s5 + $0x8] sm:$0xff]
  %v1825 = vld [vmem:[%s5 + $0x10] sm:$0xff]
  %v1826 = vld [vmem:[%s5 + $0x18] sm:$0xff]
  %v1827 = vld [vmem:[%s5 + $0x20] sm:$0xff]
  %v1828 = vld [vmem:[%s5 + $0x28] sm:$0xff]
  %v1829 = vld [vmem:[%s5 + $0x30] sm:$0xff]
  %v1830 = vld [vmem:[%s5 + $0x38] sm:$0xff]
  %v1831 = vld [vmem:[%s5 + $0x40] sm:$0xff]
  %v1832 = vld [vmem:[%s5 + $0x48] sm:$0xff]
  %v1833 = vld [vmem:[%s5 + $0x50] sm:$0xff]
  %v1834 = vld [vmem:[%s5 + $0x58] sm:$0xff]
  %v1835 = vld [vmem:[%s5 + $0x60] sm:$0xff]
  %v1836 = vld [vmem:[%s5 + $0x68] sm:$0xff]
  %v1837 = vld [vmem:[%s5 + $0x70] sm:$0xff]
  %v1838 = vld [vmem:[%s5 + $0x78] sm:$0xff]
  %1839 = vmatprep.subr.mxu0 0.0
  %1840 = vmatpush1.msra.mxu0 %v1823
  %1841 = vmatprep.subr.mxu0 0.0
  %1842 = vmatpush1.msra.mxu0 %v1824
  %1843 = vmatprep.subr.mxu0 0.0
  %1844 = vmatpush1.msra.mxu0 %v1825
  %1845 = vmatprep.subr.mxu0 0.0
  %1846 = vmatpush1.msra.mxu0 %v1826
  %1847 = vmatprep.subr.mxu0 0.0
  %1848 = vmatpush1.msra.mxu0 %v1827
  %1849 = vmatprep.subr.mxu0 0.0
  %1850 = vmatpush1.msra.mxu0 %v1828
  %1851 = vmatprep.subr.mxu0 0.0
  %1852 = vmatpush1.msra.mxu0 %v1829
  %1853 = vmatprep.subr.mxu0 0.0
  %1854 = vmatpush1.msra.mxu0 %v1830
  %1855 = vmatprep.subr.mxu0 0.0
  %1856 = vmatpush1.msra.mxu0 %v1831
  %1857 = vmatprep.subr.mxu0 0.0
  %1858 = vmatpush1.msra.mxu0 %v1832
  %1859 = vmatprep.subr.mxu0 0.0
  %1860 = vmatpush1.msra.mxu0 %v1833
  %1861 = vmatprep.subr.mxu0 0.0
  %1862 = vmatpush1.msra.mxu0 %v1834
  %1863 = vmatprep.subr.mxu0 0.0
  %1864 = vmatpush1.msra.mxu0 %v1835
  %1865 = vmatprep.subr.mxu0 0.0
  %1866 = vmatpush1.msra.mxu0 %v1836
  %1867 = vmatprep.subr.mxu0 0.0
  %1868 = vmatpush1.msra.mxu0 %v1837
  %1869 = vmatprep.subr.mxu0 0.0
  %1870 = vmatpush1.msra.mxu0 %v1838
  %1871 = vmatprep.subr.mxu0 0.0
  %1872 = vmatpush1.msra.mxu0 0.0
  %1873 = vmatprep.subr.mxu0 0.0
  %1874 = vmatpush1.msra.mxu0 0.0
  %1875 = vmatprep.subr.mxu0 0.0
  %1876 = vmatpush1.msra.mxu0 0.0
  %1877 = vmatprep.subr.mxu0 0.0
  %1878 = vmatpush1.msra.mxu0 0.0
  %1879 = vmatprep.subr.mxu0 0.0
  %1880 = vmatpush1.msra.mxu0 0.0
  %1881 = vmatprep.subr.mxu0 0.0
  %1882 = vmatpush1.msra.mxu0 0.0
  %1883 = vmatprep.subr.mxu0 0.0
  %1884 = vmatpush1.msra.mxu0 0.0
  %1885 = vmatprep.subr.mxu0 0.0
  %1886 = vmatpush1.msra.mxu0 0.0
  %1887 = vmatprep.subr.mxu0 0.0
  %1888 = vmatpush1.msra.mxu0 0.0
  %1889 = vmatprep.subr.mxu0 0.0
  %1890 = vmatpush1.msra.mxu0 0.0
  %1891 = vmatprep.subr.mxu0 0.0
  %1892 = vmatpush1.msra.mxu0 0.0
  %1893 = vmatprep.subr.mxu0 0.0
  %1894 = vmatpush1.msra.mxu0 0.0
  %1895 = vmatprep.subr.mxu0 0.0
  %1896 = vmatpush1.msra.mxu0 0.0
  %1897 = vmatprep.subr.mxu0 0.0
  %1898 = vmatpush1.msra.mxu0 0.0
  %1899 = vmatprep.subr.mxu0 0.0
  %1900 = vmatpush1.msra.mxu0 0.0
  %1901 = vmatprep.subr.mxu0 0.0
  %1902 = vmatpush1.msra.mxu0 0.0
  %1903 = vmatprep.mubr.f32.mxu0 0.0
  %1904 = vmatmul.mubr.f32.gmra.mrb[0].mxu0 %v1449
  %v1905 = vpop.f32.mrb[0].mxu0
  %v1906 = vadd.f32 0.0, %v1905
  %v1907 = vpop.f32.mrb[0].mxu0
  %1908 = vmatprep.mubr.f32.mxu0 0.0
  %1909 = vmatmul.mubr.f32.gmra.mrb[0].mxu0 %v1450
  %v1910 = vpop.f32.mrb[0].mxu0
  %v1911 = vadd.f32 0.0, %v1910
  %v1912 = vpop.f32.mrb[0].mxu0
  %1913 = vmatprep.mubr.f32.mxu0 0.0
  %1914 = vmatmul.mubr.f32.gmra.mrb[0].mxu0 %v1451
  %v1915 = vpop.f32.mrb[0].mxu0
  %v1916 = vadd.f32 0.0, %v1915
  %v1917 = vpop.f32.mrb[0].mxu0
  %1918 = vmatprep.mubr.f32.mxu0 0.0
  %1919 = vmatmul.mubr.f32.gmra.mrb[0].mxu0 %v1452
  %v1920 = vpop.f32.mrb[0].mxu0
  %v1921 = vadd.f32 0.0, %v1920
  %v1922 = vpop.f32.mrb[0].mxu0
  %1923 = vmatprep.mubr.f32.mxu0 0.0
  %1924 = vmatmul.mubr.f32.gmra.mrb[0].mxu0 %v1453
  %v1925 = vpop.f32.mrb[0].mxu0
  %v1926 = vadd.f32 0.0, %v1925
  %v1927 = vpop.f32.mrb[0].mxu0
  %1928 = vmatprep.mubr.f32.mxu0 0.0
  %1929 = vmatmul.mubr.f32.gmra.mrb[0].mxu0 %v1454
  %v1930 = vpop.f32.mrb[0].mxu0
  %v1931 = vadd.f32 0.0, %v1930
  %v1932 = vpop.f32.mrb[0].mxu0
  %1933 = vmatprep.mubr.f32.mxu0 0.0
  %1934 = vmatmul.mubr.f32.gmra.mrb[0].mxu0 %v1455
  %v1935 = vpop.f32.mrb[0].mxu0
  %v1936 = vadd.f32 0.0, %v1935
  %v1937 = vpop.f32.mrb[0].mxu0
  %1938 = vmatprep.mubr.f32.mxu0 0.0
  %1939 = vmatmul.mubr.f32.gmra.mrb[0].mxu0 %v1456
  %v1940 = vpop.f32.mrb[0].mxu0
  %v1941 = vadd.f32 0.0, %v1940
  %v1942 = vpop.f32.mrb[0].mxu0
  %1943 = vdwg.mxu0
  %1944 = vmatprep.subr.mxu0 0.0
  %1945 = vmatpush1.msra.mxu0 %v1807
  %1946 = vmatprep.subr.mxu0 0.0
  %1947 = vmatpush1.msra.mxu0 %v1808
  %1948 = vmatprep.subr.mxu0 0.0
  %1949 = vmatpush1.msra.mxu0 %v1809
  %1950 = vmatprep.subr.mxu0 0.0
  %1951 = vmatpush1.msra.mxu0 %v1810
  %1952 = vmatprep.subr.mxu0 0.0
  %1953 = vmatpush1.msra.mxu0 %v1811
  %1954 = vmatprep.subr.mxu0 0.0
  %1955 = vmatpush1.msra.mxu0 %v1812
  %1956 = vmatprep.subr.mxu0 0.0
  %1957 = vmatpush1.msra.mxu0 %v1813
  %1958 = vmatprep.subr.mxu0 0.0
  %1959 = vmatpush1.msra.mxu0 %v1814
  %1960 = vmatprep.subr.mxu0 0.0
  %1961 = vmatpush1.msra.mxu0 %v1815
  %1962 = vmatprep.subr.mxu0 0.0
  %1963 = vmatpush1.msra.mxu0 %v1816
  %1964 = vmatprep.subr.mxu0 0.0
  %1965 = vmatpush1.msra.mxu0 %v1817
  %1966 = vmatprep.subr.mxu0 0.0
  %1967 = vmatpush1.msra.mxu0 %v1818
  %1968 = vmatprep.subr.mxu0 0.0
  %1969 = vmatpush1.msra.mxu0 %v1819
  %1970 = vmatprep.subr.mxu0 0.0
  %1971 = vmatpush1.msra.mxu0 %v1820
  %1972 = vmatprep.subr.mxu0 0.0
  %1973 = vmatpush1.msra.mxu0 %v1821
  %1974 = vmatprep.subr.mxu0 0.0
  %1975 = vmatpush1.msra.mxu0 %v1822
  %1976 = vmatprep.subr.mxu0 0.0
  %1977 = vmatpush1.msra.mxu0 0.0
  %1978 = vmatprep.subr.mxu0 0.0
  %1979 = vmatpush1.msra.mxu0 0.0
  %1980 = vmatprep.subr.mxu0 0.0
  %1981 = vmatpush1.msra.mxu0 0.0
  %1982 = vmatprep.subr.mxu0 0.0
  %1983 = vmatpush1.msra.mxu0 0.0
  %1984 = vmatprep.subr.mxu0 0.0
  %1985 = vmatpush1.msra.mxu0 0.0
  %1986 = vmatprep.subr.mxu0 0.0
  %1987 = vmatpush1.msra.mxu0 0.0
  %1988 = vmatprep.subr.mxu0 0.0
  %1989 = vmatpush1.msra.mxu0 0.0
  %1990 = vmatprep.subr.mxu0 0.0
  %1991 = vmatpush1.msra.mxu0 0.0
  %1992 = vmatprep.subr.mxu0 0.0
  %1993 = vmatpush1.msra.mxu0 0.0
  %1994 = vmatprep.subr.mxu0 0.0
  %1995 = vmatpush1.msra.mxu0 0.0
  %1996 = vmatprep.subr.mxu0 0.0
  %1997 = vmatpush1.msra.mxu0 0.0
  %1998 = vmatprep.subr.mxu0 0.0
  %1999 = vmatpush1.msra.mxu0 0.0
  %2000 = vmatprep.subr.mxu0 0.0
  %2001 = vmatpush1.msra.mxu0 0.0
  %2002 = vmatprep.subr.mxu0 0.0
  %2003 = vmatpush1.msra.mxu0 0.0
  %2004 = vmatprep.subr.mxu0 0.0
  %2005 = vmatpush1.msra.mxu0 0.0
  %2006 = vmatprep.subr.mxu0 0.0
  %2007 = vmatpush1.msra.mxu0 0.0
  %2008 = vmatprep.mubr.f32.mxu0 0.0
  %2009 = vmatmul.mubr.f32.gmra.mrb[0].mxu0 %v1425
  %v2010 = vpop.f32.mrb[0].mxu0
  %v2011 = vadd.f32 %v1906, %v2010
  %v2012 = vpop.f32.mrb[0].mxu0
  %2013 = vmatprep.mubr.f32.mxu0 0.0
  %2014 = vmatmul.mubr.f32.gmra.mrb[0].mxu0 %v1426
  %v2015 = vpop.f32.mrb[0].mxu0
  %v2016 = vadd.f32 %v1911, %v2015
  %v2017 = vpop.f32.mrb[0].mxu0
  %2018 = vmatprep.mubr.f32.mxu0 0.0
  %2019 = vmatmul.mubr.f32.gmra.mrb[0].mxu0 %v1427
  %v2020 = vpop.f32.mrb[0].mxu0
  %v2021 = vadd.f32 %v1916, %v2020
  %v2022 = vpop.f32.mrb[0].mxu0
  %2023 = vmatprep.mubr.f32.mxu0 0.0
  %2024 = vmatmul.mubr.f32.gmra.mrb[0].mxu0 %v1428
  %v2025 = vpop.f32.mrb[0].mxu0
  %v2026 = vadd.f32 %v1921, %v2025
  %v2027 = vpop.f32.mrb[0].mxu0
  %2028 = vmatprep.mubr.f32.mxu0 0.0
  %2029 = vmatmul.mubr.f32.gmra.mrb[0].mxu0 %v1429
  %v2030 = vpop.f32.mrb[0].mxu0
  %v2031 = vadd.f32 %v1926, %v2030
  %v2032 = vpop.f32.mrb[0].mxu0
  %2033 = vmatprep.mubr.f32.mxu0 0.0
  %2034 = vmatmul.mubr.f32.gmra.mrb[0].mxu0 %v1430
  %v2035 = vpop.f32.mrb[0].mxu0
  %v2036 = vadd.f32 %v1931, %v2035
  %v2037 = vpop.f32.mrb[0].mxu0
  %2038 = vmatprep.mubr.f32.mxu0 0.0
  %2039 = vmatmul.mubr.f32.gmra.mrb[0].mxu0 %v1431
  %v2040 = vpop.f32.mrb[0].mxu0
  %v2041 = vadd.f32 %v1936, %v2040
  %v2042 = vpop.f32.mrb[0].mxu0
  %2043 = vmatprep.mubr.f32.mxu0 0.0
  %2044 = vmatmul.mubr.f32.gmra.mrb[0].mxu0 %v1432
  %v2045 = vpop.f32.mrb[0].mxu0
  %v2046 = vadd.f32 %v1941, %v2045
  %v2047 = vpop.f32.mrb[0].mxu0
  %2048 = vdwg.mxu0
  %2049 = vmatprep.subr.mxu0 0.0
  %2050 = vmatpush1.msra.mxu0 %v1475
  %2051 = vmatprep.subr.mxu0 0.0
  %2052 = vmatpush1.msra.mxu0 %v1476
  %2053 = vmatprep.subr.mxu0 0.0
  %2054 = vmatpush1.msra.mxu0 %v1477
  %2055 = vmatprep.subr.mxu0 0.0
  %2056 = vmatpush1.msra.mxu0 %v1478
  %2057 = vmatprep.subr.mxu0 0.0
  %2058 = vmatpush1.msra.mxu0 %v1479
  %2059 = vmatprep.subr.mxu0 0.0
  %2060 = vmatpush1.msra.mxu0 %v1480
  %2061 = vmatprep.subr.mxu0 0.0
  %2062 = vmatpush1.msra.mxu0 %v1481
  %2063 = vmatprep.subr.mxu0 0.0
  %2064 = vmatpush1.msra.mxu0 %v1482
  %2065 = vmatprep.subr.mxu0 0.0
  %2066 = vmatpush1.msra.mxu0 %v1483
  %2067 = vmatprep.subr.mxu0 0.0
  %2068 = vmatpush1.msra.mxu0 %v1484
  %2069 = vmatprep.subr.mxu0 0.0
  %2070 = vmatpush1.msra.mxu0 %v1485
  %2071 = vmatprep.subr.mxu0 0.0
  %2072 = vmatpush1.msra.mxu0 %v1486
  %2073 = vmatprep.subr.mxu0 0.0
  %2074 = vmatpush1.msra.mxu0 %v1487
  %2075 = vmatprep.subr.mxu0 0.0
  %2076 = vmatpush1.msra.mxu0 %v1488
  %2077 = vmatprep.subr.mxu0 0.0
  %2078 = vmatpush1.msra.mxu0 %v1489
  %2079 = vmatprep.subr.mxu0 0.0
  %2080 = vmatpush1.msra.mxu0 %v1490
  %2081 = vmatprep.subr.mxu0 0.0
  %2082 = vmatpush1.msra.mxu0 0.0
  %2083 = vmatprep.subr.mxu0 0.0
  %2084 = vmatpush1.msra.mxu0 0.0
  %2085 = vmatprep.subr.mxu0 0.0
  %2086 = vmatpush1.msra.mxu0 0.0
  %2087 = vmatprep.subr.mxu0 0.0
  %2088 = vmatpush1.msra.mxu0 0.0
  %2089 = vmatprep.subr.mxu0 0.0
  %2090 = vmatpush1.msra.mxu0 0.0
  %2091 = vmatprep.subr.mxu0 0.0
  %2092 = vmatpush1.msra.mxu0 0.0
  %2093 = vmatprep.subr.mxu0 0.0
  %2094 = vmatpush1.msra.mxu0 0.0
  %2095 = vmatprep.subr.mxu0 0.0
  %2096 = vmatpush1.msra.mxu0 0.0
  %2097 = vmatprep.subr.mxu0 0.0
  %2098 = vmatpush1.msra.mxu0 0.0
  %2099 = vmatprep.subr.mxu0 0.0
  %2100 = vmatpush1.msra.mxu0 0.0
  %2101 = vmatprep.subr.mxu0 0.0
  %2102 = vmatpush1.msra.mxu0 0.0
  %2103 = vmatprep.subr.mxu0 0.0
  %2104 = vmatpush1.msra.mxu0 0.0
  %2105 = vmatprep.subr.mxu0 0.0
  %2106 = vmatpush1.msra.mxu0 0.0
  %2107 = vmatprep.subr.mxu0 0.0
  %2108 = vmatpush1.msra.mxu0 0.0
  %2109 = vmatprep.subr.mxu0 0.0
  %2110 = vmatpush1.msra.mxu0 0.0
  %2111 = vmatprep.subr.mxu0 0.0
  %2112 = vmatpush1.msra.mxu0 0.0
  %2113 = vmatprep.mubr.f32.mxu0 0.0
  %2114 = vmatmul.mubr.f32.gmra.mrb[0].mxu0 %v1425
  %v2115 = vpop.f32.mrb[0].mxu0
  %v2116 = vadd.f32 0.0, %v2115
  %v2117 = vpop.f32.mrb[0].mxu0
  %2118 = vmatprep.mubr.f32.mxu0 0.0
  %2119 = vmatmul.mubr.f32.gmra.mrb[0].mxu0 %v1426
  %v2120 = vpop.f32.mrb[0].mxu0
  %v2121 = vadd.f32 0.0, %v2120
  %v2122 = vpop.f32.mrb[0].mxu0
  %2123 = vmatprep.mubr.f32.mxu0 0.0
  %2124 = vmatmul.mubr.f32.gmra.mrb[0].mxu0 %v1427
  %v2125 = vpop.f32.mrb[0].mxu0
  %v2126 = vadd.f32 0.0, %v2125
  %v2127 = vpop.f32.mrb[0].mxu0
  %2128 = vmatprep.mubr.f32.mxu0 0.0
  %2129 = vmatmul.mubr.f32.gmra.mrb[0].mxu0 %v1428
  %v2130 = vpop.f32.mrb[0].mxu0
  %v2131 = vadd.f32 0.0, %v2130
  %v2132 = vpop.f32.mrb[0].mxu0
  %2133 = vmatprep.mubr.f32.mxu0 0.0
  %2134 = vmatmul.mubr.f32.gmra.mrb[0].mxu0 %v1429
  %v2135 = vpop.f32.mrb[0].mxu0
  %v2136 = vadd.f32 0.0, %v2135
  %v2137 = vpop.f32.mrb[0].mxu0
  %2138 = vmatprep.mubr.f32.mxu0 0.0
  %2139 = vmatmul.mubr.f32.gmra.mrb[0].mxu0 %v1430
  %v2140 = vpop.f32.mrb[0].mxu0
  %v2141 = vadd.f32 0.0, %v2140
  %v2142 = vpop.f32.mrb[0].mxu0
  %2143 = vmatprep.mubr.f32.mxu0 0.0
  %2144 = vmatmul.mubr.f32.gmra.mrb[0].mxu0 %v1431
  %v2145 = vpop.f32.mrb[0].mxu0
  %v2146 = vadd.f32 0.0, %v2145
  %v2147 = vpop.f32.mrb[0].mxu0
  %2148 = vmatprep.mubr.f32.mxu0 0.0
  %2149 = vmatmul.mubr.f32.gmra.mrb[0].mxu0 %v1432
  %v2150 = vpop.f32.mrb[0].mxu0
  %v2151 = vadd.f32 0.0, %v2150
  %v2152 = vpop.f32.mrb[0].mxu0
  %2153 = vdwg.mxu0
  %2154 = vmatprep.subr.mxu0 0.0
  %2155 = vmatpush1.msra.mxu0 %v1458
  %2156 = vmatprep.subr.mxu0 0.0
  %2157 = vmatpush1.msra.mxu0 %v1459
  %2158 = vmatprep.subr.mxu0 0.0
  %2159 = vmatpush1.msra.mxu0 %v1460
  %2160 = vmatprep.subr.mxu0 0.0
  %2161 = vmatpush1.msra.mxu0 %v1461
  %2162 = vmatprep.subr.mxu0 0.0
  %2163 = vmatpush1.msra.mxu0 %v1462
  %2164 = vmatprep.subr.mxu0 0.0
  %2165 = vmatpush1.msra.mxu0 %v1463
  %2166 = vmatprep.subr.mxu0 0.0
  %2167 = vmatpush1.msra.mxu0 %v1464
  %2168 = vmatprep.subr.mxu0 0.0
  %2169 = vmatpush1.msra.mxu0 %v1465
  %2170 = vmatprep.subr.mxu0 0.0
  %2171 = vmatpush1.msra.mxu0 %v1466
  %2172 = vmatprep.subr.mxu0 0.0
  %2173 = vmatpush1.msra.mxu0 %v1467
  %2174 = vmatprep.subr.mxu0 0.0
  %2175 = vmatpush1.msra.mxu0 %v1468
  %2176 = vmatprep.subr.mxu0 0.0
  %2177 = vmatpush1.msra.mxu0 %v1469
  %2178 = vmatprep.subr.mxu0 0.0
  %2179 = vmatpush1.msra.mxu0 %v1470
  %2180 = vmatprep.subr.mxu0 0.0
  %2181 = vmatpush1.msra.mxu0 %v1471
  %2182 = vmatprep.subr.mxu0 0.0
  %2183 = vmatpush1.msra.mxu0 %v1472
  %2184 = vmatprep.subr.mxu0 0.0
  %2185 = vmatpush1.msra.mxu0 %v1473
  %2186 = vmatprep.subr.mxu0 0.0
  %2187 = vmatpush1.msra.mxu0 0.0
  %2188 = vmatprep.subr.mxu0 0.0
  %2189 = vmatpush1.msra.mxu0 0.0
  %2190 = vmatprep.subr.mxu0 0.0
  %2191 = vmatpush1.msra.mxu0 0.0
  %2192 = vmatprep.subr.mxu0 0.0
  %2193 = vmatpush1.msra.mxu0 0.0
  %2194 = vmatprep.subr.mxu0 0.0
  %2195 = vmatpush1.msra.mxu0 0.0
  %2196 = vmatprep.subr.mxu0 0.0
  %2197 = vmatpush1.msra.mxu0 0.0
  %2198 = vmatprep.subr.mxu0 0.0
  %2199 = vmatpush1.msra.mxu0 0.0
  %2200 = vmatprep.subr.mxu0 0.0
  %2201 = vmatpush1.msra.mxu0 0.0
  %2202 = vmatprep.subr.mxu0 0.0
  %2203 = vmatpush1.msra.mxu0 0.0
  %2204 = vmatprep.subr.mxu0 0.0
  %2205 = vmatpush1.msra.mxu0 0.0
  %2206 = vmatprep.subr.mxu0 0.0
  %2207 = vmatpush1.msra.mxu0 0.0
  %2208 = vmatprep.subr.mxu0 0.0
  %2209 = vmatpush1.msra.mxu0 0.0
  %2210 = vmatprep.subr.mxu0 0.0
  %2211 = vmatpush1.msra.mxu0 0.0
  %2212 = vmatprep.subr.mxu0 0.0
  %2213 = vmatpush1.msra.mxu0 0.0
  %2214 = vmatprep.subr.mxu0 0.0
  %2215 = vmatpush1.msra.mxu0 0.0
  %2216 = vmatprep.subr.mxu0 0.0
  %2217 = vmatpush1.msra.mxu0 0.0
  %2218 = vmatprep.mubr.f32.mxu0 0.0
  %2219 = vmatmul.mubr.f32.gmra.mrb[0].mxu0 %v1449
  %v2220 = vpop.f32.mrb[0].mxu0
  %v2221 = vadd.f32 %v2116, %v2220
  %v2222 = vpop.f32.mrb[0].mxu0
  %2223 = vmatprep.mubr.f32.mxu0 0.0
  %2224 = vmatmul.mubr.f32.gmra.mrb[0].mxu0 %v1450
  %v2225 = vpop.f32.mrb[0].mxu0
  %v2226 = vadd.f32 %v2121, %v2225
  %v2227 = vpop.f32.mrb[0].mxu0
  %2228 = vmatprep.mubr.f32.mxu0 0.0
  %2229 = vmatmul.mubr.f32.gmra.mrb[0].mxu0 %v1451
  %v2230 = vpop.f32.mrb[0].mxu0
  %v2231 = vadd.f32 %v2126, %v2230
  %v2232 = vpop.f32.mrb[0].mxu0
  %2233 = vmatprep.mubr.f32.mxu0 0.0
  %2234 = vmatmul.mubr.f32.gmra.mrb[0].mxu0 %v1452
  %v2235 = vpop.f32.mrb[0].mxu0
  %v2236 = vadd.f32 %v2131, %v2235
  %v2237 = vpop.f32.mrb[0].mxu0
  %2238 = vmatprep.mubr.f32.mxu0 0.0
  %2239 = vmatmul.mubr.f32.gmra.mrb[0].mxu0 %v1453
  %v2240 = vpop.f32.mrb[0].mxu0
  %v2241 = vadd.f32 %v2136, %v2240
  %v2242 = vpop.f32.mrb[0].mxu0
  %2243 = vmatprep.mubr.f32.mxu0 0.0
  %2244 = vmatmul.mubr.f32.gmra.mrb[0].mxu0 %v1454
  %v2245 = vpop.f32.mrb[0].mxu0
  %v2246 = vadd.f32 %v2141, %v2245
  %v2247 = vpop.f32.mrb[0].mxu0
  %2248 = vmatprep.mubr.f32.mxu0 0.0
  %2249 = vmatmul.mubr.f32.gmra.mrb[0].mxu0 %v1455
  %v2250 = vpop.f32.mrb[0].mxu0
  %v2251 = vadd.f32 %v2146, %v2250
  %v2252 = vpop.f32.mrb[0].mxu0
  %2253 = vmatprep.mubr.f32.mxu0 0.0
  %2254 = vmatmul.mubr.f32.gmra.mrb[0].mxu0 %v1456
  %v2255 = vpop.f32.mrb[0].mxu0
  %v2256 = vadd.f32 %v2151, %v2255
  %v2257 = vpop.f32.mrb[0].mxu0
  %2258 = vdwg.mxu0
  %2259 = vmatprep.subr.mxu0 0.0
  %2260 = vmatpush1.msra.mxu0 %v1823
  %2261 = vmatprep.subr.mxu0 0.0
  %2262 = vmatpush1.msra.mxu0 %v1824
  %2263 = vmatprep.subr.mxu0 0.0
  %2264 = vmatpush1.msra.mxu0 %v1825
  %2265 = vmatprep.subr.mxu0 0.0
  %2266 = vmatpush1.msra.mxu0 %v1826
  %2267 = vmatprep.subr.mxu0 0.0
  %2268 = vmatpush1.msra.mxu0 %v1827
  %2269 = vmatprep.subr.mxu0 0.0
  %2270 = vmatpush1.msra.mxu0 %v1828
  %2271 = vmatprep.subr.mxu0 0.0
  %2272 = vmatpush1.msra.mxu0 %v1829
  %2273 = vmatprep.subr.mxu0 0.0
  %2274 = vmatpush1.msra.mxu0 %v1830
  %2275 = vmatprep.subr.mxu0 0.0
  %2276 = vmatpush1.msra.mxu0 %v1831
  %2277 = vmatprep.subr.mxu0 0.0
  %2278 = vmatpush1.msra.mxu0 %v1832
  %2279 = vmatprep.subr.mxu0 0.0
  %2280 = vmatpush1.msra.mxu0 %v1833
  %2281 = vmatprep.subr.mxu0 0.0
  %2282 = vmatpush1.msra.mxu0 %v1834
  %2283 = vmatprep.subr.mxu0 0.0
  %2284 = vmatpush1.msra.mxu0 %v1835
  %2285 = vmatprep.subr.mxu0 0.0
  %2286 = vmatpush1.msra.mxu0 %v1836
  %2287 = vmatprep.subr.mxu0 0.0
  %2288 = vmatpush1.msra.mxu0 %v1837
  %2289 = vmatprep.subr.mxu0 0.0
  %2290 = vmatpush1.msra.mxu0 %v1838
  %2291 = vmatprep.subr.mxu0 0.0
  %2292 = vmatpush1.msra.mxu0 0.0
  %2293 = vmatprep.subr.mxu0 0.0
  %2294 = vmatpush1.msra.mxu0 0.0
  %2295 = vmatprep.subr.mxu0 0.0
  %2296 = vmatpush1.msra.mxu0 0.0
  %2297 = vmatprep.subr.mxu0 0.0
  %2298 = vmatpush1.msra.mxu0 0.0
  %2299 = vmatprep.subr.mxu0 0.0
  %2300 = vmatpush1.msra.mxu0 0.0
  %2301 = vmatprep.subr.mxu0 0.0
  %2302 = vmatpush1.msra.mxu0 0.0
  %2303 = vmatprep.subr.mxu0 0.0
  %2304 = vmatpush1.msra.mxu0 0.0
  %2305 = vmatprep.subr.mxu0 0.0
  %2306 = vmatpush1.msra.mxu0 0.0
  %2307 = vmatprep.subr.mxu0 0.0
  %2308 = vmatpush1.msra.mxu0 0.0
  %2309 = vmatprep.subr.mxu0 0.0
  %2310 = vmatpush1.msra.mxu0 0.0
  %2311 = vmatprep.subr.mxu0 0.0
  %2312 = vmatpush1.msra.mxu0 0.0
  %2313 = vmatprep.subr.mxu0 0.0
  %2314 = vmatpush1.msra.mxu0 0.0
  %2315 = vmatprep.subr.mxu0 0.0
  %2316 = vmatpush1.msra.mxu0 0.0
  %2317 = vmatprep.subr.mxu0 0.0
  %2318 = vmatpush1.msra.mxu0 0.0
  %2319 = vmatprep.subr.mxu0 0.0
  %2320 = vmatpush1.msra.mxu0 0.0
  %2321 = vmatprep.subr.mxu0 0.0
  %2322 = vmatpush1.msra.mxu0 0.0
  %2323 = vmatprep.mubr.f32.mxu0 0.0
  %2324 = vmatmul.mubr.f32.gmra.mrb[0].mxu0 %v1425
  %v2325 = vpop.f32.mrb[0].mxu0
  %v2326 = vadd.f32 0.0, %v2325
  %v2327 = vpop.f32.mrb[0].mxu0
  %2328 = vmatprep.mubr.f32.mxu0 0.0
  %2329 = vmatmul.mubr.f32.gmra.mrb[0].mxu0 %v1426
  %v2330 = vpop.f32.mrb[0].mxu0
  %v2331 = vadd.f32 0.0, %v2330
  %v2332 = vpop.f32.mrb[0].mxu0
  %2333 = vmatprep.mubr.f32.mxu0 0.0
  %2334 = vmatmul.mubr.f32.gmra.mrb[0].mxu0 %v1427
  %v2335 = vpop.f32.mrb[0].mxu0
  %v2336 = vadd.f32 0.0, %v2335
  %v2337 = vpop.f32.mrb[0].mxu0
  %2338 = vmatprep.mubr.f32.mxu0 0.0
  %2339 = vmatmul.mubr.f32.gmra.mrb[0].mxu0 %v1428
  %v2340 = vpop.f32.mrb[0].mxu0
  %v2341 = vadd.f32 0.0, %v2340
  %v2342 = vpop.f32.mrb[0].mxu0
  %2343 = vmatprep.mubr.f32.mxu0 0.0
  %2344 = vmatmul.mubr.f32.gmra.mrb[0].mxu0 %v1429
  %v2345 = vpop.f32.mrb[0].mxu0
  %v2346 = vadd.f32 0.0, %v2345
  %v2347 = vpop.f32.mrb[0].mxu0
  %2348 = vmatprep.mubr.f32.mxu0 0.0
  %2349 = vmatmul.mubr.f32.gmra.mrb[0].mxu0 %v1430
  %v2350 = vpop.f32.mrb[0].mxu0
  %v2351 = vadd.f32 0.0, %v2350
  %v2352 = vpop.f32.mrb[0].mxu0
  %2353 = vmatprep.mubr.f32.mxu0 0.0
  %2354 = vmatmul.mubr.f32.gmra.mrb[0].mxu0 %v1431
  %v2355 = vpop.f32.mrb[0].mxu0
  %v2356 = vadd.f32 0.0, %v2355
  %v2357 = vpop.f32.mrb[0].mxu0
  %2358 = vmatprep.mubr.f32.mxu0 0.0
  %2359 = vmatmul.mubr.f32.gmra.mrb[0].mxu0 %v1432
  %v2360 = vpop.f32.mrb[0].mxu0
  %v2361 = vadd.f32 0.0, %v2360
  %v2362 = vpop.f32.mrb[0].mxu0
  %2363 = vdwg.mxu0
  %2364 = vmatprep.subr.mxu0 0.0
  %2365 = vmatpush1.msra.mxu0 %v2326
  %2366 = vmatprep.subr.mxu0 0.0
  %2367 = vmatpush1.msra.mxu0 %v2331
  %2368 = vmatprep.subr.mxu0 0.0
  %2369 = vmatpush1.msra.mxu0 %v2336
  %2370 = vmatprep.subr.mxu0 0.0
  %2371 = vmatpush1.msra.mxu0 %v2341
  %2372 = vmatprep.subr.mxu0 0.0
  %2373 = vmatpush1.msra.mxu0 %v2346
  %2374 = vmatprep.subr.mxu0 0.0
  %2375 = vmatpush1.msra.mxu0 %v2351
  %2376 = vmatprep.subr.mxu0 0.0
  %2377 = vmatpush1.msra.mxu0 %v2356
  %2378 = vmatprep.subr.mxu0 0.0
  %2379 = vmatpush1.msra.mxu0 %v2361
  %2380 = vmatprep.subr.mxu0 0.0
  %2381 = vmatpush1.msra.mxu0 0.0
  %2382 = vmatprep.subr.mxu0 0.0
  %2383 = vmatpush1.msra.mxu0 0.0
  %2384 = vmatprep.subr.mxu0 0.0
  %2385 = vmatpush1.msra.mxu0 0.0
  %2386 = vmatprep.subr.mxu0 0.0
  %2387 = vmatpush1.msra.mxu0 0.0
  %2388 = vmatprep.subr.mxu0 0.0
  %2389 = vmatpush1.msra.mxu0 0.0
  %2390 = vmatprep.subr.mxu0 0.0
  %2391 = vmatpush1.msra.mxu0 0.0
  %2392 = vmatprep.subr.mxu0 0.0
  %2393 = vmatpush1.msra.mxu0 0.0
  %2394 = vmatprep.subr.mxu0 0.0
  %2395 = vmatpush1.msra.mxu0 0.0
  %2396 = vmatprep.subr.mxu0 0.0
  %2397 = vmatpush1.msra.mxu0 0.0
  %2398 = vmatprep.subr.mxu0 0.0
  %2399 = vmatpush1.msra.mxu0 0.0
  %2400 = vmatprep.subr.mxu0 0.0
  %2401 = vmatpush1.msra.mxu0 0.0
  %2402 = vmatprep.subr.mxu0 0.0
  %2403 = vmatpush1.msra.mxu0 0.0
  %2404 = vmatprep.subr.mxu0 0.0
  %2405 = vmatpush1.msra.mxu0 0.0
  %2406 = vmatprep.subr.mxu0 0.0
  %2407 = vmatpush1.msra.mxu0 0.0
  %2408 = vmatprep.subr.mxu0 0.0
  %2409 = vmatpush1.msra.mxu0 0.0
  %2410 = vmatprep.subr.mxu0 0.0
  %2411 = vmatpush1.msra.mxu0 0.0
  %2412 = vmatprep.subr.mxu0 0.0
  %2413 = vmatpush1.msra.mxu0 0.0
  %2414 = vmatprep.subr.mxu0 0.0
  %2415 = vmatpush1.msra.mxu0 0.0
  %2416 = vmatprep.subr.mxu0 0.0
  %2417 = vmatpush1.msra.mxu0 0.0
  %2418 = vmatprep.subr.mxu0 0.0
  %2419 = vmatpush1.msra.mxu0 0.0
  %2420 = vmatprep.subr.mxu0 0.0
  %2421 = vmatpush1.msra.mxu0 0.0
  %2422 = vmatprep.subr.mxu0 0.0
  %2423 = vmatpush1.msra.mxu0 0.0
  %2424 = vmatprep.subr.mxu0 0.0
  %2425 = vmatpush1.msra.mxu0 0.0
  %2426 = vmatprep.subr.mxu0 0.0
  %2427 = vmatpush1.msra.mxu0 0.0
  %2428 = vmatprep.mubr.f32.mxu0 0.0
  %2429 = vmatmul.mubr.f32.gmra.mrb[0].mxu0 %v1162
  %v2430 = vpop.f32.mrb[0].mxu0
  %v2431 = vadd.f32 0.0, %v2430
  %v2432 = vpop.f32.mrb[0].mxu0
  %2433 = vmatprep.mubr.f32.mxu0 0.0
  %2434 = vmatmul.mubr.f32.gmra.mrb[0].mxu0 %v1165
  %v2435 = vpop.f32.mrb[0].mxu0
  %v2436 = vadd.f32 0.0, %v2435
  %v2437 = vpop.f32.mrb[0].mxu0
  %2438 = vmatprep.mubr.f32.mxu0 0.0
  %2439 = vmatmul.mubr.f32.gmra.mrb[0].mxu0 %v1168
  %v2440 = vpop.f32.mrb[0].mxu0
  %v2441 = vadd.f32 0.0, %v2440
  %v2442 = vpop.f32.mrb[0].mxu0
  %2443 = vmatprep.mubr.f32.mxu0 0.0
  %2444 = vmatmul.mubr.f32.gmra.mrb[0].mxu0 %v1171
  %v2445 = vpop.f32.mrb[0].mxu0
  %v2446 = vadd.f32 0.0, %v2445
  %v2447 = vpop.f32.mrb[0].mxu0
  %2448 = vmatprep.mubr.f32.mxu0 0.0
  %2449 = vmatmul.mubr.f32.gmra.mrb[0].mxu0 %v1174
  %v2450 = vpop.f32.mrb[0].mxu0
  %v2451 = vadd.f32 0.0, %v2450
  %v2452 = vpop.f32.mrb[0].mxu0
  %2453 = vmatprep.mubr.f32.mxu0 0.0
  %2454 = vmatmul.mubr.f32.gmra.mrb[0].mxu0 %v1177
  %v2455 = vpop.f32.mrb[0].mxu0
  %v2456 = vadd.f32 0.0, %v2455
  %v2457 = vpop.f32.mrb[0].mxu0
  %2458 = vmatprep.mubr.f32.mxu0 0.0
  %2459 = vmatmul.mubr.f32.gmra.mrb[0].mxu0 %v1180
  %v2460 = vpop.f32.mrb[0].mxu0
  %v2461 = vadd.f32 0.0, %v2460
  %v2462 = vpop.f32.mrb[0].mxu0
  %2463 = vmatprep.mubr.f32.mxu0 0.0
  %2464 = vmatmul.mubr.f32.gmra.mrb[0].mxu0 %v1183
  %v2465 = vpop.f32.mrb[0].mxu0
  %v2466 = vadd.f32 0.0, %v2465
  %v2467 = vpop.f32.mrb[0].mxu0
  %2468 = vdwg.mxu0
  %2469 = vmatprep.subr.mxu0 0.0
  %2470 = vmatpush1.msra.mxu0 %v1807
  %2471 = vmatprep.subr.mxu0 0.0
  %2472 = vmatpush1.msra.mxu0 %v1808
  %2473 = vmatprep.subr.mxu0 0.0
  %2474 = vmatpush1.msra.mxu0 %v1809
  %2475 = vmatprep.subr.mxu0 0.0
  %2476 = vmatpush1.msra.mxu0 %v1810
  %2477 = vmatprep.subr.mxu0 0.0
  %2478 = vmatpush1.msra.mxu0 %v1811
  %2479 = vmatprep.subr.mxu0 0.0
  %2480 = vmatpush1.msra.mxu0 %v1812
  %2481 = vmatprep.subr.mxu0 0.0
  %2482 = vmatpush1.msra.mxu0 %v1813
  %2483 = vmatprep.subr.mxu0 0.0
  %2484 = vmatpush1.msra.mxu0 %v1814
  %2485 = vmatprep.subr.mxu0 0.0
  %2486 = vmatpush1.msra.mxu0 %v1815
  %2487 = vmatprep.subr.mxu0 0.0
  %2488 = vmatpush1.msra.mxu0 %v1816
  %2489 = vmatprep.subr.mxu0 0.0
  %2490 = vmatpush1.msra.mxu0 %v1817
  %2491 = vmatprep.subr.mxu0 0.0
  %2492 = vmatpush1.msra.mxu0 %v1818
  %2493 = vmatprep.subr.mxu0 0.0
  %2494 = vmatpush1.msra.mxu0 %v1819
  %2495 = vmatprep.subr.mxu0 0.0
  %2496 = vmatpush1.msra.mxu0 %v1820
  %2497 = vmatprep.subr.mxu0 0.0
  %2498 = vmatpush1.msra.mxu0 %v1821
  %2499 = vmatprep.subr.mxu0 0.0
  %2500 = vmatpush1.msra.mxu0 %v1822
  %2501 = vmatprep.subr.mxu0 0.0
  %2502 = vmatpush1.msra.mxu0 0.0
  %2503 = vmatprep.subr.mxu0 0.0
  %2504 = vmatpush1.msra.mxu0 0.0
  %2505 = vmatprep.subr.mxu0 0.0
  %2506 = vmatpush1.msra.mxu0 0.0
  %2507 = vmatprep.subr.mxu0 0.0
  %2508 = vmatpush1.msra.mxu0 0.0
  %2509 = vmatprep.subr.mxu0 0.0
  %2510 = vmatpush1.msra.mxu0 0.0
  %2511 = vmatprep.subr.mxu0 0.0
  %2512 = vmatpush1.msra.mxu0 0.0
  %2513 = vmatprep.subr.mxu0 0.0
  %2514 = vmatpush1.msra.mxu0 0.0
  %2515 = vmatprep.subr.mxu0 0.0
  %2516 = vmatpush1.msra.mxu0 0.0
  %2517 = vmatprep.subr.mxu0 0.0
  %2518 = vmatpush1.msra.mxu0 0.0
  %2519 = vmatprep.subr.mxu0 0.0
  %2520 = vmatpush1.msra.mxu0 0.0
  %2521 = vmatprep.subr.mxu0 0.0
  %2522 = vmatpush1.msra.mxu0 0.0
  %2523 = vmatprep.subr.mxu0 0.0
  %2524 = vmatpush1.msra.mxu0 0.0
  %2525 = vmatprep.subr.mxu0 0.0
  %2526 = vmatpush1.msra.mxu0 0.0
  %2527 = vmatprep.subr.mxu0 0.0
  %2528 = vmatpush1.msra.mxu0 0.0
  %2529 = vmatprep.subr.mxu0 0.0
  %2530 = vmatpush1.msra.mxu0 0.0
  %2531 = vmatprep.subr.mxu0 0.0
  %2532 = vmatpush1.msra.mxu0 0.0
  %2533 = vmatprep.mubr.f32.mxu0 0.0
  %2534 = vmatmul.mubr.f32.gmra.mrb[0].mxu0 %v1449
  %v2535 = vpop.f32.mrb[0].mxu0
  %v2536 = vadd.f32 %v2431, %v2535
  %v2537 = vpop.f32.mrb[0].mxu0
  %2538 = vmatprep.mubr.f32.mxu0 0.0
  %2539 = vmatmul.mubr.f32.gmra.mrb[0].mxu0 %v1450
  %v2540 = vpop.f32.mrb[0].mxu0
  %v2541 = vadd.f32 %v2436, %v2540
  %v2542 = vpop.f32.mrb[0].mxu0
  %2543 = vmatprep.mubr.f32.mxu0 0.0
  %2544 = vmatmul.mubr.f32.gmra.mrb[0].mxu0 %v1451
  %v2545 = vpop.f32.mrb[0].mxu0
  %v2546 = vadd.f32 %v2441, %v2545
  %v2547 = vpop.f32.mrb[0].mxu0
  %2548 = vmatprep.mubr.f32.mxu0 0.0
  %2549 = vmatmul.mubr.f32.gmra.mrb[0].mxu0 %v1452
  %v2550 = vpop.f32.mrb[0].mxu0
  %v2551 = vadd.f32 %v2446, %v2550
  %v2552 = vpop.f32.mrb[0].mxu0
  %2553 = vmatprep.mubr.f32.mxu0 0.0
  %2554 = vmatmul.mubr.f32.gmra.mrb[0].mxu0 %v1453
  %v2555 = vpop.f32.mrb[0].mxu0
  %v2556 = vadd.f32 %v2451, %v2555
  %v2557 = vpop.f32.mrb[0].mxu0
  %2558 = vmatprep.mubr.f32.mxu0 0.0
  %2559 = vmatmul.mubr.f32.gmra.mrb[0].mxu0 %v1454
  %v2560 = vpop.f32.mrb[0].mxu0
  %v2561 = vadd.f32 %v2456, %v2560
  %v2562 = vpop.f32.mrb[0].mxu0
  %2563 = vmatprep.mubr.f32.mxu0 0.0
  %2564 = vmatmul.mubr.f32.gmra.mrb[0].mxu0 %v1455
  %v2565 = vpop.f32.mrb[0].mxu0
  %v2566 = vadd.f32 %v2461, %v2565
  %v2567 = vpop.f32.mrb[0].mxu0
  %2568 = vmatprep.mubr.f32.mxu0 0.0
  %2569 = vmatmul.mubr.f32.gmra.mrb[0].mxu0 %v1456
  %v2570 = vpop.f32.mrb[0].mxu0
  %v2571 = vadd.f32 %v2466, %v2570
  %v2572 = vpop.f32.mrb[0].mxu0
  %2573 = vdwg.mxu0
  %v2574 = vld [vmem:[%s6] sm:$0x1]
  %v2576 = vlaneseq
  %v2577 = vshrl.u32 %v2576, 7
  %v2578 = vsub.s32 0, %v2577
  %v2579 = vrot.slane %v2574, %v2578
  %v2581 = vmul.f32 %v1768, %v2579
  %v2582 = vmul.f32 %v1773, %v2579
  %v2583 = vmul.f32 %v1778, %v2579
  %v2584 = vmul.f32 %v1783, %v2579
  %v2585 = vmul.f32 %v1788, %v2579
  %v2586 = vmul.f32 %v1793, %v2579
  %v2587 = vmul.f32 %v1798, %v2579
  %v2588 = vmul.f32 %v1803, %v2579
  %v2589 = vld [vmem:[%s7] sm:$0x1]
  %v2591 = vlaneseq
  %v2592 = vshrl.u32 %v2591, 7
  %v2593 = vsub.s32 0, %v2592
  %v2594 = vrot.slane %v2589, %v2593
  %v2596 = vadd.f32 %v2581, %v2594
  %v2597 = vadd.f32 %v2582, %v2594
  %v2598 = vadd.f32 %v2583, %v2594
  %v2599 = vadd.f32 %v2584, %v2594
  %v2600 = vadd.f32 %v2585, %v2594
  %v2601 = vadd.f32 %v2586, %v2594
  %v2602 = vadd.f32 %v2587, %v2594
  %v2603 = vadd.f32 %v2588, %v2594
  %v2604 = vmax.f32 %v2596, 0.0
  %v2605 = vmax.f32 %v2597, 0.0
  %v2606 = vmax.f32 %v2598, 0.0
  %v2607 = vmax.f32 %v2599, 0.0
  %v2608 = vmax.f32 %v2600, 0.0
  %v2609 = vmax.f32 %v2601, 0.0
  %v2610 = vmax.f32 %v2602, 0.0
  %v2611 = vmax.f32 %v2603, 0.0
  %v2612 = vld [vmem:[%s8] sm:$0xff]
  %v2613 = vld [vmem:[%s8 + $0x8] sm:$0xff]
  %v2614 = vld [vmem:[%s8 + $0x10] sm:$0xff]
  %v2615 = vld [vmem:[%s8 + $0x18] sm:$0xff]
  %v2616 = vld [vmem:[%s8 + $0x20] sm:$0xff]
  %v2617 = vld [vmem:[%s8 + $0x28] sm:$0xff]
  %v2618 = vld [vmem:[%s8 + $0x30] sm:$0xff]
  %v2619 = vld [vmem:[%s8 + $0x38] sm:$0xff]
  %v2620 = vld [vmem:[%s8 + $0x40] sm:$0xff]
  %v2621 = vld [vmem:[%s8 + $0x48] sm:$0xff]
  %v2622 = vld [vmem:[%s8 + $0x50] sm:$0xff]
  %v2623 = vld [vmem:[%s8 + $0x58] sm:$0xff]
  %v2624 = vld [vmem:[%s8 + $0x60] sm:$0xff]
  %v2625 = vld [vmem:[%s8 + $0x68] sm:$0xff]
  %v2626 = vld [vmem:[%s8 + $0x70] sm:$0xff]
  %v2627 = vld [vmem:[%s8 + $0x78] sm:$0xff]
  %2628 = vmatprep.subr.mxu0 0.0
  %2629 = vmatpush1.msra.mxu0 %v2612
  %2630 = vmatprep.subr.mxu0 0.0
  %2631 = vmatpush1.msra.mxu0 %v2613
  %2632 = vmatprep.subr.mxu0 0.0
  %2633 = vmatpush1.msra.mxu0 %v2614
  %2634 = vmatprep.subr.mxu0 0.0
  %2635 = vmatpush1.msra.mxu0 %v2615
  %2636 = vmatprep.subr.mxu0 0.0
  %2637 = vmatpush1.msra.mxu0 %v2616
  %2638 = vmatprep.subr.mxu0 0.0
  %2639 = vmatpush1.msra.mxu0 %v2617
  %2640 = vmatprep.subr.mxu0 0.0
  %2641 = vmatpush1.msra.mxu0 %v2618
  %2642 = vmatprep.subr.mxu0 0.0
  %2643 = vmatpush1.msra.mxu0 %v2619
  %2644 = vmatprep.subr.mxu0 0.0
  %2645 = vmatpush1.msra.mxu0 %v2620
  %2646 = vmatprep.subr.mxu0 0.0
  %2647 = vmatpush1.msra.mxu0 %v2621
  %2648 = vmatprep.subr.mxu0 0.0
  %2649 = vmatpush1.msra.mxu0 %v2622
  %2650 = vmatprep.subr.mxu0 0.0
  %2651 = vmatpush1.msra.mxu0 %v2623
  %2652 = vmatprep.subr.mxu0 0.0
  %2653 = vmatpush1.msra.mxu0 %v2624
  %2654 = vmatprep.subr.mxu0 0.0
  %2655 = vmatpush1.msra.mxu0 %v2625
  %2656 = vmatprep.subr.mxu0 0.0
  %2657 = vmatpush1.msra.mxu0 %v2626
  %2658 = vmatprep.subr.mxu0 0.0
  %2659 = vmatpush1.msra.mxu0 %v2627
  %2660 = vmatprep.subr.mxu0 0.0
  %2661 = vmatpush1.msra.mxu0 0.0
  %2662 = vmatprep.subr.mxu0 0.0
  %2663 = vmatpush1.msra.mxu0 0.0
  %2664 = vmatprep.subr.mxu0 0.0
  %2665 = vmatpush1.msra.mxu0 0.0
  %2666 = vmatprep.subr.mxu0 0.0
  %2667 = vmatpush1.msra.mxu0 0.0
  %2668 = vmatprep.subr.mxu0 0.0
  %2669 = vmatpush1.msra.mxu0 0.0
  %2670 = vmatprep.subr.mxu0 0.0
  %2671 = vmatpush1.msra.mxu0 0.0
  %2672 = vmatprep.subr.mxu0 0.0
  %2673 = vmatpush1.msra.mxu0 0.0
  %2674 = vmatprep.subr.mxu0 0.0
  %2675 = vmatpush1.msra.mxu0 0.0
  %2676 = vmatprep.subr.mxu0 0.0
  %2677 = vmatpush1.msra.mxu0 0.0
  %2678 = vmatprep.subr.mxu0 0.0
  %2679 = vmatpush1.msra.mxu0 0.0
  %2680 = vmatprep.subr.mxu0 0.0
  %2681 = vmatpush1.msra.mxu0 0.0
  %2682 = vmatprep.subr.mxu0 0.0
  %2683 = vmatpush1.msra.mxu0 0.0
  %2684 = vmatprep.subr.mxu0 0.0
  %2685 = vmatpush1.msra.mxu0 0.0
  %2686 = vmatprep.subr.mxu0 0.0
  %2687 = vmatpush1.msra.mxu0 0.0
  %2688 = vmatprep.subr.mxu0 0.0
  %2689 = vmatpush1.msra.mxu0 0.0
  %2690 = vmatprep.subr.mxu0 0.0
  %2691 = vmatpush1.msra.mxu0 0.0
  %2692 = vmatprep.mubr.f32.mxu0 0.0
  %2693 = vmatmul.mubr.f32.gmra.mrb[0].mxu0 %v2604
  %v2694 = vpop.f32.mrb[0].mxu0
  %v2695 = vadd.f32 0.0, %v2694
  %v2696 = vpop.f32.mrb[0].mxu0
  %2697 = vmatprep.mubr.f32.mxu0 0.0
  %2698 = vmatmul.mubr.f32.gmra.mrb[0].mxu0 %v2605
  %v2699 = vpop.f32.mrb[0].mxu0
  %v2700 = vadd.f32 0.0, %v2699
  %v2701 = vpop.f32.mrb[0].mxu0
  %2702 = vmatprep.mubr.f32.mxu0 0.0
  %2703 = vmatmul.mubr.f32.gmra.mrb[0].mxu0 %v2606
  %v2704 = vpop.f32.mrb[0].mxu0
  %v2705 = vadd.f32 0.0, %v2704
  %v2706 = vpop.f32.mrb[0].mxu0
  %2707 = vmatprep.mubr.f32.mxu0 0.0
  %2708 = vmatmul.mubr.f32.gmra.mrb[0].mxu0 %v2607
  %v2709 = vpop.f32.mrb[0].mxu0
  %v2710 = vadd.f32 0.0, %v2709
  %v2711 = vpop.f32.mrb[0].mxu0
  %2712 = vmatprep.mubr.f32.mxu0 0.0
  %2713 = vmatmul.mubr.f32.gmra.mrb[0].mxu0 %v2608
  %v2714 = vpop.f32.mrb[0].mxu0
  %v2715 = vadd.f32 0.0, %v2714
  %v2716 = vpop.f32.mrb[0].mxu0
  %2717 = vmatprep.mubr.f32.mxu0 0.0
  %2718 = vmatmul.mubr.f32.gmra.mrb[0].mxu0 %v2609
  %v2719 = vpop.f32.mrb[0].mxu0
  %v2720 = vadd.f32 0.0, %v2719
  %v2721 = vpop.f32.mrb[0].mxu0
  %2722 = vmatprep.mubr.f32.mxu0 0.0
  %2723 = vmatmul.mubr.f32.gmra.mrb[0].mxu0 %v2610
  %v2724 = vpop.f32.mrb[0].mxu0
  %v2725 = vadd.f32 0.0, %v2724
  %v2726 = vpop.f32.mrb[0].mxu0
  %2727 = vmatprep.mubr.f32.mxu0 0.0
  %2728 = vmatmul.mubr.f32.gmra.mrb[0].mxu0 %v2611
  %v2729 = vpop.f32.mrb[0].mxu0
  %v2730 = vadd.f32 0.0, %v2729
  %v2731 = vpop.f32.mrb[0].mxu0
  %2732 = vdwg.mxu0
  %v2733 = vxor.u32 %v2695, 2147483648
  %v2734 = vxor.u32 %v2700, 2147483648
  %v2735 = vxor.u32 %v2705, 2147483648
  %v2736 = vxor.u32 %v2710, 2147483648
  %v2737 = vxor.u32 %v2715, 2147483648
  %v2738 = vxor.u32 %v2720, 2147483648
  %v2739 = vxor.u32 %v2725, 2147483648
  %v2740 = vxor.u32 %v2730, 2147483648
  %v2741 = vmul.f32 %v2733, 1.442695
  %v2742 = vpow.pop %v2741
  %v2743 = vmul.f32 %v2734, 1.442695
  %v2744 = vpow.pop %v2743
  %v2745 = vmul.f32 %v2735, 1.442695
  %v2746 = vpow.pop %v2745
  %v2747 = vmul.f32 %v2736, 1.442695
  %v2748 = vpow.pop %v2747
  %v2749 = vmul.f32 %v2737, 1.442695
  %v2750 = vpow.pop %v2749
  %v2751 = vmul.f32 %v2738, 1.442695
  %v2752 = vpow.pop %v2751
  %v2753 = vmul.f32 %v2739, 1.442695
  %v2754 = vpow.pop %v2753
  %v2755 = vmul.f32 %v2740, 1.442695
  %v2756 = vpow.pop %v2755
  %v2757 = vadd.f32 %v2742, 1.0
  %v2758 = vadd.f32 %v2744, 1.0
  %v2759 = vadd.f32 %v2746, 1.0
  %v2760 = vadd.f32 %v2748, 1.0
  %v2761 = vadd.f32 %v2750, 1.0
  %v2762 = vadd.f32 %v2752, 1.0
  %v2763 = vadd.f32 %v2754, 1.0
  %v2764 = vadd.f32 %v2756, 1.0
  %v2765 = vrcp.pop %v2757
  %v2766 = vmul.f32 1.0, %v2765
  %v2767 = vrcp.pop %v2758
  %v2768 = vmul.f32 1.0, %v2767
  %v2769 = vrcp.pop %v2759
  %v2770 = vmul.f32 1.0, %v2769
  %v2771 = vrcp.pop %v2760
  %v2772 = vmul.f32 1.0, %v2771
  %v2773 = vrcp.pop %v2761
  %v2774 = vmul.f32 1.0, %v2773
  %v2775 = vrcp.pop %v2762
  %v2776 = vmul.f32 1.0, %v2775
  %v2777 = vrcp.pop %v2763
  %v2778 = vmul.f32 1.0, %v2777
  %v2779 = vrcp.pop %v2764
  %v2780 = vmul.f32 1.0, %v2779
  %2781 = vst [vmem:[%s9] sm:$0xff] %v2766
  %2782 = vst [vmem:[%s9 + $0x8] sm:$0xff] %v2768
  %2783 = vst [vmem:[%s9 + $0x10] sm:$0xff] %v2770
  %2784 = vst [vmem:[%s9 + $0x18] sm:$0xff] %v2772
  %2785 = vst [vmem:[%s9 + $0x20] sm:$0xff] %v2774
  %2786 = vst [vmem:[%s9 + $0x28] sm:$0xff] %v2776
  %2787 = vst [vmem:[%s9 + $0x30] sm:$0xff] %v2778
  %2788 = vst [vmem:[%s9 + $0x38] sm:$0xff] %v2780
  %v2789 = vld [vmem:[%s6] sm:$0x1]
  %v2791 = vlaneseq
  %v2792 = vshrl.u32 %v2791, 7
  %v2793 = vsub.s32 0, %v2792
  %v2794 = vrot.slane %v2789, %v2793
  %v2796 = vmul.f32 %v2011, %v2794
  %v2797 = vmul.f32 %v2016, %v2794
  %v2798 = vmul.f32 %v2021, %v2794
  %v2799 = vmul.f32 %v2026, %v2794
  %v2800 = vmul.f32 %v2031, %v2794
  %v2801 = vmul.f32 %v2036, %v2794
  %v2802 = vmul.f32 %v2041, %v2794
  %v2803 = vmul.f32 %v2046, %v2794
  %v2804 = vld [vmem:[%s7] sm:$0x1]
  %v2806 = vlaneseq
  %v2807 = vshrl.u32 %v2806, 7
  %v2808 = vsub.s32 0, %v2807
  %v2809 = vrot.slane %v2804, %v2808
  %v2811 = vadd.f32 %v2796, %v2809
  %v2812 = vadd.f32 %v2797, %v2809
  %v2813 = vadd.f32 %v2798, %v2809
  %v2814 = vadd.f32 %v2799, %v2809
  %v2815 = vadd.f32 %v2800, %v2809
  %v2816 = vadd.f32 %v2801, %v2809
  %v2817 = vadd.f32 %v2802, %v2809
  %v2818 = vadd.f32 %v2803, %v2809
  %v2819 = vmax.f32 %v2811, 0.0
  %v2820 = vmax.f32 %v2812, 0.0
  %v2821 = vmax.f32 %v2813, 0.0
  %v2822 = vmax.f32 %v2814, 0.0
  %v2823 = vmax.f32 %v2815, 0.0
  %v2824 = vmax.f32 %v2816, 0.0
  %v2825 = vmax.f32 %v2817, 0.0
  %v2826 = vmax.f32 %v2818, 0.0
  %v2827 = vld [vmem:[%s8] sm:$0xff]
  %v2828 = vld [vmem:[%s8 + $0x8] sm:$0xff]
  %v2829 = vld [vmem:[%s8 + $0x10] sm:$0xff]
  %v2830 = vld [vmem:[%s8 + $0x18] sm:$0xff]
  %v2831 = vld [vmem:[%s8 + $0x20] sm:$0xff]
  %v2832 = vld [vmem:[%s8 + $0x28] sm:$0xff]
  %v2833 = vld [vmem:[%s8 + $0x30] sm:$0xff]
  %v2834 = vld [vmem:[%s8 + $0x38] sm:$0xff]
  %v2835 = vld [vmem:[%s8 + $0x40] sm:$0xff]
  %v2836 = vld [vmem:[%s8 + $0x48] sm:$0xff]
  %v2837 = vld [vmem:[%s8 + $0x50] sm:$0xff]
  %v2838 = vld [vmem:[%s8 + $0x58] sm:$0xff]
  %v2839 = vld [vmem:[%s8 + $0x60] sm:$0xff]
  %v2840 = vld [vmem:[%s8 + $0x68] sm:$0xff]
  %v2841 = vld [vmem:[%s8 + $0x70] sm:$0xff]
  %v2842 = vld [vmem:[%s8 + $0x78] sm:$0xff]
  %2843 = vmatprep.subr.mxu0 0.0
  %2844 = vmatpush1.msra.mxu0 %v2827
  %2845 = vmatprep.subr.mxu0 0.0
  %2846 = vmatpush1.msra.mxu0 %v2828
  %2847 = vmatprep.subr.mxu0 0.0
  %2848 = vmatpush1.msra.mxu0 %v2829
  %2849 = vmatprep.subr.mxu0 0.0
  %2850 = vmatpush1.msra.mxu0 %v2830
  %2851 = vmatprep.subr.mxu0 0.0
  %2852 = vmatpush1.msra.mxu0 %v2831
  %2853 = vmatprep.subr.mxu0 0.0
  %2854 = vmatpush1.msra.mxu0 %v2832
  %2855 = vmatprep.subr.mxu0 0.0
  %2856 = vmatpush1.msra.mxu0 %v2833
  %2857 = vmatprep.subr.mxu0 0.0
  %2858 = vmatpush1.msra.mxu0 %v2834
  %2859 = vmatprep.subr.mxu0 0.0
  %2860 = vmatpush1.msra.mxu0 %v2835
  %2861 = vmatprep.subr.mxu0 0.0
  %2862 = vmatpush1.msra.mxu0 %v2836
  %2863 = vmatprep.subr.mxu0 0.0
  %2864 = vmatpush1.msra.mxu0 %v2837
  %2865 = vmatprep.subr.mxu0 0.0
  %2866 = vmatpush1.msra.mxu0 %v2838
  %2867 = vmatprep.subr.mxu0 0.0
  %2868 = vmatpush1.msra.mxu0 %v2839
  %2869 = vmatprep.subr.mxu0 0.0
  %2870 = vmatpush1.msra.mxu0 %v2840
  %2871 = vmatprep.subr.mxu0 0.0
  %2872 = vmatpush1.msra.mxu0 %v2841
  %2873 = vmatprep.subr.mxu0 0.0
  %2874 = vmatpush1.msra.mxu0 %v2842
  %2875 = vmatprep.subr.mxu0 0.0
  %2876 = vmatpush1.msra.mxu0 0.0
  %2877 = vmatprep.subr.mxu0 0.0
  %2878 = vmatpush1.msra.mxu0 0.0
  %2879 = vmatprep.subr.mxu0 0.0
  %2880 = vmatpush1.msra.mxu0 0.0
  %2881 = vmatprep.subr.mxu0 0.0
  %2882 = vmatpush1.msra.mxu0 0.0
  %2883 = vmatprep.subr.mxu0 0.0
  %2884 = vmatpush1.msra.mxu0 0.0
  %2885 = vmatprep.subr.mxu0 0.0
  %2886 = vmatpush1.msra.mxu0 0.0
  %2887 = vmatprep.subr.mxu0 0.0
  %2888 = vmatpush1.msra.mxu0 0.0
  %2889 = vmatprep.subr.mxu0 0.0
  %2890 = vmatpush1.msra.mxu0 0.0
  %2891 = vmatprep.subr.mxu0 0.0
  %2892 = vmatpush1.msra.mxu0 0.0
  %2893 = vmatprep.subr.mxu0 0.0
  %2894 = vmatpush1.msra.mxu0 0.0
  %2895 = vmatprep.subr.mxu0 0.0
  %2896 = vmatpush1.msra.mxu0 0.0
  %2897 = vmatprep.subr.mxu0 0.0
  %2898 = vmatpush1.msra.mxu0 0.0
  %2899 = vmatprep.subr.mxu0 0.0
  %2900 = vmatpush1.msra.mxu0 0.0
  %2901 = vmatprep.subr.mxu0 0.0
  %2902 = vmatpush1.msra.mxu0 0.0
  %2903 = vmatprep.subr.mxu0 0.0
  %2904 = vmatpush1.msra.mxu0 0.0
  %2905 = vmatprep.subr.mxu0 0.0
  %2906 = vmatpush1.msra.mxu0 0.0
  %2907 = vmatprep.mubr.f32.mxu0 0.0
  %2908 = vmatmul.mubr.f32.gmra.mrb[0].mxu0 %v2819
  %v2909 = vpop.f32.mrb[0].mxu0
  %v2910 = vadd.f32 0.0, %v2909
  %v2911 = vpop.f32.mrb[0].mxu0
  %2912 = vmatprep.mubr.f32.mxu0 0.0
  %2913 = vmatmul.mubr.f32.gmra.mrb[0].mxu0 %v2820
  %v2914 = vpop.f32.mrb[0].mxu0
  %v2915 = vadd.f32 0.0, %v2914
  %v2916 = vpop.f32.mrb[0].mxu0
  %2917 = vmatprep.mubr.f32.mxu0 0.0
  %2918 = vmatmul.mubr.f32.gmra.mrb[0].mxu0 %v2821
  %v2919 = vpop.f32.mrb[0].mxu0
  %v2920 = vadd.f32 0.0, %v2919
  %v2921 = vpop.f32.mrb[0].mxu0
  %2922 = vmatprep.mubr.f32.mxu0 0.0
  %2923 = vmatmul.mubr.f32.gmra.mrb[0].mxu0 %v2822
  %v2924 = vpop.f32.mrb[0].mxu0
  %v2925 = vadd.f32 0.0, %v2924
  %v2926 = vpop.f32.mrb[0].mxu0
  %2927 = vmatprep.mubr.f32.mxu0 0.0
  %2928 = vmatmul.mubr.f32.gmra.mrb[0].mxu0 %v2823
  %v2929 = vpop.f32.mrb[0].mxu0
  %v2930 = vadd.f32 0.0, %v2929
  %v2931 = vpop.f32.mrb[0].mxu0
  %2932 = vmatprep.mubr.f32.mxu0 0.0
  %2933 = vmatmul.mubr.f32.gmra.mrb[0].mxu0 %v2824
  %v2934 = vpop.f32.mrb[0].mxu0
  %v2935 = vadd.f32 0.0, %v2934
  %v2936 = vpop.f32.mrb[0].mxu0
  %2937 = vmatprep.mubr.f32.mxu0 0.0
  %2938 = vmatmul.mubr.f32.gmra.mrb[0].mxu0 %v2825
  %v2939 = vpop.f32.mrb[0].mxu0
  %v2940 = vadd.f32 0.0, %v2939
  %v2941 = vpop.f32.mrb[0].mxu0
  %2942 = vmatprep.mubr.f32.mxu0 0.0
  %2943 = vmatmul.mubr.f32.gmra.mrb[0].mxu0 %v2826
  %v2944 = vpop.f32.mrb[0].mxu0
  %v2945 = vadd.f32 0.0, %v2944
  %v2946 = vpop.f32.mrb[0].mxu0
  %2947 = vdwg.mxu0
  %v2948 = vxor.u32 %v2910, 2147483648
  %v2949 = vxor.u32 %v2915, 2147483648
  %v2950 = vxor.u32 %v2920, 2147483648
  %v2951 = vxor.u32 %v2925, 2147483648
  %v2952 = vxor.u32 %v2930, 2147483648
  %v2953 = vxor.u32 %v2935, 2147483648
  %v2954 = vxor.u32 %v2940, 2147483648
  %v2955 = vxor.u32 %v2945, 2147483648
  %v2956 = vmul.f32 %v2948, 1.442695
  %v2957 = vpow.pop %v2956
  %v2958 = vmul.f32 %v2949, 1.442695
  %v2959 = vpow.pop %v2958
  %v2960 = vmul.f32 %v2950, 1.442695
  %v2961 = vpow.pop %v2960
  %v2962 = vmul.f32 %v2951, 1.442695
  %v2963 = vpow.pop %v2962
  %v2964 = vmul.f32 %v2952, 1.442695
  %v2965 = vpow.pop %v2964
  %v2966 = vmul.f32 %v2953, 1.442695
  %v2967 = vpow.pop %v2966
  %v2968 = vmul.f32 %v2954, 1.442695
  %v2969 = vpow.pop %v2968
  %v2970 = vmul.f32 %v2955, 1.442695
  %v2971 = vpow.pop %v2970
  %v2972 = vadd.f32 %v2957, 1.0
  %v2973 = vadd.f32 %v2959, 1.0
  %v2974 = vadd.f32 %v2961, 1.0
  %v2975 = vadd.f32 %v2963, 1.0
  %v2976 = vadd.f32 %v2965, 1.0
  %v2977 = vadd.f32 %v2967, 1.0
  %v2978 = vadd.f32 %v2969, 1.0
  %v2979 = vadd.f32 %v2971, 1.0
  %v2980 = vrcp.pop %v2972
  %v2981 = vmul.f32 1.0, %v2980
  %v2982 = vrcp.pop %v2973
  %v2983 = vmul.f32 1.0, %v2982
  %v2984 = vrcp.pop %v2974
  %v2985 = vmul.f32 1.0, %v2984
  %v2986 = vrcp.pop %v2975
  %v2987 = vmul.f32 1.0, %v2986
  %v2988 = vrcp.pop %v2976
  %v2989 = vmul.f32 1.0, %v2988
  %v2990 = vrcp.pop %v2977
  %v2991 = vmul.f32 1.0, %v2990
  %v2992 = vrcp.pop %v2978
  %v2993 = vmul.f32 1.0, %v2992
  %v2994 = vrcp.pop %v2979
  %v2995 = vmul.f32 1.0, %v2994
  %s2996 = scalar_lea.vmem %s9, 64
  %2997 = vst [vmem:[%s2996] sm:$0xff] %v2981
  %2998 = vst [vmem:[%s2996 + $0x8] sm:$0xff] %v2983
  %2999 = vst [vmem:[%s2996 + $0x10] sm:$0xff] %v2985
  %3000 = vst [vmem:[%s2996 + $0x18] sm:$0xff] %v2987
  %3001 = vst [vmem:[%s2996 + $0x20] sm:$0xff] %v2989
  %3002 = vst [vmem:[%s2996 + $0x28] sm:$0xff] %v2991
  %3003 = vst [vmem:[%s2996 + $0x30] sm:$0xff] %v2993
  %3004 = vst [vmem:[%s2996 + $0x38] sm:$0xff] %v2995
  %v3005 = vld [vmem:[%s6] sm:$0x1]
  %v3007 = vlaneseq
  %v3008 = vshrl.u32 %v3007, 7
  %v3009 = vsub.s32 0, %v3008
  %v3010 = vrot.slane %v3005, %v3009
  %v3012 = vmul.f32 %v2221, %v3010
  %v3013 = vmul.f32 %v2226, %v3010
  %v3014 = vmul.f32 %v2231, %v3010
  %v3015 = vmul.f32 %v2236, %v3010
  %v3016 = vmul.f32 %v2241, %v3010
  %v3017 = vmul.f32 %v2246, %v3010
  %v3018 = vmul.f32 %v2251, %v3010
  %v3019 = vmul.f32 %v2256, %v3010
  %v3020 = vld [vmem:[%s7] sm:$0x1]
  %v3022 = vlaneseq
  %v3023 = vshrl.u32 %v3022, 7
  %v3024 = vsub.s32 0, %v3023
  %v3025 = vrot.slane %v3020, %v3024
  %v3027 = vadd.f32 %v3012, %v3025
  %v3028 = vadd.f32 %v3013, %v3025
  %v3029 = vadd.f32 %v3014, %v3025
  %v3030 = vadd.f32 %v3015, %v3025
  %v3031 = vadd.f32 %v3016, %v3025
  %v3032 = vadd.f32 %v3017, %v3025
  %v3033 = vadd.f32 %v3018, %v3025
  %v3034 = vadd.f32 %v3019, %v3025
  %v3035 = vmax.f32 %v3027, 0.0
  %v3036 = vmax.f32 %v3028, 0.0
  %v3037 = vmax.f32 %v3029, 0.0
  %v3038 = vmax.f32 %v3030, 0.0
  %v3039 = vmax.f32 %v3031, 0.0
  %v3040 = vmax.f32 %v3032, 0.0
  %v3041 = vmax.f32 %v3033, 0.0
  %v3042 = vmax.f32 %v3034, 0.0
  %v3043 = vld [vmem:[%s8] sm:$0xff]
  %v3044 = vld [vmem:[%s8 + $0x8] sm:$0xff]
  %v3045 = vld [vmem:[%s8 + $0x10] sm:$0xff]
  %v3046 = vld [vmem:[%s8 + $0x18] sm:$0xff]
  %v3047 = vld [vmem:[%s8 + $0x20] sm:$0xff]
  %v3048 = vld [vmem:[%s8 + $0x28] sm:$0xff]
  %v3049 = vld [vmem:[%s8 + $0x30] sm:$0xff]
  %v3050 = vld [vmem:[%s8 + $0x38] sm:$0xff]
  %v3051 = vld [vmem:[%s8 + $0x40] sm:$0xff]
  %v3052 = vld [vmem:[%s8 + $0x48] sm:$0xff]
  %v3053 = vld [vmem:[%s8 + $0x50] sm:$0xff]
  %v3054 = vld [vmem:[%s8 + $0x58] sm:$0xff]
  %v3055 = vld [vmem:[%s8 + $0x60] sm:$0xff]
  %v3056 = vld [vmem:[%s8 + $0x68] sm:$0xff]
  %v3057 = vld [vmem:[%s8 + $0x70] sm:$0xff]
  %v3058 = vld [vmem:[%s8 + $0x78] sm:$0xff]
  %3059 = vmatprep.subr.mxu0 0.0
  %3060 = vmatpush1.msra.mxu0 %v3043
  %3061 = vmatprep.subr.mxu0 0.0
  %3062 = vmatpush1.msra.mxu0 %v3044
  %3063 = vmatprep.subr.mxu0 0.0
  %3064 = vmatpush1.msra.mxu0 %v3045
  %3065 = vmatprep.subr.mxu0 0.0
  %3066 = vmatpush1.msra.mxu0 %v3046
  %3067 = vmatprep.subr.mxu0 0.0
  %3068 = vmatpush1.msra.mxu0 %v3047
  %3069 = vmatprep.subr.mxu0 0.0
  %3070 = vmatpush1.msra.mxu0 %v3048
  %3071 = vmatprep.subr.mxu0 0.0
  %3072 = vmatpush1.msra.mxu0 %v3049
  %3073 = vmatprep.subr.mxu0 0.0
  %3074 = vmatpush1.msra.mxu0 %v3050
  %3075 = vmatprep.subr.mxu0 0.0
  %3076 = vmatpush1.msra.mxu0 %v3051
  %3077 = vmatprep.subr.mxu0 0.0
  %3078 = vmatpush1.msra.mxu0 %v3052
  %3079 = vmatprep.subr.mxu0 0.0
  %3080 = vmatpush1.msra.mxu0 %v3053
  %3081 = vmatprep.subr.mxu0 0.0
  %3082 = vmatpush1.msra.mxu0 %v3054
  %3083 = vmatprep.subr.mxu0 0.0
  %3084 = vmatpush1.msra.mxu0 %v3055
  %3085 = vmatprep.subr.mxu0 0.0
  %3086 = vmatpush1.msra.mxu0 %v3056
  %3087 = vmatprep.subr.mxu0 0.0
  %3088 = vmatpush1.msra.mxu0 %v3057
  %3089 = vmatprep.subr.mxu0 0.0
  %3090 = vmatpush1.msra.mxu0 %v3058
  %3091 = vmatprep.subr.mxu0 0.0
  %3092 = vmatpush1.msra.mxu0 0.0
  %3093 = vmatprep.subr.mxu0 0.0
  %3094 = vmatpush1.msra.mxu0 0.0
  %3095 = vmatprep.subr.mxu0 0.0
  %3096 = vmatpush1.msra.mxu0 0.0
  %3097 = vmatprep.subr.mxu0 0.0
  %3098 = vmatpush1.msra.mxu0 0.0
  %3099 = vmatprep.subr.mxu0 0.0
  %3100 = vmatpush1.msra.mxu0 0.0
  %3101 = vmatprep.subr.mxu0 0.0
  %3102 = vmatpush1.msra.mxu0 0.0
  %3103 = vmatprep.subr.mxu0 0.0
  %3104 = vmatpush1.msra.mxu0 0.0
  %3105 = vmatprep.subr.mxu0 0.0
  %3106 = vmatpush1.msra.mxu0 0.0
  %3107 = vmatprep.subr.mxu0 0.0
  %3108 = vmatpush1.msra.mxu0 0.0
  %3109 = vmatprep.subr.mxu0 0.0
  %3110 = vmatpush1.msra.mxu0 0.0
  %3111 = vmatprep.subr.mxu0 0.0
  %3112 = vmatpush1.msra.mxu0 0.0
  %3113 = vmatprep.subr.mxu0 0.0
  %3114 = vmatpush1.msra.mxu0 0.0
  %3115 = vmatprep.subr.mxu0 0.0
  %3116 = vmatpush1.msra.mxu0 0.0
  %3117 = vmatprep.subr.mxu0 0.0
  %3118 = vmatpush1.msra.mxu0 0.0
  %3119 = vmatprep.subr.mxu0 0.0
  %3120 = vmatpush1.msra.mxu0 0.0
  %3121 = vmatprep.subr.mxu0 0.0
  %3122 = vmatpush1.msra.mxu0 0.0
  %3123 = vmatprep.mubr.f32.mxu0 0.0
  %3124 = vmatmul.mubr.f32.gmra.mrb[0].mxu0 %v3035
  %v3125 = vpop.f32.mrb[0].mxu0
  %v3126 = vadd.f32 0.0, %v3125
  %v3127 = vpop.f32.mrb[0].mxu0
  %3128 = vmatprep.mubr.f32.mxu0 0.0
  %3129 = vmatmul.mubr.f32.gmra.mrb[0].mxu0 %v3036
  %v3130 = vpop.f32.mrb[0].mxu0
  %v3131 = vadd.f32 0.0, %v3130
  %v3132 = vpop.f32.mrb[0].mxu0
  %3133 = vmatprep.mubr.f32.mxu0 0.0
  %3134 = vmatmul.mubr.f32.gmra.mrb[0].mxu0 %v3037
  %v3135 = vpop.f32.mrb[0].mxu0
  %v3136 = vadd.f32 0.0, %v3135
  %v3137 = vpop.f32.mrb[0].mxu0
  %3138 = vmatprep.mubr.f32.mxu0 0.0
  %3139 = vmatmul.mubr.f32.gmra.mrb[0].mxu0 %v3038
  %v3140 = vpop.f32.mrb[0].mxu0
  %v3141 = vadd.f32 0.0, %v3140
  %v3142 = vpop.f32.mrb[0].mxu0
  %3143 = vmatprep.mubr.f32.mxu0 0.0
  %3144 = vmatmul.mubr.f32.gmra.mrb[0].mxu0 %v3039
  %v3145 = vpop.f32.mrb[0].mxu0
  %v3146 = vadd.f32 0.0, %v3145
  %v3147 = vpop.f32.mrb[0].mxu0
  %3148 = vmatprep.mubr.f32.mxu0 0.0
  %3149 = vmatmul.mubr.f32.gmra.mrb[0].mxu0 %v3040
  %v3150 = vpop.f32.mrb[0].mxu0
  %v3151 = vadd.f32 0.0, %v3150
  %v3152 = vpop.f32.mrb[0].mxu0
  %3153 = vmatprep.mubr.f32.mxu0 0.0
  %3154 = vmatmul.mubr.f32.gmra.mrb[0].mxu0 %v3041
  %v3155 = vpop.f32.mrb[0].mxu0
  %v3156 = vadd.f32 0.0, %v3155
  %v3157 = vpop.f32.mrb[0].mxu0
  %3158 = vmatprep.mubr.f32.mxu0 0.0
  %3159 = vmatmul.mubr.f32.gmra.mrb[0].mxu0 %v3042
  %v3160 = vpop.f32.mrb[0].mxu0
  %v3161 = vadd.f32 0.0, %v3160
  %v3162 = vpop.f32.mrb[0].mxu0
  %3163 = vdwg.mxu0
  %v3164 = vxor.u32 %v3126, 2147483648
  %v3165 = vxor.u32 %v3131, 2147483648
  %v3166 = vxor.u32 %v3136, 2147483648
  %v3167 = vxor.u32 %v3141, 2147483648
  %v3168 = vxor.u32 %v3146, 2147483648
  %v3169 = vxor.u32 %v3151, 2147483648
  %v3170 = vxor.u32 %v3156, 2147483648
  %v3171 = vxor.u32 %v3161, 2147483648
  %v3172 = vmul.f32 %v3164, 1.442695
  %v3173 = vpow.pop %v3172
  %v3174 = vmul.f32 %v3165, 1.442695
  %v3175 = vpow.pop %v3174
  %v3176 = vmul.f32 %v3166, 1.442695
  %v3177 = vpow.pop %v3176
  %v3178 = vmul.f32 %v3167, 1.442695
  %v3179 = vpow.pop %v3178
  %v3180 = vmul.f32 %v3168, 1.442695
  %v3181 = vpow.pop %v3180
  %v3182 = vmul.f32 %v3169, 1.442695
  %v3183 = vpow.pop %v3182
  %v3184 = vmul.f32 %v3170, 1.442695
  %v3185 = vpow.pop %v3184
  %v3186 = vmul.f32 %v3171, 1.442695
  %v3187 = vpow.pop %v3186
  %v3188 = vadd.f32 %v3173, 1.0
  %v3189 = vadd.f32 %v3175, 1.0
  %v3190 = vadd.f32 %v3177, 1.0
  %v3191 = vadd.f32 %v3179, 1.0
  %v3192 = vadd.f32 %v3181, 1.0
  %v3193 = vadd.f32 %v3183, 1.0
  %v3194 = vadd.f32 %v3185, 1.0
  %v3195 = vadd.f32 %v3187, 1.0
  %v3196 = vrcp.pop %v3188
  %v3197 = vmul.f32 1.0, %v3196
  %v3198 = vrcp.pop %v3189
  %v3199 = vmul.f32 1.0, %v3198
  %v3200 = vrcp.pop %v3190
  %v3201 = vmul.f32 1.0, %v3200
  %v3202 = vrcp.pop %v3191
  %v3203 = vmul.f32 1.0, %v3202
  %v3204 = vrcp.pop %v3192
  %v3205 = vmul.f32 1.0, %v3204
  %v3206 = vrcp.pop %v3193
  %v3207 = vmul.f32 1.0, %v3206
  %v3208 = vrcp.pop %v3194
  %v3209 = vmul.f32 1.0, %v3208
  %v3210 = vrcp.pop %v3195
  %v3211 = vmul.f32 1.0, %v3210
  %s3212 = scalar_lea.vmem %s9, 128
  %3213 = vst [vmem:[%s3212] sm:$0xff] %v3197
  %3214 = vst [vmem:[%s3212 + $0x8] sm:$0xff] %v3199
  %3215 = vst [vmem:[%s3212 + $0x10] sm:$0xff] %v3201
  %3216 = vst [vmem:[%s3212 + $0x18] sm:$0xff] %v3203
  %3217 = vst [vmem:[%s3212 + $0x20] sm:$0xff] %v3205
  %3218 = vst [vmem:[%s3212 + $0x28] sm:$0xff] %v3207
  %3219 = vst [vmem:[%s3212 + $0x30] sm:$0xff] %v3209
  %3220 = vst [vmem:[%s3212 + $0x38] sm:$0xff] %v3211
  %v3221 = vld [vmem:[%s6] sm:$0x1]
  %v3223 = vlaneseq
  %v3224 = vshrl.u32 %v3223, 7
  %v3225 = vsub.s32 0, %v3224
  %v3226 = vrot.slane %v3221, %v3225
  %v3228 = vmul.f32 %v2536, %v3226
  %v3229 = vmul.f32 %v2541, %v3226
  %v3230 = vmul.f32 %v2546, %v3226
  %v3231 = vmul.f32 %v2551, %v3226
  %v3232 = vmul.f32 %v2556, %v3226
  %v3233 = vmul.f32 %v2561, %v3226
  %v3234 = vmul.f32 %v2566, %v3226
  %v3235 = vmul.f32 %v2571, %v3226
  %v3236 = vld [vmem:[%s7] sm:$0x1]
  %v3238 = vlaneseq
  %v3239 = vshrl.u32 %v3238, 7
  %v3240 = vsub.s32 0, %v3239
  %v3241 = vrot.slane %v3236, %v3240
  %v3243 = vadd.f32 %v3228, %v3241
  %v3244 = vadd.f32 %v3229, %v3241
  %v3245 = vadd.f32 %v3230, %v3241
  %v3246 = vadd.f32 %v3231, %v3241
  %v3247 = vadd.f32 %v3232, %v3241
  %v3248 = vadd.f32 %v3233, %v3241
  %v3249 = vadd.f32 %v3234, %v3241
  %v3250 = vadd.f32 %v3235, %v3241
  %v3251 = vmax.f32 %v3243, 0.0
  %v3252 = vmax.f32 %v3244, 0.0
  %v3253 = vmax.f32 %v3245, 0.0
  %v3254 = vmax.f32 %v3246, 0.0
  %v3255 = vmax.f32 %v3247, 0.0
  %v3256 = vmax.f32 %v3248, 0.0
  %v3257 = vmax.f32 %v3249, 0.0
  %v3258 = vmax.f32 %v3250, 0.0
  %v3259 = vld [vmem:[%s8] sm:$0xff]
  %v3260 = vld [vmem:[%s8 + $0x8] sm:$0xff]
  %v3261 = vld [vmem:[%s8 + $0x10] sm:$0xff]
  %v3262 = vld [vmem:[%s8 + $0x18] sm:$0xff]
  %v3263 = vld [vmem:[%s8 + $0x20] sm:$0xff]
  %v3264 = vld [vmem:[%s8 + $0x28] sm:$0xff]
  %v3265 = vld [vmem:[%s8 + $0x30] sm:$0xff]
  %v3266 = vld [vmem:[%s8 + $0x38] sm:$0xff]
  %v3267 = vld [vmem:[%s8 + $0x40] sm:$0xff]
  %v3268 = vld [vmem:[%s8 + $0x48] sm:$0xff]
  %v3269 = vld [vmem:[%s8 + $0x50] sm:$0xff]
  %v3270 = vld [vmem:[%s8 + $0x58] sm:$0xff]
  %v3271 = vld [vmem:[%s8 + $0x60] sm:$0xff]
  %v3272 = vld [vmem:[%s8 + $0x68] sm:$0xff]
  %v3273 = vld [vmem:[%s8 + $0x70] sm:$0xff]
  %v3274 = vld [vmem:[%s8 + $0x78] sm:$0xff]
  %3275 = vmatprep.subr.mxu0 0.0
  %3276 = vmatpush1.msra.mxu0 %v3259
  %3277 = vmatprep.subr.mxu0 0.0
  %3278 = vmatpush1.msra.mxu0 %v3260
  %3279 = vmatprep.subr.mxu0 0.0
  %3280 = vmatpush1.msra.mxu0 %v3261
  %3281 = vmatprep.subr.mxu0 0.0
  %3282 = vmatpush1.msra.mxu0 %v3262
  %3283 = vmatprep.subr.mxu0 0.0
  %3284 = vmatpush1.msra.mxu0 %v3263
  %3285 = vmatprep.subr.mxu0 0.0
  %3286 = vmatpush1.msra.mxu0 %v3264
  %3287 = vmatprep.subr.mxu0 0.0
  %3288 = vmatpush1.msra.mxu0 %v3265
  %3289 = vmatprep.subr.mxu0 0.0
  %3290 = vmatpush1.msra.mxu0 %v3266
  %3291 = vmatprep.subr.mxu0 0.0
  %3292 = vmatpush1.msra.mxu0 %v3267
  %3293 = vmatprep.subr.mxu0 0.0
  %3294 = vmatpush1.msra.mxu0 %v3268
  %3295 = vmatprep.subr.mxu0 0.0
  %3296 = vmatpush1.msra.mxu0 %v3269
  %3297 = vmatprep.subr.mxu0 0.0
  %3298 = vmatpush1.msra.mxu0 %v3270
  %3299 = vmatprep.subr.mxu0 0.0
  %3300 = vmatpush1.msra.mxu0 %v3271
  %3301 = vmatprep.subr.mxu0 0.0
  %3302 = vmatpush1.msra.mxu0 %v3272
  %3303 = vmatprep.subr.mxu0 0.0
  %3304 = vmatpush1.msra.mxu0 %v3273
  %3305 = vmatprep.subr.mxu0 0.0
  %3306 = vmatpush1.msra.mxu0 %v3274
  %3307 = vmatprep.subr.mxu0 0.0
  %3308 = vmatpush1.msra.mxu0 0.0
  %3309 = vmatprep.subr.mxu0 0.0
  %3310 = vmatpush1.msra.mxu0 0.0
  %3311 = vmatprep.subr.mxu0 0.0
  %3312 = vmatpush1.msra.mxu0 0.0
  %3313 = vmatprep.subr.mxu0 0.0
  %3314 = vmatpush1.msra.mxu0 0.0
  %3315 = vmatprep.subr.mxu0 0.0
  %3316 = vmatpush1.msra.mxu0 0.0
  %3317 = vmatprep.subr.mxu0 0.0
  %3318 = vmatpush1.msra.mxu0 0.0
  %3319 = vmatprep.subr.mxu0 0.0
  %3320 = vmatpush1.msra.mxu0 0.0
  %3321 = vmatprep.subr.mxu0 0.0
  %3322 = vmatpush1.msra.mxu0 0.0
  %3323 = vmatprep.subr.mxu0 0.0
  %3324 = vmatpush1.msra.mxu0 0.0
  %3325 = vmatprep.subr.mxu0 0.0
  %3326 = vmatpush1.msra.mxu0 0.0
  %3327 = vmatprep.subr.mxu0 0.0
  %3328 = vmatpush1.msra.mxu0 0.0
  %3329 = vmatprep.subr.mxu0 0.0
  %3330 = vmatpush1.msra.mxu0 0.0
  %3331 = vmatprep.subr.mxu0 0.0
  %3332 = vmatpush1.msra.mxu0 0.0
  %3333 = vmatprep.subr.mxu0 0.0
  %3334 = vmatpush1.msra.mxu0 0.0
  %3335 = vmatprep.subr.mxu0 0.0
  %3336 = vmatpush1.msra.mxu0 0.0
  %3337 = vmatprep.subr.mxu0 0.0
  %3338 = vmatpush1.msra.mxu0 0.0
  %3339 = vmatprep.mubr.f32.mxu0 0.0
  %3340 = vmatmul.mubr.f32.gmra.mrb[0].mxu0 %v3251
  %v3341 = vpop.f32.mrb[0].mxu0
  %v3342 = vadd.f32 0.0, %v3341
  %v3343 = vpop.f32.mrb[0].mxu0
  %3344 = vmatprep.mubr.f32.mxu0 0.0
  %3345 = vmatmul.mubr.f32.gmra.mrb[0].mxu0 %v3252
  %v3346 = vpop.f32.mrb[0].mxu0
  %v3347 = vadd.f32 0.0, %v3346
  %v3348 = vpop.f32.mrb[0].mxu0
  %3349 = vmatprep.mubr.f32.mxu0 0.0
  %3350 = vmatmul.mubr.f32.gmra.mrb[0].mxu0 %v3253
  %v3351 = vpop.f32.mrb[0].mxu0
  %v3352 = vadd.f32 0.0, %v3351
  %v3353 = vpop.f32.mrb[0].mxu0
  %3354 = vmatprep.mubr.f32.mxu0 0.0
  %3355 = vmatmul.mubr.f32.gmra.mrb[0].mxu0 %v3254
  %v3356 = vpop.f32.mrb[0].mxu0
  %v3357 = vadd.f32 0.0, %v3356
  %v3358 = vpop.f32.mrb[0].mxu0
  %3359 = vmatprep.mubr.f32.mxu0 0.0
  %3360 = vmatmul.mubr.f32.gmra.mrb[0].mxu0 %v3255
  %v3361 = vpop.f32.mrb[0].mxu0
  %v3362 = vadd.f32 0.0, %v3361
  %v3363 = vpop.f32.mrb[0].mxu0
  %3364 = vmatprep.mubr.f32.mxu0 0.0
  %3365 = vmatmul.mubr.f32.gmra.mrb[0].mxu0 %v3256
  %v3366 = vpop.f32.mrb[0].mxu0
  %v3367 = vadd.f32 0.0, %v3366
  %v3368 = vpop.f32.mrb[0].mxu0
  %3369 = vmatprep.mubr.f32.mxu0 0.0
  %3370 = vmatmul.mubr.f32.gmra.mrb[0].mxu0 %v3257
  %v3371 = vpop.f32.mrb[0].mxu0
  %v3372 = vadd.f32 0.0, %v3371
  %v3373 = vpop.f32.mrb[0].mxu0
  %3374 = vmatprep.mubr.f32.mxu0 0.0
  %3375 = vmatmul.mubr.f32.gmra.mrb[0].mxu0 %v3258
  %v3376 = vpop.f32.mrb[0].mxu0
  %v3377 = vadd.f32 0.0, %v3376
  %v3378 = vpop.f32.mrb[0].mxu0
  %3379 = vdwg.mxu0
  %v3380 = vxor.u32 %v3342, 2147483648
  %v3381 = vxor.u32 %v3347, 2147483648
  %v3382 = vxor.u32 %v3352, 2147483648
  %v3383 = vxor.u32 %v3357, 2147483648
  %v3384 = vxor.u32 %v3362, 2147483648
  %v3385 = vxor.u32 %v3367, 2147483648
  %v3386 = vxor.u32 %v3372, 2147483648
  %v3387 = vxor.u32 %v3377, 2147483648
  %v3388 = vmul.f32 %v3380, 1.442695
  %v3389 = vpow.pop %v3388
  %v3390 = vmul.f32 %v3381, 1.442695
  %v3391 = vpow.pop %v3390
  %v3392 = vmul.f32 %v3382, 1.442695
  %v3393 = vpow.pop %v3392
  %v3394 = vmul.f32 %v3383, 1.442695
  %v3395 = vpow.pop %v3394
  %v3396 = vmul.f32 %v3384, 1.442695
  %v3397 = vpow.pop %v3396
  %v3398 = vmul.f32 %v3385, 1.442695
  %v3399 = vpow.pop %v3398
  %v3400 = vmul.f32 %v3386, 1.442695
  %v3401 = vpow.pop %v3400
  %v3402 = vmul.f32 %v3387, 1.442695
  %v3403 = vpow.pop %v3402
  %v3404 = vadd.f32 %v3389, 1.0
  %v3405 = vadd.f32 %v3391, 1.0
  %v3406 = vadd.f32 %v3393, 1.0
  %v3407 = vadd.f32 %v3395, 1.0
  %v3408 = vadd.f32 %v3397, 1.0
  %v3409 = vadd.f32 %v3399, 1.0
  %v3410 = vadd.f32 %v3401, 1.0
  %v3411 = vadd.f32 %v3403, 1.0
  %v3412 = vrcp.pop %v3404
  %v3413 = vmul.f32 1.0, %v3412
  %v3414 = vrcp.pop %v3405
  %v3415 = vmul.f32 1.0, %v3414
  %v3416 = vrcp.pop %v3406
  %v3417 = vmul.f32 1.0, %v3416
  %v3418 = vrcp.pop %v3407
  %v3419 = vmul.f32 1.0, %v3418
  %v3420 = vrcp.pop %v3408
  %v3421 = vmul.f32 1.0, %v3420
  %v3422 = vrcp.pop %v3409
  %v3423 = vmul.f32 1.0, %v3422
  %v3424 = vrcp.pop %v3410
  %v3425 = vmul.f32 1.0, %v3424
  %v3426 = vrcp.pop %v3411
  %v3427 = vmul.f32 1.0, %v3426
  %s3428 = scalar_lea.vmem %s9, 192
  %3429 = vst [vmem:[%s3428] sm:$0xff] %v3413
  %3430 = vst [vmem:[%s3428 + $0x8] sm:$0xff] %v3415
  %3431 = vst [vmem:[%s3428 + $0x10] sm:$0xff] %v3417
  %3432 = vst [vmem:[%s3428 + $0x18] sm:$0xff] %v3419
  %3433 = vst [vmem:[%s3428 + $0x20] sm:$0xff] %v3421
  %3434 = vst [vmem:[%s3428 + $0x28] sm:$0xff] %v3423
  %3435 = vst [vmem:[%s3428 + $0x30] sm:$0xff] %v3425
  %3436 = vst [vmem:[%s3428 + $0x38] sm:$0xff] %v3427
  // Predicated region
  $region38: #{sound_decoder_forward.1} parent=0 // pred_check
    _
  $region39: #{sound_decoder_forward.1} parent=0 // pred_check_branch
    %3438 = sbr.rel (0) target = $region41
  $region40: #{sound_decoder_forward.1} parent=0 // pred_region
    _
  $region41: #{sound_decoder_forward.1} parent=0 // pred_fallthru
    _
  // Predicated region
  $region42: #{sound_decoder_forward.1} parent=0 // pred_check
    _
  $region43: #{sound_decoder_forward.1} parent=0 // pred_check_branch
    %3440 = sbr.rel (0) target = $region45
  $region44: #{sound_decoder_forward.1} parent=0 // pred_region
    _
  $region45: #{sound_decoder_forward.1} parent=0 // pred_fallthru
    _

</llo_original>
